<compile_context>
chip_gen: v5e
topology: v5e:2x2
jax: 0.10.0
libtpu: 0.0.40
codegen_flags: <defaults>
</compile_context>

<pallas_src>
import functools

import numpy as np
import jax
import jax.numpy as jnp
from jax.experimental import pallas as pl
from jax.experimental.pallas import tpu as pltpu

EPS = 1e-9  # epsilon of calc_per_channel_noise_to_signal_ratio
LANE = 128


def _round_up(x, m):
    return (x + m - 1) // m * m


# ----------------------------- Pallas kernel ------------------------------- #
def _lockd_kernel(n_total, tn, n_taps, cin_blk,
                  patches_ref, w_orig_ref, b_orig_ref, w1_ref, w2_ref, b2_ref,
                  y0_ref, sy_ref, sy2_ref, sd2_ref):
    i = pl.program_id(0)
    p = patches_ref[...]                                 # (tn, n_taps*cin_blk) bf16

    # conv_orig : one big MXU matmul (f32 accumulation) + bias
    y0 = jnp.dot(p, w_orig_ref[...], preferred_element_type=jnp.float32)
    y0 = y0 + b_orig_ref[...]

    # conv_1 (1x1; mask already folded into the weight in the wrapper)
    w1 = w1_ref[...]                                     # (cin_blk, cmid_blk) bf16
    if n_taps == 1:
        # packed layout: one matmul covers all taps (block-diagonal weight)
        mid = jnp.dot(p, w1, preferred_element_type=jnp.float32).astype(p.dtype)
    else:
        # per-tap layout: lane-aligned static slices, shared (Cin_p, Cmid_p) weight
        mids = []
        for k in range(n_taps):                          # static unroll, n_taps small
            pk = p[:, k * cin_blk:(k + 1) * cin_blk]
            mids.append(jnp.dot(pk, w1,
                                preferred_element_type=jnp.float32).astype(p.dtype))
        mid = jnp.concatenate(mids, axis=1)              # (tn, n_taps*cmid_blk) bf16

    # conv_2 fused into ONE matmul: K = n_taps*cmid_blk, accumulation on the MXU
    z = jnp.dot(mid, w2_ref[...], preferred_element_type=jnp.float32)
    z = z + b2_ref[...]

    y0_ref[...] = y0                                     # lane-dense f32 store
    # TODO(synk): optionally store y0 as bf16 to halve the largest HBM write
    #             stream, if downstream parity tolerates it.

    # Row-validity mask so a padded last block does not pollute the NSR stats.
    rows = i * tn + jax.lax.broadcasted_iota(jnp.int32, (tn, 1), 0)
    valid = (rows < n_total).astype(jnp.float32)         # (tn, 1) in {0,1}
    y0v = y0 * valid
    d = (z - y0) * valid
    cout_p = y0.shape[1]
    # Fold rows into (tn//8, 8, Cout_p) and reduce the leading axis: pure
    # whole-vreg VPU adds (keeps XLU / vector-extended slots free for the MXU).
    sy_ref[0] = y0v.reshape(tn // 8, 8, cout_p).sum(axis=0)
    sy2_ref[0] = (y0v * y0).reshape(tn // 8, 8, cout_p).sum(axis=0)
    sd2_ref[0] = (d * d).reshape(tn // 8, 8, cout_p).sum(axis=0)


# ------------------------------- glue / JAX -------------------------------- #
def _im2col(x_nchw, ks, stride, pad, tap_width, total_width, dtype):
    """NCHW -> (B*OH*OW, total_width) patches, rows in NHWC order.
    Each tap's channels are padded to `tap_width`; the whole row to `total_width`."""
    # TODO(synk): building patches in-kernel from an NHWC halo tile (manual DMA)
    #             would remove the im2col HBM materialisation (matters most on v5e).
    B, C, H, W = x_nchw.shape
    xp = jnp.pad(x_nchw, ((0, 0), (0, 0), (pad, pad), (pad, pad)))
    OH = (H + 2 * pad - ks) // stride + 1
    OW = (W + 2 * pad - ks) // stride + 1
    cols = []
    for kh in range(ks):
        for kw in range(ks):
            sl = xp[:, :, kh:kh + (OH - 1) * stride + 1:stride,
                          kw:kw + (OW - 1) * stride + 1:stride]      # (B,C,OH,OW)
            sl = jnp.transpose(sl, (0, 2, 3, 1))                     # (B,OH,OW,C)
            if tap_width > C:
                sl = jnp.pad(sl, ((0, 0), (0, 0), (0, 0), (0, tap_width - C)))
            cols.append(sl)
    patches = jnp.concatenate(cols, axis=3)
    if total_width > patches.shape[-1]:
        patches = jnp.pad(patches, ((0, 0), (0, 0), (0, 0),
                                    (0, total_width - patches.shape[-1])))
    return patches.reshape(B * OH * OW, total_width).astype(dtype), OH, OW


def sample_from_logits(key, logits, tau=0.5):
    """JAX port of sample_from_logits (gumbel_softmax over [logit, 0])."""
    logits2 = jnp.stack([logits, jnp.zeros_like(logits)], axis=1)    # (C, 2)
    g = jax.random.gumbel(key, logits2.shape, dtype=logits.dtype)
    gs = jax.nn.softmax((logits2 + g) / tau, axis=1)[:, 0]
    return jnp.where(logits < 0.0, 0.0, gs)


def wrapped_lock_conv2d_forward(x, w_orig, b_orig, w1, w2, b2, mask,
                                *, ks, stride, pad, tn=None,
                                compute_dtype=jnp.bfloat16):
    """Returns (y0 in NCHW, nsr scalar) — matches WrappedLOCKConv2d.forward
    (which returns y0 and stores nsr on the module).

    Numerics: patches/weights in bf16 with f32 accumulation; mask is folded
    into the bf16 conv_1 weight.  Not bit-exact vs a PyTorch f32 conv."""
    # TODO(synk): groups > 1 and string padding ('same'/'valid') not supported;
    #             this kernel assumes groups=1 and integer symmetric padding.
    B, Cin, H, W = x.shape
    Cout = w_orig.shape[0]
    Cmid = w1.shape[0]
    KK = ks * ks
    itemsize = int(np.dtype(compute_dtype).itemsize)

    Cout_p = _round_up(Cout, LANE)
    # TODO(synk): for very large Cout add a second "parallel" grid axis over
    #             Cout tiles (256-wide on v6e/v7x) with per-tile NSR partials.

    # ---- layout selection: packed (small/unaligned Cin) vs per-tap padded ---
    kpack = _round_up(KK * Cin, LANE)
    per_tap_width = KK * _round_up(Cin, LANE)
    packed = 2 * kpack <= per_tap_width        # packing at least halves patch bytes
    if packed:
        n_taps, cin_blk, cmid_blk = 1, kpack, _round_up(KK * Cmid, LANE)
        tap_width = Cin                        # no per-tap channel padding
    else:
        n_taps, cin_blk, cmid_blk = KK, _round_up(Cin, LANE), _round_up(Cmid, LANE)
        tap_width = cin_blk
    wp = n_taps * cin_blk                      # patches row width
    mw = n_taps * cmid_blk                     # mid row width (conv_2 K dim)

    patches, OH, OW = _im2col(x, ks, stride, pad, tap_width, wp, compute_dtype)
    N = B * OH * OW

    # ---- generation-aware VMEM budget (v7x: 64 MiB, v5e/v6e: 128 MiB) -------
    try:
        vmem_cap = int(pltpu.get_tpu_info().vmem_capacity_bytes)
    except Exception:
        vmem_cap = 64 << 20
    if vmem_cap <= (64 << 20):                 # v7x-class
        tile_target, limit_cap, tn_default = 28 << 20, 48 << 20, 1024
    else:                                      # v5e / v6e-class (128 MiB)
        tile_target, limit_cap, tn_default = 56 << 20, 100 << 20, 2048

    def _budget(t, weight_bufs):
        per_step = (t * wp * itemsize          # patches block (bf16)
                    + t * Cout_p * 4           # y0 block (f32)
                    + 3 * 8 * Cout_p * 4)      # partial-sum blocks
        weights = ((wp * Cout_p + cin_blk * cmid_blk + mw * Cout_p) * itemsize
                   + 2 * Cout_p * 4)           # + biases (f32)
        live = (t * mw * itemsize              # concatenated mid (bf16)
                + t * cmid_blk * 4             # one live f32 conv_1 result
                + 3 * t * Cout_p * 4)          # y0 / z / stats temporaries
        return 2 * per_step + weight_bufs * weights + live

    if tn is None:
        tn = tn_default
    # bf16 sublane tile is (16,128) -> keep tn a multiple of 16
    tn = _round_up(max(16, min(tn, _round_up(N, 16))), 16)
    while tn > 16 and _budget(tn, 1) > tile_target:
        tn = _round_up(max(tn // 2, 16), 16)
    N_pad = _round_up(N, tn)
    num_blocks = N_pad // tn
    if N_pad != N:
        patches = jnp.pad(patches, ((0, N_pad - N), (0, 0)))
    # Limit covers the double-buffered-weight fallback plus headroom; stays well
    # under physical VMEM (<=48 MiB on 64 MiB parts, <=100 MiB on 128 MiB parts).
    vmem_limit = int(min(limit_cap, max(32 << 20, _budget(tn, 2) + (8 << 20))))

    # ---- weights flattened to matmul form (channel-padded, bf16) ------------
    wof = jnp.transpose(w_orig, (2, 3, 1, 0)).reshape(KK, Cin, Cout)
    if packed:
        wof = wof.reshape(KK * Cin, Cout)
        wof = jnp.pad(wof, ((0, wp - KK * Cin), (0, Cout_p - Cout)))
    else:
        wof = jnp.pad(wof, ((0, 0), (0, cin_blk - Cin), (0, Cout_p - Cout)))
        wof = wof.reshape(wp, Cout_p)
    wof = wof.astype(compute_dtype)                                   # conv_orig

    # conv_1 weight with mask folded in (one-time f32 scale, then bf16 cast)
    w1_mat = jnp.transpose(w1[:, :, 0, 0], (1, 0)) * mask.reshape(1, Cmid)
    if packed:
        w1b = jnp.kron(jnp.eye(KK, dtype=w1_mat.dtype), w1_mat)      # block-diag
        w1m = jnp.pad(w1b, ((0, cin_blk - KK * Cin), (0, cmid_blk - KK * Cmid)))
    else:
        w1m = jnp.pad(w1_mat, ((0, cin_blk - Cin), (0, cmid_blk - Cmid)))
    w1m = w1m.astype(compute_dtype)

    w2t = jnp.transpose(w2, (2, 3, 1, 0)).reshape(KK, Cmid, Cout)
    if packed:
        w2f = w2t.reshape(KK * Cmid, Cout)
        w2f = jnp.pad(w2f, ((0, mw - KK * Cmid), (0, Cout_p - Cout)))
    else:
        w2f = jnp.pad(w2t, ((0, 0), (0, cmid_blk - Cmid), (0, Cout_p - Cout)))
        w2f = w2f.reshape(mw, Cout_p)
    w2f = w2f.astype(compute_dtype)                                   # conv_2 fused-K

    b_orig_p = jnp.pad(b_orig, (0, Cout_p - Cout)).reshape(1, Cout_p).astype(jnp.float32)
    b2_p = jnp.pad(b2, (0, Cout_p - Cout)).reshape(1, Cout_p).astype(jnp.float32)

    flops = 2 * N_pad * (wp * Cout_p + n_taps * cin_blk * cmid_blk + mw * Cout_p)
    bytes_accessed = (N_pad * wp * itemsize
                      + (wp * Cout_p + cin_blk * cmid_blk + mw * Cout_p) * itemsize
                      + N_pad * Cout_p * 4
                      + 3 * num_blocks * 8 * Cout_p * 4)
    cost = pl.CostEstimate(flops=flops, transcendentals=0,
                           bytes_accessed=bytes_accessed)

    kernel = functools.partial(_lockd_kernel, N, tn, n_taps, cin_blk)
    out_shape = (jax.ShapeDtypeStruct((N_pad, Cout_p), jnp.float32),
                 jax.ShapeDtypeStruct((num_blocks, 8, Cout_p), jnp.float32),
                 jax.ShapeDtypeStruct((num_blocks, 8, Cout_p), jnp.float32),
                 jax.ShapeDtypeStruct((num_blocks, 8, Cout_p), jnp.float32))
    out_specs = (pl.BlockSpec((tn, Cout_p), lambda i: (i, 0)),        # y0
                 pl.BlockSpec((1, 8, Cout_p), lambda i: (i, 0, 0)),   # sum y0
                 pl.BlockSpec((1, 8, Cout_p), lambda i: (i, 0, 0)),   # sum y0^2
                 pl.BlockSpec((1, 8, Cout_p), lambda i: (i, 0, 0)))   # sum d^2

    def _call(single_buffer_weights):
        def const_spec(shape):
            imap = lambda i: (0,) * len(shape)
            if single_buffer_weights:
                # grid-invariant blocks: keep ONE resident buffer (no double-buffer)
                return pl.BlockSpec(shape, imap, pipeline_mode=pl.Buffered(1))
            return pl.BlockSpec(shape, imap)

        in_specs = [
            # patches: the only per-step HBM stream.
            # TODO(synk): pl.Buffered(3) here on 128 MiB parts if its DMA is
            #             still exposed (wall vs compute) after these changes.
            pl.BlockSpec((tn, wp), lambda i: (i, 0)),
            const_spec((wp, Cout_p)),                    # w_orig
            const_spec((1, Cout_p)),                     # b_orig
            const_spec((cin_blk, cmid_blk)),             # w1 (mask folded)
            const_spec((mw, Cout_p)),                    # w2 (fused K)
            const_spec((1, Cout_p)),                     # b2
        ]
        return pl.pallas_call(
            kernel,
            out_shape=out_shape,
            grid_spec=pltpu.PrefetchScalarGridSpec(
                num_scalar_prefetch=0,
                grid=(num_blocks,),
                in_specs=in_specs,
                out_specs=out_specs),
            compiler_params=pltpu.CompilerParams(
                dimension_semantics=("parallel",),       # no cross-step deps
                vmem_limit_bytes=vmem_limit),
            cost_estimate=cost,
        )(patches, wof, b_orig_p, w1m, w2f, b2_p)

    try:
        outs = _call(True)
        jax.block_until_ready(outs)                      # surface async failures here
    except Exception:
        # TODO(synk): pl.Buffered(1) not supported on this jax version;
        #             fall back to default double-buffered weight blocks.
        outs = _call(False)
    y0_flat, psy, psy2, psd2 = outs

    y0 = jnp.transpose(y0_flat[:N, :Cout].reshape(B, OH, OW, Cout), (0, 3, 1, 2))

    # NSR finalisation (tiny) in the wrapper, f32.
    sum_y = jnp.sum(psy, axis=(0, 1))[:Cout]
    sum_y2 = jnp.sum(psy2, axis=(0, 1))[:Cout]
    sum_d2 = jnp.sum(psd2, axis=(0, 1))[:Cout]
    n = jnp.float32(N)
    mean_y = sum_y / n
    # unbiased variance (torch.var default, correction=1); guard n == 1
    var_y = (sum_y2 - n * mean_y * mean_y) / jnp.maximum(n - 1.0, 1.0)
    # TODO(synk): for very large N a shifted / Welford-style combine would
    #             avoid cancellation in (sum(y^2) - n*mean^2).
    nsr = jnp.mean((sum_d2 / n) / (var_y + EPS))
    return y0, nsr


# --------------------------------- main ------------------------------------ #
if __name__ == "__main__":
    key = jax.random.PRNGKey(0)
    B, Cin, H, W = 2, 4, 16, 16
    Cout, ks, stride, pad = 8, 3, 1, 1
    Cmid = min(Cout, Cin)          # middle_features = min(out, in)

    ks_ = jax.random.split(key, 7)
    x = jax.random.normal(ks_[0], (B, Cin, H, W), jnp.float32)
    # deterministic synthetic parameters (shapes follow the module __init__)
    w_orig = 0.1 * jax.random.normal(ks_[1], (Cout, Cin, ks, ks), jnp.float32)
    b_orig = 0.1 * jax.random.normal(ks_[2], (Cout,), jnp.float32)
    w1 = 0.1 * jax.random.normal(ks_[3], (Cmid, Cin, 1, 1), jnp.float32)
    w2 = 0.1 * jax.random.normal(ks_[4], (Cout, Cmid, ks, ks), jnp.float32)
    b2 = 0.1 * jax.random.normal(ks_[5], (Cout,), jnp.float32)
    logits = 3.0 * jnp.ones((Cmid,), jnp.float32)

    # gumbel-softmax mask sampling (tiny, done in plain JAX glue)
    mask = sample_from_logits(ks_[6], logits)

    y0, nsr = wrapped_lock_conv2d_forward(
        x, w_orig, b_orig, w1, w2, b2, mask, ks=ks, stride=stride, pad=pad)
    jax.block_until_ready((y0, nsr))

    assert y0.shape == (B, Cout, H, W)
    assert nsr.shape == ()
    assert bool(jnp.isfinite(nsr))
    print("KERNEL_OK")
</pallas_src>

<mosaic_0001>
module attributes {stable_mosaic.version = 11 : i64} {
  func.func @_lockd_kernel(%arg0: i32, %arg1: memref<512x128xbf16, #tpu.memory_space<vmem>>, %arg2: memref<128x128xbf16, #tpu.memory_space<vmem>>, %arg3: memref<1x128xf32, #tpu.memory_space<vmem>>, %arg4: memref<128x128xbf16, #tpu.memory_space<vmem>>, %arg5: memref<128x128xbf16, #tpu.memory_space<vmem>>, %arg6: memref<1x128xf32, #tpu.memory_space<vmem>>, %arg7: memref<512x128xf32, #tpu.memory_space<vmem>>, %arg8: memref<1x8x128xf32, #tpu.memory_space<vmem>>, %arg9: memref<1x8x128xf32, #tpu.memory_space<vmem>>, %arg10: memref<1x8x128xf32, #tpu.memory_space<vmem>>) attributes {dimension_semantics = [#tpu.dimension_semantics<parallel>], iteration_bounds = array<i64: 1>, scalar_prefetch = 0 : i64, scratch_operands = 0 : i64, tpu.core_type = #tpu.core_type<tc>, window_params = [{transform_indices = @transform_0, window_bounds = array<i64: 512, 128>}, {pipeline_mode = #tpu.pipeline_mode<synchronous>, transform_indices = @transform_1, window_bounds = array<i64: 128, 128>}, {pipeline_mode = #tpu.pipeline_mode<synchronous>, transform_indices = @transform_2, window_bounds = array<i64: 1, 128>}, {pipeline_mode = #tpu.pipeline_mode<synchronous>, transform_indices = @transform_3, window_bounds = array<i64: 128, 128>}, {pipeline_mode = #tpu.pipeline_mode<synchronous>, transform_indices = @transform_4, window_bounds = array<i64: 128, 128>}, {pipeline_mode = #tpu.pipeline_mode<synchronous>, transform_indices = @transform_5, window_bounds = array<i64: 1, 128>}, {transform_indices = @transform_6, window_bounds = array<i64: 512, 128>}, {transform_indices = @transform_7, window_bounds = array<i64: 1, 8, 128>}, {transform_indices = @transform_8, window_bounds = array<i64: 1, 8, 128>}, {transform_indices = @transform_9, window_bounds = array<i64: 1, 8, 128>}]} {
    %c0 = arith.constant 0 : index
    %c0_0 = arith.constant 0 : index
    %0 = vector.load %arg1[%c0, %c0_0] : memref<512x128xbf16, #tpu.memory_space<vmem>>, vector<512x128xbf16>
    %c0_1 = arith.constant 0 : index
    %c0_2 = arith.constant 0 : index
    %1 = vector.load %arg2[%c0_1, %c0_2] : memref<128x128xbf16, #tpu.memory_space<vmem>>, vector<128x128xbf16>
    %cst = arith.constant dense<0.000000e+00> : vector<512x128xf32>
    %2 = tpu.matmul %0, %1, %cst {dimension_numbers = #tpu.dot_dimension_numbers<[1], [0], [0], [1], [0, 0, 1, 1], [], []>} : vector<512x128xbf16>, vector<128x128xbf16>, vector<512x128xf32> -> vector<512x128xf32>
    %c0_3 = arith.constant 0 : index
    %c0_4 = arith.constant 0 : index
    %3 = vector.load %arg3[%c0_3, %c0_4] : memref<1x128xf32, #tpu.memory_space<vmem>>, vector<1x128xf32>
    %4 = vector.broadcast %3 : vector<1x128xf32> to vector<512x128xf32>
    %5 = arith.addf %2, %4 : vector<512x128xf32>
    %c0_5 = arith.constant 0 : index
    %c0_6 = arith.constant 0 : index
    %6 = vector.load %arg4[%c0_5, %c0_6] : memref<128x128xbf16, #tpu.memory_space<vmem>>, vector<128x128xbf16>
    %cst_7 = arith.constant dense<0.000000e+00> : vector<512x128xf32>
    %7 = tpu.matmul %0, %6, %cst_7 {dimension_numbers = #tpu.dot_dimension_numbers<[1], [0], [0], [1], [0, 0, 1, 1], [], []>} : vector<512x128xbf16>, vector<128x128xbf16>, vector<512x128xf32> -> vector<512x128xf32>
    %8 = arith.truncf %7 : vector<512x128xf32> to vector<512x128xbf16>
    %c0_8 = arith.constant 0 : index
    %c0_9 = arith.constant 0 : index
    %9 = vector.load %arg5[%c0_8, %c0_9] : memref<128x128xbf16, #tpu.memory_space<vmem>>, vector<128x128xbf16>
    %cst_10 = arith.constant dense<0.000000e+00> : vector<512x128xf32>
    %10 = tpu.matmul %8, %9, %cst_10 {dimension_numbers = #tpu.dot_dimension_numbers<[1], [0], [0], [1], [0, 0, 1, 1], [], []>} : vector<512x128xbf16>, vector<128x128xbf16>, vector<512x128xf32> -> vector<512x128xf32>
    %c0_11 = arith.constant 0 : index
    %c0_12 = arith.constant 0 : index
    %11 = vector.load %arg6[%c0_11, %c0_12] : memref<1x128xf32, #tpu.memory_space<vmem>>, vector<1x128xf32>
    %12 = vector.broadcast %11 : vector<1x128xf32> to vector<512x128xf32>
    %13 = arith.addf %10, %12 : vector<512x128xf32>
    %c0_13 = arith.constant 0 : index
    %c0_14 = arith.constant 0 : index
    %14 = vector.load %arg7[%c0_13, %c0_14] : memref<512x128xf32, #tpu.memory_space<vmem>>, vector<512x128xf32>
    tpu.vector_store %arg7[%c0_13, %c0_14], %5 {strides = array<i32>} : memref<512x128xf32, #tpu.memory_space<vmem>>, vector<512x128xf32>,
    %c512_i32 = arith.constant 512 : i32
    %15 = arith.muli %arg0, %c512_i32 : i32
    %16 = tpu.iota {dimensions = array<i32: 0>} : vector<512x1xi32>
    %17 = vector.broadcast %15 : i32 to vector<512x1xi32>
    %18 = arith.addi %17, %16 : vector<512x1xi32>
    %c512_i32_15 = arith.constant 512 : i32
    %19 = vector.broadcast %c512_i32_15 : i32 to vector<512x1xi32>
    %20 = arith.cmpi slt, %18, %19 : vector<512x1xi32>
    %21 = arith.extui %20 : vector<512x1xi1> to vector<512x1xi32>
    %22 = arith.sitofp %21 : vector<512x1xi32> to vector<512x1xf32>
    %23 = vector.broadcast %22 : vector<512x1xf32> to vector<512x128xf32>
    %24 = arith.mulf %5, %23 : vector<512x128xf32>
    %25 = arith.subf %13, %5 : vector<512x128xf32>
    %26 = vector.broadcast %22 : vector<512x1xf32> to vector<512x128xf32>
    %27 = arith.mulf %25, %26 : vector<512x128xf32>
    %28 = vector.shape_cast %24 : vector<512x128xf32> to vector<64x8x128xf32>
    %cst_16 = arith.constant dense<0.000000e+00> : vector<8x128xf32>
    %29 = vector.multi_reduction <add>, %28, %cst_16 [0] : vector<64x8x128xf32> to vector<8x128xf32>
    %c0_17 = arith.constant 0 : index
    %c0_18 = arith.constant 0 : index
    %c0_19 = arith.constant 0 : index
    %30 = vector.load %arg8[%c0_17, %c0_18, %c0_19] : memref<1x8x128xf32, #tpu.memory_space<vmem>>, vector<1x8x128xf32>
    %31 = vector.shape_cast %30 : vector<1x8x128xf32> to vector<8x128xf32>
    %32 = vector.shape_cast %29 : vector<8x128xf32> to vector<1x8x128xf32>
    tpu.vector_store %arg8[%c0_17, %c0_18, %c0_19], %32 {strides = array<i32>} : memref<1x8x128xf32, #tpu.memory_space<vmem>>, vector<1x8x128xf32>,
    %33 = arith.mulf %24, %5 : vector<512x128xf32>
    %34 = vector.shape_cast %33 : vector<512x128xf32> to vector<64x8x128xf32>
    %cst_20 = arith.constant dense<0.000000e+00> : vector<8x128xf32>
    %35 = vector.multi_reduction <add>, %34, %cst_20 [0] : vector<64x8x128xf32> to vector<8x128xf32>
    %c0_21 = arith.constant 0 : index
    %c0_22 = arith.constant 0 : index
    %c0_23 = arith.constant 0 : index
    %36 = vector.load %arg9[%c0_21, %c0_22, %c0_23] : memref<1x8x128xf32, #tpu.memory_space<vmem>>, vector<1x8x128xf32>
    %37 = vector.shape_cast %36 : vector<1x8x128xf32> to vector<8x128xf32>
    %38 = vector.shape_cast %35 : vector<8x128xf32> to vector<1x8x128xf32>
    tpu.vector_store %arg9[%c0_21, %c0_22, %c0_23], %38 {strides = array<i32>} : memref<1x8x128xf32, #tpu.memory_space<vmem>>, vector<1x8x128xf32>,
    %39 = arith.mulf %27, %27 : vector<512x128xf32>
    %40 = vector.shape_cast %39 : vector<512x128xf32> to vector<64x8x128xf32>
    %cst_24 = arith.constant dense<0.000000e+00> : vector<8x128xf32>
    %41 = vector.multi_reduction <add>, %40, %cst_24 [0] : vector<64x8x128xf32> to vector<8x128xf32>
    %c0_25 = arith.constant 0 : index
    %c0_26 = arith.constant 0 : index
    %c0_27 = arith.constant 0 : index
    %42 = vector.load %arg10[%c0_25, %c0_26, %c0_27] : memref<1x8x128xf32, #tpu.memory_space<vmem>>, vector<1x8x128xf32>
    %43 = vector.shape_cast %42 : vector<1x8x128xf32> to vector<8x128xf32>
    %44 = vector.shape_cast %41 : vector<8x128xf32> to vector<1x8x128xf32>
    tpu.vector_store %arg10[%c0_25, %c0_26, %c0_27], %44 {strides = array<i32>} : memref<1x8x128xf32, #tpu.memory_space<vmem>>, vector<1x8x128xf32>,
    return
  }
  func.func @transform_0(%arg0: i32) -> (i32, i32) {
    %c0_i32 = arith.constant 0 : i32
    %c0_i32_0 = arith.constant 0 : i32
    return %arg0, %c0_i32 : i32, i32
  }
  func.func @transform_1(%arg0: i32) -> (i32, i32) {
    %c0_i32 = arith.constant 0 : i32
    %c0_i32_0 = arith.constant 0 : i32
    %c0_i32_1 = arith.constant 0 : i32
    return %c0_i32, %c0_i32_0 : i32, i32
  }
  func.func @transform_2(%arg0: i32) -> (i32, i32) {
    %c0_i32 = arith.constant 0 : i32
    %c0_i32_0 = arith.constant 0 : i32
    %c0_i32_1 = arith.constant 0 : i32
    return %c0_i32, %c0_i32_0 : i32, i32
  }
  func.func @transform_3(%arg0: i32) -> (i32, i32) {
    %c0_i32 = arith.constant 0 : i32
    %c0_i32_0 = arith.constant 0 : i32
    %c0_i32_1 = arith.constant 0 : i32
    return %c0_i32, %c0_i32_0 : i32, i32
  }
  func.func @transform_4(%arg0: i32) -> (i32, i32) {
    %c0_i32 = arith.constant 0 : i32
    %c0_i32_0 = arith.constant 0 : i32
    %c0_i32_1 = arith.constant 0 : i32
    return %c0_i32, %c0_i32_0 : i32, i32
  }
  func.func @transform_5(%arg0: i32) -> (i32, i32) {
    %c0_i32 = arith.constant 0 : i32
    %c0_i32_0 = arith.constant 0 : i32
    %c0_i32_1 = arith.constant 0 : i32
    return %c0_i32, %c0_i32_0 : i32, i32
  }
  func.func @transform_6(%arg0: i32) -> (i32, i32) {
    %c0_i32 = arith.constant 0 : i32
    %c0_i32_0 = arith.constant 0 : i32
    return %arg0, %c0_i32 : i32, i32
  }
  func.func @transform_7(%arg0: i32) -> (i32, i32, i32) {
    %c0_i32 = arith.constant 0 : i32
    %c0_i32_0 = arith.constant 0 : i32
    %c0_i32_1 = arith.constant 0 : i32
    return %arg0, %c0_i32, %c0_i32_0 : i32, i32, i32
  }
  func.func @transform_8(%arg0: i32) -> (i32, i32, i32) {
    %c0_i32 = arith.constant 0 : i32
    %c0_i32_0 = arith.constant 0 : i32
    %c0_i32_1 = arith.constant 0 : i32
    return %arg0, %c0_i32, %c0_i32_0 : i32, i32, i32
  }
  func.func @transform_9(%arg0: i32) -> (i32, i32, i32) {
    %c0_i32 = arith.constant 0 : i32
    %c0_i32_0 = arith.constant 0 : i32
    %c0_i32_1 = arith.constant 0 : i32
    return %arg0, %c0_i32, %c0_i32_0 : i32, i32, i32
  }
}

module attributes {stable_mosaic.version = 11 : i64} {
  func.func @_lockd_kernel(%arg0: i32, %arg1: memref<512x128xbf16, #tpu.memory_space<vmem>>, %arg2: memref<128x128xbf16, #tpu.memory_space<vmem>>, %arg3: memref<1x128xf32, #tpu.memory_space<vmem>>, %arg4: memref<128x128xbf16, #tpu.memory_space<vmem>>, %arg5: memref<128x128xbf16, #tpu.memory_space<vmem>>, %arg6: memref<1x128xf32, #tpu.memory_space<vmem>>, %arg7: memref<512x128xf32, #tpu.memory_space<vmem>>, %arg8: memref<1x8x128xf32, #tpu.memory_space<vmem>>, %arg9: memref<1x8x128xf32, #tpu.memory_space<vmem>>, %arg10: memref<1x8x128xf32, #tpu.memory_space<vmem>>) attributes {dimension_semantics = [#tpu.dimension_semantics<parallel>], iteration_bounds = array<i64: 1>, scalar_prefetch = 0 : i64, scratch_operands = 0 : i64, tpu.core_type = #tpu.core_type<tc>, window_params = [{transform_indices = @transform_0, window_bounds = array<i64: 512, 128>}, {pipeline_mode = #tpu.pipeline_mode<synchronous>, transform_indices = @transform_1, window_bounds = array<i64: 128, 128>}, {pipeline_mode = #tpu.pipeline_mode<synchronous>, transform_indices = @transform_2, window_bounds = array<i64: 1, 128>}, {pipeline_mode = #tpu.pipeline_mode<synchronous>, transform_indices = @transform_3, window_bounds = array<i64: 128, 128>}, {pipeline_mode = #tpu.pipeline_mode<synchronous>, transform_indices = @transform_4, window_bounds = array<i64: 128, 128>}, {pipeline_mode = #tpu.pipeline_mode<synchronous>, transform_indices = @transform_5, window_bounds = array<i64: 1, 128>}, {transform_indices = @transform_6, window_bounds = array<i64: 512, 128>}, {transform_indices = @transform_7, window_bounds = array<i64: 1, 8, 128>}, {transform_indices = @transform_8, window_bounds = array<i64: 1, 8, 128>}, {transform_indices = @transform_9, window_bounds = array<i64: 1, 8, 128>}]} {
    %c0 = arith.constant 0 : index
    %c0_0 = arith.constant 0 : index
    %0 = vector.load %arg1[%c0, %c0_0] : memref<512x128xbf16, #tpu.memory_space<vmem>>, vector<512x128xbf16>
    %c0_1 = arith.constant 0 : index
    %c0_2 = arith.constant 0 : index
    %1 = vector.load %arg2[%c0_1, %c0_2] : memref<128x128xbf16, #tpu.memory_space<vmem>>, vector<128x128xbf16>
    %cst = arith.constant dense<0.000000e+00> : vector<512x128xf32>
    %2 = tpu.matmul %0, %1, %cst {dimension_numbers = #tpu.dot_dimension_numbers<[1], [0], [0], [1], [0, 0, 1, 1], [], []>} : vector<512x128xbf16>, vector<128x128xbf16>, vector<512x128xf32> -> vector<512x128xf32>
    %c0_3 = arith.constant 0 : index
    %c0_4 = arith.constant 0 : index
    %3 = vector.load %arg3[%c0_3, %c0_4] : memref<1x128xf32, #tpu.memory_space<vmem>>, vector<1x128xf32>
    %4 = vector.broadcast %3 : vector<1x128xf32> to vector<512x128xf32>
    %5 = arith.addf %2, %4 : vector<512x128xf32>
    %c0_5 = arith.constant 0 : index
    %c0_6 = arith.constant 0 : index
    %6 = vector.load %arg4[%c0_5, %c0_6] : memref<128x128xbf16, #tpu.memory_space<vmem>>, vector<128x128xbf16>
    %cst_7 = arith.constant dense<0.000000e+00> : vector<512x128xf32>
    %7 = tpu.matmul %0, %6, %cst_7 {dimension_numbers = #tpu.dot_dimension_numbers<[1], [0], [0], [1], [0, 0, 1, 1], [], []>} : vector<512x128xbf16>, vector<128x128xbf16>, vector<512x128xf32> -> vector<512x128xf32>
    %8 = arith.truncf %7 : vector<512x128xf32> to vector<512x128xbf16>
    %c0_8 = arith.constant 0 : index
    %c0_9 = arith.constant 0 : index
    %9 = vector.load %arg5[%c0_8, %c0_9] : memref<128x128xbf16, #tpu.memory_space<vmem>>, vector<128x128xbf16>
    %cst_10 = arith.constant dense<0.000000e+00> : vector<512x128xf32>
    %10 = tpu.matmul %8, %9, %cst_10 {dimension_numbers = #tpu.dot_dimension_numbers<[1], [0], [0], [1], [0, 0, 1, 1], [], []>} : vector<512x128xbf16>, vector<128x128xbf16>, vector<512x128xf32> -> vector<512x128xf32>
    %c0_11 = arith.constant 0 : index
    %c0_12 = arith.constant 0 : index
    %11 = vector.load %arg6[%c0_11, %c0_12] : memref<1x128xf32, #tpu.memory_space<vmem>>, vector<1x128xf32>
    %12 = vector.broadcast %11 : vector<1x128xf32> to vector<512x128xf32>
    %13 = arith.addf %10, %12 : vector<512x128xf32>
    %c0_13 = arith.constant 0 : index
    %c0_14 = arith.constant 0 : index
    %14 = vector.load %arg7[%c0_13, %c0_14] : memref<512x128xf32, #tpu.memory_space<vmem>>, vector<512x128xf32>
    tpu.vector_store %arg7[%c0_13, %c0_14], %5 {strides = array<i32>} : memref<512x128xf32, #tpu.memory_space<vmem>>, vector<512x128xf32>,
    %c512_i32 = arith.constant 512 : i32
    %15 = arith.muli %arg0, %c512_i32 : i32
    %16 = tpu.iota {dimensions = array<i32: 0>} : vector<512x1xi32>
    %17 = vector.broadcast %15 : i32 to vector<512x1xi32>
    %18 = arith.addi %17, %16 : vector<512x1xi32>
    %c512_i32_15 = arith.constant 512 : i32
    %19 = vector.broadcast %c512_i32_15 : i32 to vector<512x1xi32>
    %20 = arith.cmpi slt, %18, %19 : vector<512x1xi32>
    %21 = arith.extui %20 : vector<512x1xi1> to vector<512x1xi32>
    %22 = arith.sitofp %21 : vector<512x1xi32> to vector<512x1xf32>
    %23 = vector.broadcast %22 : vector<512x1xf32> to vector<512x128xf32>
    %24 = arith.mulf %5, %23 : vector<512x128xf32>
    %25 = arith.subf %13, %5 : vector<512x128xf32>
    %26 = vector.broadcast %22 : vector<512x1xf32> to vector<512x128xf32>
    %27 = arith.mulf %25, %26 : vector<512x128xf32>
    %28 = vector.shape_cast %24 : vector<512x128xf32> to vector<64x8x128xf32>
    %cst_16 = arith.constant dense<0.000000e+00> : vector<8x128xf32>
    %29 = vector.multi_reduction <add>, %28, %cst_16 [0] : vector<64x8x128xf32> to vector<8x128xf32>
    %c0_17 = arith.constant 0 : index
    %c0_18 = arith.constant 0 : index
    %c0_19 = arith.constant 0 : index
    %30 = vector.load %arg8[%c0_17, %c0_18, %c0_19] : memref<1x8x128xf32, #tpu.memory_space<vmem>>, vector<1x8x128xf32>
    %31 = vector.shape_cast %30 : vector<1x8x128xf32> to vector<8x128xf32>
    %32 = vector.shape_cast %29 : vector<8x128xf32> to vector<1x8x128xf32>
    tpu.vector_store %arg8[%c0_17, %c0_18, %c0_19], %32 {strides = array<i32>} : memref<1x8x128xf32, #tpu.memory_space<vmem>>, vector<1x8x128xf32>,
    %33 = arith.mulf %24, %5 : vector<512x128xf32>
    %34 = vector.shape_cast %33 : vector<512x128xf32> to vector<64x8x128xf32>
    %cst_20 = arith.constant dense<0.000000e+00> : vector<8x128xf32>
    %35 = vector.multi_reduction <add>, %34, %cst_20 [0] : vector<64x8x128xf32> to vector<8x128xf32>
    %c0_21 = arith.constant 0 : index
    %c0_22 = arith.constant 0 : index
    %c0_23 = arith.constant 0 : index
    %36 = vector.load %arg9[%c0_21, %c0_22, %c0_23] : memref<1x8x128xf32, #tpu.memory_space<vmem>>, vector<1x8x128xf32>
    %37 = vector.shape_cast %36 : vector<1x8x128xf32> to vector<8x128xf32>
    %38 = vector.shape_cast %35 : vector<8x128xf32> to vector<1x8x128xf32>
    tpu.vector_store %arg9[%c0_21, %c0_22, %c0_23], %38 {strides = array<i32>} : memref<1x8x128xf32, #tpu.memory_space<vmem>>, vector<1x8x128xf32>,
    %39 = arith.mulf %27, %27 : vector<512x128xf32>
    %40 = vector.shape_cast %39 : vector<512x128xf32> to vector<64x8x128xf32>
    %cst_24 = arith.constant dense<0.000000e+00> : vector<8x128xf32>
    %41 = vector.multi_reduction <add>, %40, %cst_24 [0] : vector<64x8x128xf32> to vector<8x128xf32>
    %c0_25 = arith.constant 0 : index
    %c0_26 = arith.constant 0 : index
    %c0_27 = arith.constant 0 : index
    %42 = vector.load %arg10[%c0_25, %c0_26, %c0_27] : memref<1x8x128xf32, #tpu.memory_space<vmem>>, vector<1x8x128xf32>
    %43 = vector.shape_cast %42 : vector<1x8x128xf32> to vector<8x128xf32>
    %44 = vector.shape_cast %41 : vector<8x128xf32> to vector<1x8x128xf32>
    tpu.vector_store %arg10[%c0_25, %c0_26, %c0_27], %44 {strides = array<i32>} : memref<1x8x128xf32, #tpu.memory_space<vmem>>, vector<1x8x128xf32>,
    return
  }
  func.func @transform_0(%arg0: i32) -> (i32, i32) {
    %c0_i32 = arith.constant 0 : i32
    %c0_i32_0 = arith.constant 0 : i32
    return %arg0, %c0_i32 : i32, i32
  }
  func.func @transform_1(%arg0: i32) -> (i32, i32) {
    %c0_i32 = arith.constant 0 : i32
    %c0_i32_0 = arith.constant 0 : i32
    %c0_i32_1 = arith.constant 0 : i32
    return %c0_i32, %c0_i32_0 : i32, i32
  }
  func.func @transform_2(%arg0: i32) -> (i32, i32) {
    %c0_i32 = arith.constant 0 : i32
    %c0_i32_0 = arith.constant 0 : i32
    %c0_i32_1 = arith.constant 0 : i32
    return %c0_i32, %c0_i32_0 : i32, i32
  }
  func.func @transform_3(%arg0: i32) -> (i32, i32) {
    %c0_i32 = arith.constant 0 : i32
    %c0_i32_0 = arith.constant 0 : i32
    %c0_i32_1 = arith.constant 0 : i32
    return %c0_i32, %c0_i32_0 : i32, i32
  }
  func.func @transform_4(%arg0: i32) -> (i32, i32) {
    %c0_i32 = arith.constant 0 : i32
    %c0_i32_0 = arith.constant 0 : i32
    %c0_i32_1 = arith.constant 0 : i32
    return %c0_i32, %c0_i32_0 : i32, i32
  }
  func.func @transform_5(%arg0: i32) -> (i32, i32) {
    %c0_i32 = arith.constant 0 : i32
    %c0_i32_0 = arith.constant 0 : i32
    %c0_i32_1 = arith.constant 0 : i32
    return %c0_i32, %c0_i32_0 : i32, i32
  }
  func.func @transform_6(%arg0: i32) -> (i32, i32) {
    %c0_i32 = arith.constant 0 : i32
    %c0_i32_0 = arith.constant 0 : i32
    return %arg0, %c0_i32 : i32, i32
  }
  func.func @transform_7(%arg0: i32) -> (i32, i32, i32) {
    %c0_i32 = arith.constant 0 : i32
    %c0_i32_0 = arith.constant 0 : i32
    %c0_i32_1 = arith.constant 0 : i32
    return %arg0, %c0_i32, %c0_i32_0 : i32, i32, i32
  }
  func.func @transform_8(%arg0: i32) -> (i32, i32, i32) {
    %c0_i32 = arith.constant 0 : i32
    %c0_i32_0 = arith.constant 0 : i32
    %c0_i32_1 = arith.constant 0 : i32
    return %arg0, %c0_i32, %c0_i32_0 : i32, i32, i32
  }
  func.func @transform_9(%arg0: i32) -> (i32, i32, i32) {
    %c0_i32 = arith.constant 0 : i32
    %c0_i32_0 = arith.constant 0 : i32
    %c0_i32_1 = arith.constant 0 : i32
    return %arg0, %c0_i32, %c0_i32_0 : i32, i32, i32
  }
}

</mosaic_0001>

<llo_original>
// kernel: tpu_custom_call.1
$region0: #{tpu_custom_call.1}
  #allocation0 [shape = 'u32[]', space=smem, size = 0x4, offset = 0x4, fixed_abs, tag = 'smem constant byte address 0x4 - core index']
  #allocation1 [shape = 'u32[72,128]{1,0:T(1,128)}', space=vmem, size = 0x9000, scoped, tag = 'internal scratch']
  %s0 = inlined_call_operand.hbm [shape: bf16[512,128], index: 0, kind: input, shape index: {}]
  %s1 = inlined_call_operand.hbm [shape: bf16[128,128], index: 1, kind: input, shape index: {}]
  %s2 = inlined_call_operand.vmem [shape: f32[1,128], index: 2, kind: input, shape index: {}]
  %s3 = inlined_call_operand.hbm [shape: bf16[128,128], index: 3, kind: input, shape index: {}]
  %s4 = inlined_call_operand.hbm [shape: bf16[128,128], index: 4, kind: input, shape index: {}]
  %s5 = inlined_call_operand.vmem [shape: f32[1,128], index: 5, kind: input, shape index: {}]
  %s6 = inlined_call_operand.hbm [shape: f32[512,128], index: 6, kind: output, shape index: {0}]
  %s7 = inlined_call_operand.hbm [shape: f32[1,8,128], index: 7, kind: output, shape index: {1}]
  %s8 = inlined_call_operand.hbm [shape: f32[1,8,128], index: 8, kind: output, shape index: {2}]
  %s9 = inlined_call_operand.hbm [shape: f32[1,8,128], index: 9, kind: output, shape index: {3}]
  %10 = xla_tuple %s6, %s7, %s8, %s9
  %s11 = sld [smem:[#allocation0]]
  $region74: #{tpu_custom_call.1} parent=0
    _
  %s13 = ssub.s32 1, %s11
  %s14 = scalar_select 0, %s13, %s11
  $region1: #{tpu_custom_call.1} parent=0
    #allocation2 [shape = 'u8[131072]{0}', space=vmem, size = 0x20000, scoped, tag = 'input window, operand 0, single buffered']
    #allocation3 [shape = 's32[1]{0}', space=sflag, size = 0x4, scoped, tag = 'scoped memory for tpu_custom_call.1']
    #allocation4 [shape = 's32[1]{0}', space=sflag, size = 0x4, scoped, tag = 'scoped memory for tpu_custom_call.1']
    #allocation5 [shape = 'u8[32768]{0}', space=vmem, size = 0x8000, scoped, tag = 'input window, operand 1, single buffered']
    #allocation6 [shape = 's32[1]{0}', space=sflag, size = 0x4, scoped, tag = 'scoped memory for tpu_custom_call.1']
    #allocation7 [shape = 'u8[32768]{0}', space=vmem, size = 0x8000, scoped, tag = 'input window, operand 3, single buffered']
    #allocation8 [shape = 'u8[32768]{0}', space=vmem, size = 0x8000, scoped, tag = 'input window, operand 4, single buffered']
    #allocation9 [shape = 's32[1]{0}', space=sflag, size = 0x4, scoped, tag = 'scoped memory for tpu_custom_call.1']
    #allocation10 [shape = 'u8[262144]{0}', space=vmem, size = 0x40000, scoped, tag = 'output window, operand 0, single buffered']
    #allocation11 [shape = 'u8[4096]{0}', space=vmem, size = 0x1000, scoped, tag = 'output window, operand 1, single buffered']
    #allocation12 [shape = 's32[1]{0}', space=sflag, size = 0x4, scoped, tag = 'scoped memory for tpu_custom_call.1']
    #allocation13 [shape = 'u8[4096]{0}', space=vmem, size = 0x1000, scoped, tag = 'output window, operand 2, single buffered']
    #allocation14 [shape = 'u8[4096]{0}', space=vmem, size = 0x1000, scoped, tag = 'output window, operand 3, single buffered']
    #allocation15 [shape = 's32[1]{0}', space=sflag, size = 0x4, scoped, tag = 'scoped memory for tpu_custom_call.1']
    %15 = vsyncpa [#allocation3], 0
    %16 = vsyncpa [#allocation6], 0
    %17 = vsyncpa [#allocation9], 0
    %18 = vsyncpa [#allocation4], 0
    %19 = vsyncpa [#allocation12], 0
    %20 = vsyncpa [#allocation15], 0
    // Predicated region
    $region2: #{tpu_custom_call.1} parent=1 // pred_check
      _
    $region3: #{tpu_custom_call.1} parent=1 // pred_check_branch
      %22 = sbr.rel (0) target = $region5
    $region4: #{tpu_custom_call.1} parent=1 // pred_region
      %24 = vsyncadd [#allocation3], 0
      %s25 = sshll.u32 %s0, 4
      %s26 = int_to_ptr.hbm [resolvable:$true] %s25
      %s27 = sshll.u32 [#allocation2], 4
      %s28 = int_to_ptr.vmem [resolvable:$true] %s27
      %33 = dma.hbm_to_vmem [thread:$0]  %s26, 4096, %s28, [#allocation3], 64, 64, 4
    $region5: #{tpu_custom_call.1} parent=1 // pred_fallthru
      _
    // Predicated region
    $region6: #{tpu_custom_call.1} parent=1 // pred_check
      _
    $region7: #{tpu_custom_call.1} parent=1 // pred_check_branch
      %35 = sbr.rel (0) target = $region9
    $region8: #{tpu_custom_call.1} parent=1 // pred_region
      %37 = vsyncadd [#allocation6], 0
      %s38 = sshll.u32 %s1, 4
      %s39 = int_to_ptr.hbm [resolvable:$true] %s38
      %s40 = sshll.u32 [#allocation5], 4
      %s41 = int_to_ptr.vmem [resolvable:$true] %s40
      %46 = dma.hbm_to_vmem [thread:$0]  %s39, 1024, %s41, [#allocation6], 64, 64, 4
    $region9: #{tpu_custom_call.1} parent=1 // pred_fallthru
      _
    // Predicated region
    $region10: #{tpu_custom_call.1} parent=1 // pred_check
      _
    $region11: #{tpu_custom_call.1} parent=1 // pred_check_branch
      %48 = sbr.rel (0) target = $region13
    $region12: #{tpu_custom_call.1} parent=1 // pred_region
      _
    $region13: #{tpu_custom_call.1} parent=1 // pred_fallthru
      _
    // Predicated region
    $region14: #{tpu_custom_call.1} parent=1 // pred_check
      _
    $region15: #{tpu_custom_call.1} parent=1 // pred_check_branch
      %50 = sbr.rel (0) target = $region17
    $region16: #{tpu_custom_call.1} parent=1 // pred_region
      %52 = vsyncadd [#allocation6], 0
      %s53 = sshll.u32 %s3, 4
      %s54 = int_to_ptr.hbm [resolvable:$true] %s53
      %s55 = sshll.u32 [#allocation7], 4
      %s56 = int_to_ptr.vmem [resolvable:$true] %s55
      %61 = dma.hbm_to_vmem [thread:$0]  %s54, 1024, %s56, [#allocation6], 64, 64, 4
    $region17: #{tpu_custom_call.1} parent=1 // pred_fallthru
      _
    // Predicated region
    $region18: #{tpu_custom_call.1} parent=1 // pred_check
      _
    $region19: #{tpu_custom_call.1} parent=1 // pred_check_branch
      %63 = sbr.rel (0) target = $region21
    $region20: #{tpu_custom_call.1} parent=1 // pred_region
      %65 = vsyncadd [#allocation9], 0
      %s66 = sshll.u32 %s4, 4
      %s67 = int_to_ptr.hbm [resolvable:$true] %s66
      %s68 = sshll.u32 [#allocation8], 4
      %s69 = int_to_ptr.vmem [resolvable:$true] %s68
      %74 = dma.hbm_to_vmem [thread:$0]  %s67, 1024, %s69, [#allocation9], 64, 64, 4
    $region21: #{tpu_custom_call.1} parent=1 // pred_fallthru
      _
    // Predicated region
    $region22: #{tpu_custom_call.1} parent=1 // pred_check
      _
    $region23: #{tpu_custom_call.1} parent=1 // pred_check_branch
      %76 = sbr.rel (0) target = $region25
    $region24: #{tpu_custom_call.1} parent=1 // pred_region
      _
    $region25: #{tpu_custom_call.1} parent=1 // pred_fallthru
      _
    // Predicated region
    $region26: #{tpu_custom_call.1} parent=1 // pred_check
      _
    $region27: #{tpu_custom_call.1} parent=1 // pred_check_branch
      %78 = sbr.rel (0) target = $region29
    $region28: #{tpu_custom_call.1} parent=1 // pred_region
      %80 = dma.done [#allocation3], 4096
    $region29: #{tpu_custom_call.1} parent=1 // pred_fallthru
      _
    // Predicated region
    $region30: #{tpu_custom_call.1} parent=1 // pred_check
      _
    $region31: #{tpu_custom_call.1} parent=1 // pred_check_branch
      %82 = sbr.rel (0) target = $region33
    $region32: #{tpu_custom_call.1} parent=1 // pred_region
      %84 = dma.done [#allocation6], 1024
    $region33: #{tpu_custom_call.1} parent=1 // pred_fallthru
      _
    // Predicated region
    $region34: #{tpu_custom_call.1} parent=1 // pred_check
      _
    $region35: #{tpu_custom_call.1} parent=1 // pred_check_branch
      %86 = sbr.rel (0) target = $region37
    $region36: #{tpu_custom_call.1} parent=1 // pred_region
      %88 = dma.done [#allocation6], 1024
    $region37: #{tpu_custom_call.1} parent=1 // pred_fallthru
      _
    // Predicated region
    $region38: #{tpu_custom_call.1} parent=1 // pred_check
      _
    $region39: #{tpu_custom_call.1} parent=1 // pred_check_branch
      %90 = sbr.rel (0) target = $region41
    $region40: #{tpu_custom_call.1} parent=1 // pred_region
      %92 = dma.done [#allocation9], 1024
    $region41: #{tpu_custom_call.1} parent=1 // pred_fallthru
      _
    %v93 = vld [vmem:[#allocation2] sm:$0xf]
    %v94 = vld [vmem:[#allocation2 + $0x4] sm:$0xf]
    %v95 = vld [vmem:[#allocation2 + $0x8] sm:$0xf]
    %v96 = vld [vmem:[#allocation2 + $0xc] sm:$0xf]
    %v97 = vld [vmem:[#allocation2 + $0x10] sm:$0xf]
    %v98 = vld [vmem:[#allocation2 + $0x14] sm:$0xf]
    %v99 = vld [vmem:[#allocation2 + $0x18] sm:$0xf]
    %v100 = vld [vmem:[#allocation2 + $0x1c] sm:$0xf]
    %v101 = vld [vmem:[#allocation2 + $0x20] sm:$0xf]
    %v102 = vld [vmem:[#allocation2 + $0x24] sm:$0xf]
    %v103 = vld [vmem:[#allocation2 + $0x28] sm:$0xf]
    %v104 = vld [vmem:[#allocation2 + $0x2c] sm:$0xf]
    %v105 = vld [vmem:[#allocation2 + $0x30] sm:$0xf]
    %v106 = vld [vmem:[#allocation2 + $0x34] sm:$0xf]
    %v107 = vld [vmem:[#allocation2 + $0x38] sm:$0xf]
    %v108 = vld [vmem:[#allocation2 + $0x3c] sm:$0xf]
    %v109 = vld [vmem:[#allocation2 + $0x40] sm:$0xf]
    %v110 = vld [vmem:[#allocation2 + $0x44] sm:$0xf]
    %v111 = vld [vmem:[#allocation2 + $0x48] sm:$0xf]
    %v112 = vld [vmem:[#allocation2 + $0x4c] sm:$0xf]
    %v113 = vld [vmem:[#allocation2 + $0x50] sm:$0xf]
    %v114 = vld [vmem:[#allocation2 + $0x54] sm:$0xf]
    %v115 = vld [vmem:[#allocation2 + $0x58] sm:$0xf]
    %v116 = vld [vmem:[#allocation2 + $0x5c] sm:$0xf]
    %v117 = vld [vmem:[#allocation2 + $0x60] sm:$0xf]
    %v118 = vld [vmem:[#allocation2 + $0x64] sm:$0xf]
    %v119 = vld [vmem:[#allocation2 + $0x68] sm:$0xf]
    %v120 = vld [vmem:[#allocation2 + $0x6c] sm:$0xf]
    %v121 = vld [vmem:[#allocation2 + $0x70] sm:$0xf]
    %v122 = vld [vmem:[#allocation2 + $0x74] sm:$0xf]
    %v123 = vld [vmem:[#allocation2 + $0x78] sm:$0xf]
    %v124 = vld [vmem:[#allocation2 + $0x7c] sm:$0xf]
    %v125 = vld [vmem:[#allocation2 + $0x80] sm:$0xf]
    %v126 = vld [vmem:[#allocation2 + $0x84] sm:$0xf]
    %v127 = vld [vmem:[#allocation2 + $0x88] sm:$0xf]
    %v128 = vld [vmem:[#allocation2 + $0x8c] sm:$0xf]
    %v129 = vld [vmem:[#allocation2 + $0x90] sm:$0xf]
    %v130 = vld [vmem:[#allocation2 + $0x94] sm:$0xf]
    %v131 = vld [vmem:[#allocation2 + $0x98] sm:$0xf]
    %v132 = vld [vmem:[#allocation2 + $0x9c] sm:$0xf]
    %v133 = vld [vmem:[#allocation2 + $0xa0] sm:$0xf]
    %v134 = vld [vmem:[#allocation2 + $0xa4] sm:$0xf]
    %v135 = vld [vmem:[#allocation2 + $0xa8] sm:$0xf]
    %v136 = vld [vmem:[#allocation2 + $0xac] sm:$0xf]
    %v137 = vld [vmem:[#allocation2 + $0xb0] sm:$0xf]
    %v138 = vld [vmem:[#allocation2 + $0xb4] sm:$0xf]
    %v139 = vld [vmem:[#allocation2 + $0xb8] sm:$0xf]
    %v140 = vld [vmem:[#allocation2 + $0xbc] sm:$0xf]
    %v141 = vld [vmem:[#allocation2 + $0xc0] sm:$0xf]
    %v142 = vld [vmem:[#allocation2 + $0xc4] sm:$0xf]
    %v143 = vld [vmem:[#allocation2 + $0xc8] sm:$0xf]
    %v144 = vld [vmem:[#allocation2 + $0xcc] sm:$0xf]
    %v145 = vld [vmem:[#allocation2 + $0xd0] sm:$0xf]
    %v146 = vld [vmem:[#allocation2 + $0xd4] sm:$0xf]
    %v147 = vld [vmem:[#allocation2 + $0xd8] sm:$0xf]
    %v148 = vld [vmem:[#allocation2 + $0xdc] sm:$0xf]
    %v149 = vld [vmem:[#allocation2 + $0xe0] sm:$0xf]
    %v150 = vld [vmem:[#allocation2 + $0xe4] sm:$0xf]
    %v151 = vld [vmem:[#allocation2 + $0xe8] sm:$0xf]
    %v152 = vld [vmem:[#allocation2 + $0xec] sm:$0xf]
    %v153 = vld [vmem:[#allocation2 + $0xf0] sm:$0xf]
    %v154 = vld [vmem:[#allocation2 + $0xf4] sm:$0xf]
    %v155 = vld [vmem:[#allocation2 + $0xf8] sm:$0xf]
    %v156 = vld [vmem:[#allocation2 + $0xfc] sm:$0xf]
    %v157 = vld [vmem:[#allocation5] sm:$0xf]
    %v158 = vld [vmem:[#allocation5 + $0x4] sm:$0xf]
    %v159 = vld [vmem:[#allocation5 + $0x8] sm:$0xf]
    %v160 = vld [vmem:[#allocation5 + $0xc] sm:$0xf]
    %v161 = vld [vmem:[#allocation5 + $0x10] sm:$0xf]
    %v162 = vld [vmem:[#allocation5 + $0x14] sm:$0xf]
    %v163 = vld [vmem:[#allocation5 + $0x18] sm:$0xf]
    %v164 = vld [vmem:[#allocation5 + $0x1c] sm:$0xf]
    %v165 = vld [vmem:[#allocation5 + $0x20] sm:$0xf]
    %v166 = vld [vmem:[#allocation5 + $0x24] sm:$0xf]
    %v167 = vld [vmem:[#allocation5 + $0x28] sm:$0xf]
    %v168 = vld [vmem:[#allocation5 + $0x2c] sm:$0xf]
    %v169 = vld [vmem:[#allocation5 + $0x30] sm:$0xf]
    %v170 = vld [vmem:[#allocation5 + $0x34] sm:$0xf]
    %v171 = vld [vmem:[#allocation5 + $0x38] sm:$0xf]
    %v172 = vld [vmem:[#allocation5 + $0x3c] sm:$0xf]
    %v173 = vld [vmem:[%s2] sm:$0x1]
    %v175 = vperm.slane %v173, 0
    %v241 = vunpack.c.l.b16 %v93
    %v242 = vunpack.c.l.b16 %v94
    %v243 = vunpack.c.l.b16 %v95
    %v244 = vunpack.c.l.b16 %v96
    %v245 = vunpack.c.l.b16 %v97
    %v246 = vunpack.c.l.b16 %v98
    %v247 = vunpack.c.l.b16 %v99
    %v248 = vunpack.c.l.b16 %v100
    %v249 = vunpack.c.l.b16 %v101
    %v250 = vunpack.c.l.b16 %v102
    %v251 = vunpack.c.l.b16 %v103
    %v252 = vunpack.c.l.b16 %v104
    %v253 = vunpack.c.l.b16 %v105
    %v254 = vunpack.c.l.b16 %v106
    %v255 = vunpack.c.l.b16 %v107
    %v256 = vunpack.c.l.b16 %v108
    %v257 = vunpack.c.l.b16 %v109
    %v258 = vunpack.c.l.b16 %v110
    %v259 = vunpack.c.l.b16 %v111
    %v260 = vunpack.c.l.b16 %v112
    %v261 = vunpack.c.l.b16 %v113
    %v262 = vunpack.c.l.b16 %v114
    %v263 = vunpack.c.l.b16 %v115
    %v264 = vunpack.c.l.b16 %v116
    %v265 = vunpack.c.l.b16 %v117
    %v266 = vunpack.c.l.b16 %v118
    %v267 = vunpack.c.l.b16 %v119
    %v268 = vunpack.c.l.b16 %v120
    %v269 = vunpack.c.l.b16 %v121
    %v270 = vunpack.c.l.b16 %v122
    %v271 = vunpack.c.l.b16 %v123
    %v272 = vunpack.c.l.b16 %v124
    %v273 = vunpack.c.l.b16 %v125
    %v274 = vunpack.c.l.b16 %v126
    %v275 = vunpack.c.l.b16 %v127
    %v276 = vunpack.c.l.b16 %v128
    %v277 = vunpack.c.l.b16 %v129
    %v278 = vunpack.c.l.b16 %v130
    %v279 = vunpack.c.l.b16 %v131
    %v280 = vunpack.c.l.b16 %v132
    %v281 = vunpack.c.l.b16 %v133
    %v282 = vunpack.c.l.b16 %v134
    %v283 = vunpack.c.l.b16 %v135
    %v284 = vunpack.c.l.b16 %v136
    %v285 = vunpack.c.l.b16 %v137
    %v286 = vunpack.c.l.b16 %v138
    %v287 = vunpack.c.l.b16 %v139
    %v288 = vunpack.c.l.b16 %v140
    %v289 = vunpack.c.l.b16 %v141
    %v290 = vunpack.c.l.b16 %v142
    %v291 = vunpack.c.l.b16 %v143
    %v292 = vunpack.c.l.b16 %v144
    %v293 = vunpack.c.l.b16 %v145
    %v294 = vunpack.c.l.b16 %v146
    %v295 = vunpack.c.l.b16 %v147
    %v296 = vunpack.c.l.b16 %v148
    %v297 = vunpack.c.l.b16 %v149
    %v298 = vunpack.c.l.b16 %v150
    %v299 = vunpack.c.l.b16 %v151
    %v300 = vunpack.c.l.b16 %v152
    %v301 = vunpack.c.l.b16 %v153
    %v302 = vunpack.c.l.b16 %v154
    %v303 = vunpack.c.l.b16 %v155
    %v304 = vunpack.c.l.b16 %v156
    %v305 = vpack.c.b16 %v242, %v241
    %v306 = vpack.c.b16 %v244, %v243
    %v307 = vpack.c.b16 %v246, %v245
    %v308 = vpack.c.b16 %v248, %v247
    %v309 = vpack.c.b16 %v250, %v249
    %v310 = vpack.c.b16 %v252, %v251
    %v311 = vpack.c.b16 %v254, %v253
    %v312 = vpack.c.b16 %v256, %v255
    %v313 = vpack.c.b16 %v258, %v257
    %v314 = vpack.c.b16 %v260, %v259
    %v315 = vpack.c.b16 %v262, %v261
    %v316 = vpack.c.b16 %v264, %v263
    %v317 = vpack.c.b16 %v266, %v265
    %v318 = vpack.c.b16 %v268, %v267
    %v319 = vpack.c.b16 %v270, %v269
    %v320 = vpack.c.b16 %v272, %v271
    %v321 = vpack.c.b16 %v274, %v273
    %v322 = vpack.c.b16 %v276, %v275
    %v323 = vpack.c.b16 %v278, %v277
    %v324 = vpack.c.b16 %v280, %v279
    %v325 = vpack.c.b16 %v282, %v281
    %v326 = vpack.c.b16 %v284, %v283
    %v327 = vpack.c.b16 %v286, %v285
    %v328 = vpack.c.b16 %v288, %v287
    %v329 = vpack.c.b16 %v290, %v289
    %v330 = vpack.c.b16 %v292, %v291
    %v331 = vpack.c.b16 %v294, %v293
    %v332 = vpack.c.b16 %v296, %v295
    %v333 = vpack.c.b16 %v298, %v297
    %v334 = vpack.c.b16 %v300, %v299
    %v335 = vpack.c.b16 %v302, %v301
    %v336 = vpack.c.b16 %v304, %v303
    %v385 = vunpack.c.l.b16 %v157
    %v386 = vunpack.c.l.b16 %v158
    %v387 = vunpack.c.l.b16 %v159
    %v388 = vunpack.c.l.b16 %v160
    %v389 = vunpack.c.l.b16 %v161
    %v390 = vunpack.c.l.b16 %v162
    %v391 = vunpack.c.l.b16 %v163
    %v392 = vunpack.c.l.b16 %v164
    %v393 = vunpack.c.l.b16 %v165
    %v394 = vunpack.c.l.b16 %v166
    %v395 = vunpack.c.l.b16 %v167
    %v396 = vunpack.c.l.b16 %v168
    %v397 = vunpack.c.l.b16 %v169
    %v398 = vunpack.c.l.b16 %v170
    %v399 = vunpack.c.l.b16 %v171
    %v400 = vunpack.c.l.b16 %v172
    %v401 = vpack.c.b16 %v386, %v385
    %v402 = vpack.c.b16 %v388, %v387
    %v403 = vpack.c.b16 %v390, %v389
    %v404 = vpack.c.b16 %v392, %v391
    %v405 = vpack.c.b16 %v394, %v393
    %v406 = vpack.c.b16 %v396, %v395
    %v407 = vpack.c.b16 %v398, %v397
    %v408 = vpack.c.b16 %v400, %v399
    %417 = vmatpush.bf16.msra.mxu0 %v408
    %418 = vmatpush.bf16.msra.mxu0 %v407
    %419 = vmatpush.bf16.msra.mxu0 %v406
    %420 = vmatpush.bf16.msra.mxu0 %v405
    %421 = vmatpush.bf16.msra.mxu0 %v404
    %422 = vmatpush.bf16.msra.mxu0 %v403
    %423 = vmatpush.bf16.msra.mxu0 %v402
    %424 = vmatpush.bf16.msra.mxu0 %v401
    %425 = vmatmul.bf16.gmra.mxu0 %v305
    %v426 = vpop.f32.mrf.mxu0
    %v427 = vadd.f32 %v175, %v426
    %v428 = vpop.f32.mrf.mxu0
    %v429 = vadd.f32 %v175, %v428
    %430 = vmatmul.bf16.gmra.mxu0 %v306
    %v431 = vpop.f32.mrf.mxu0
    %v432 = vadd.f32 %v175, %v431
    %v433 = vpop.f32.mrf.mxu0
    %v434 = vadd.f32 %v175, %v433
    %435 = vmatmul.bf16.gmra.mxu0 %v307
    %v436 = vpop.f32.mrf.mxu0
    %v437 = vadd.f32 %v175, %v436
    %v438 = vpop.f32.mrf.mxu0
    %v439 = vadd.f32 %v175, %v438
    %440 = vmatmul.bf16.gmra.mxu0 %v308
    %v441 = vpop.f32.mrf.mxu0
    %v442 = vadd.f32 %v175, %v441
    %v443 = vpop.f32.mrf.mxu0
    %v444 = vadd.f32 %v175, %v443
    %445 = vmatmul.bf16.gmra.mxu0 %v309
    %v446 = vpop.f32.mrf.mxu0
    %v447 = vadd.f32 %v175, %v446
    %v448 = vpop.f32.mrf.mxu0
    %v449 = vadd.f32 %v175, %v448
    %450 = vmatmul.bf16.gmra.mxu0 %v310
    %v451 = vpop.f32.mrf.mxu0
    %v452 = vadd.f32 %v175, %v451
    %v453 = vpop.f32.mrf.mxu0
    %v454 = vadd.f32 %v175, %v453
    %455 = vmatmul.bf16.gmra.mxu0 %v311
    %v456 = vpop.f32.mrf.mxu0
    %v457 = vadd.f32 %v175, %v456
    %v458 = vpop.f32.mrf.mxu0
    %v459 = vadd.f32 %v175, %v458
    %460 = vmatmul.bf16.gmra.mxu0 %v312
    %v461 = vpop.f32.mrf.mxu0
    %v462 = vadd.f32 %v175, %v461
    %v463 = vpop.f32.mrf.mxu0
    %v464 = vadd.f32 %v175, %v463
    %465 = vmatmul.bf16.gmra.mxu0 %v313
    %v466 = vpop.f32.mrf.mxu0
    %v467 = vadd.f32 %v175, %v466
    %v468 = vpop.f32.mrf.mxu0
    %v469 = vadd.f32 %v175, %v468
    %470 = vmatmul.bf16.gmra.mxu0 %v314
    %v471 = vpop.f32.mrf.mxu0
    %v472 = vadd.f32 %v175, %v471
    %v473 = vpop.f32.mrf.mxu0
    %v474 = vadd.f32 %v175, %v473
    %475 = vmatmul.bf16.gmra.mxu0 %v315
    %v476 = vpop.f32.mrf.mxu0
    %v477 = vadd.f32 %v175, %v476
    %v478 = vpop.f32.mrf.mxu0
    %v479 = vadd.f32 %v175, %v478
    %480 = vmatmul.bf16.gmra.mxu0 %v316
    %v481 = vpop.f32.mrf.mxu0
    %v482 = vadd.f32 %v175, %v481
    %v483 = vpop.f32.mrf.mxu0
    %v484 = vadd.f32 %v175, %v483
    %485 = vmatmul.bf16.gmra.mxu0 %v317
    %v486 = vpop.f32.mrf.mxu0
    %v487 = vadd.f32 %v175, %v486
    %v488 = vpop.f32.mrf.mxu0
    %v489 = vadd.f32 %v175, %v488
    %490 = vmatmul.bf16.gmra.mxu0 %v318
    %v491 = vpop.f32.mrf.mxu0
    %v492 = vadd.f32 %v175, %v491
    %v493 = vpop.f32.mrf.mxu0
    %v494 = vadd.f32 %v175, %v493
    %495 = vmatmul.bf16.gmra.mxu0 %v319
    %v496 = vpop.f32.mrf.mxu0
    %v497 = vadd.f32 %v175, %v496
    %v498 = vpop.f32.mrf.mxu0
    %v499 = vadd.f32 %v175, %v498
    %500 = vmatmul.bf16.gmra.mxu0 %v320
    %v501 = vpop.f32.mrf.mxu0
    %v502 = vadd.f32 %v175, %v501
    %v503 = vpop.f32.mrf.mxu0
    %v504 = vadd.f32 %v175, %v503
    %505 = vmatmul.bf16.gmra.mxu0 %v321
    %v506 = vpop.f32.mrf.mxu0
    %v507 = vadd.f32 %v175, %v506
    %v508 = vpop.f32.mrf.mxu0
    %v509 = vadd.f32 %v175, %v508
    %510 = vmatmul.bf16.gmra.mxu0 %v322
    %v511 = vpop.f32.mrf.mxu0
    %v512 = vadd.f32 %v175, %v511
    %v513 = vpop.f32.mrf.mxu0
    %v514 = vadd.f32 %v175, %v513
    %515 = vmatmul.bf16.gmra.mxu0 %v323
    %v516 = vpop.f32.mrf.mxu0
    %v517 = vadd.f32 %v175, %v516
    %v518 = vpop.f32.mrf.mxu0
    %v519 = vadd.f32 %v175, %v518
    %520 = vmatmul.bf16.gmra.mxu0 %v324
    %v521 = vpop.f32.mrf.mxu0
    %v522 = vadd.f32 %v175, %v521
    %v523 = vpop.f32.mrf.mxu0
    %v524 = vadd.f32 %v175, %v523
    %525 = vmatmul.bf16.gmra.mxu0 %v325
    %v526 = vpop.f32.mrf.mxu0
    %v527 = vadd.f32 %v175, %v526
    %v528 = vpop.f32.mrf.mxu0
    %v529 = vadd.f32 %v175, %v528
    %530 = vmatmul.bf16.gmra.mxu0 %v326
    %v531 = vpop.f32.mrf.mxu0
    %v532 = vadd.f32 %v175, %v531
    %v533 = vpop.f32.mrf.mxu0
    %v534 = vadd.f32 %v175, %v533
    %535 = vmatmul.bf16.gmra.mxu0 %v327
    %v536 = vpop.f32.mrf.mxu0
    %v537 = vadd.f32 %v175, %v536
    %v538 = vpop.f32.mrf.mxu0
    %v539 = vadd.f32 %v175, %v538
    %540 = vmatmul.bf16.gmra.mxu0 %v328
    %v541 = vpop.f32.mrf.mxu0
    %v542 = vadd.f32 %v175, %v541
    %v543 = vpop.f32.mrf.mxu0
    %v544 = vadd.f32 %v175, %v543
    %545 = vmatmul.bf16.gmra.mxu0 %v329
    %v546 = vpop.f32.mrf.mxu0
    %v547 = vadd.f32 %v175, %v546
    %v548 = vpop.f32.mrf.mxu0
    %v549 = vadd.f32 %v175, %v548
    %550 = vmatmul.bf16.gmra.mxu0 %v330
    %v551 = vpop.f32.mrf.mxu0
    %v552 = vadd.f32 %v175, %v551
    %v553 = vpop.f32.mrf.mxu0
    %v554 = vadd.f32 %v175, %v553
    %555 = vmatmul.bf16.gmra.mxu0 %v331
    %v556 = vpop.f32.mrf.mxu0
    %v557 = vadd.f32 %v175, %v556
    %v558 = vpop.f32.mrf.mxu0
    %v559 = vadd.f32 %v175, %v558
    %560 = vmatmul.bf16.gmra.mxu0 %v332
    %v561 = vpop.f32.mrf.mxu0
    %v562 = vadd.f32 %v175, %v561
    %v563 = vpop.f32.mrf.mxu0
    %v564 = vadd.f32 %v175, %v563
    %565 = vmatmul.bf16.gmra.mxu0 %v333
    %v566 = vpop.f32.mrf.mxu0
    %v567 = vadd.f32 %v175, %v566
    %v568 = vpop.f32.mrf.mxu0
    %v569 = vadd.f32 %v175, %v568
    %570 = vmatmul.bf16.gmra.mxu0 %v334
    %v571 = vpop.f32.mrf.mxu0
    %v572 = vadd.f32 %v175, %v571
    %v573 = vpop.f32.mrf.mxu0
    %v574 = vadd.f32 %v175, %v573
    %575 = vmatmul.bf16.gmra.mxu0 %v335
    %v576 = vpop.f32.mrf.mxu0
    %v577 = vadd.f32 %v175, %v576
    %v578 = vpop.f32.mrf.mxu0
    %v579 = vadd.f32 %v175, %v578
    %580 = vmatmul.bf16.gmra.mxu0 %v336
    %v581 = vpop.f32.mrf.mxu0
    %v582 = vadd.f32 %v175, %v581
    %v583 = vpop.f32.mrf.mxu0
    %v584 = vadd.f32 %v175, %v583
    %585 = vdwg.mxu0
    %v586 = vld [vmem:[#allocation7] sm:$0xf]
    %v587 = vld [vmem:[#allocation7 + $0x4] sm:$0xf]
    %v588 = vld [vmem:[#allocation7 + $0x8] sm:$0xf]
    %v589 = vld [vmem:[#allocation7 + $0xc] sm:$0xf]
    %v590 = vld [vmem:[#allocation7 + $0x10] sm:$0xf]
    %v591 = vld [vmem:[#allocation7 + $0x14] sm:$0xf]
    %v592 = vld [vmem:[#allocation7 + $0x18] sm:$0xf]
    %v593 = vld [vmem:[#allocation7 + $0x1c] sm:$0xf]
    %v594 = vld [vmem:[#allocation7 + $0x20] sm:$0xf]
    %v595 = vld [vmem:[#allocation7 + $0x24] sm:$0xf]
    %v596 = vld [vmem:[#allocation7 + $0x28] sm:$0xf]
    %v597 = vld [vmem:[#allocation7 + $0x2c] sm:$0xf]
    %v598 = vld [vmem:[#allocation7 + $0x30] sm:$0xf]
    %v599 = vld [vmem:[#allocation7 + $0x34] sm:$0xf]
    %v600 = vld [vmem:[#allocation7 + $0x38] sm:$0xf]
    %v601 = vld [vmem:[#allocation7 + $0x3c] sm:$0xf]
    %v618 = vunpack.c.l.b16 %v586
    %v619 = vunpack.c.l.b16 %v587
    %v620 = vunpack.c.l.b16 %v588
    %v621 = vunpack.c.l.b16 %v589
    %v622 = vunpack.c.l.b16 %v590
    %v623 = vunpack.c.l.b16 %v591
    %v624 = vunpack.c.l.b16 %v592
    %v625 = vunpack.c.l.b16 %v593
    %v626 = vunpack.c.l.b16 %v594
    %v627 = vunpack.c.l.b16 %v595
    %v628 = vunpack.c.l.b16 %v596
    %v629 = vunpack.c.l.b16 %v597
    %v630 = vunpack.c.l.b16 %v598
    %v631 = vunpack.c.l.b16 %v599
    %v632 = vunpack.c.l.b16 %v600
    %v633 = vunpack.c.l.b16 %v601
    %v634 = vpack.c.b16 %v619, %v618
    %v635 = vpack.c.b16 %v621, %v620
    %v636 = vpack.c.b16 %v623, %v622
    %v637 = vpack.c.b16 %v625, %v624
    %v638 = vpack.c.b16 %v627, %v626
    %v639 = vpack.c.b16 %v629, %v628
    %v640 = vpack.c.b16 %v631, %v630
    %v641 = vpack.c.b16 %v633, %v632
    %650 = vmatpush.bf16.msra.mxu0 %v641
    %651 = vmatpush.bf16.msra.mxu0 %v640
    %652 = vmatpush.bf16.msra.mxu0 %v639
    %653 = vmatpush.bf16.msra.mxu0 %v638
    %654 = vmatpush.bf16.msra.mxu0 %v637
    %655 = vmatpush.bf16.msra.mxu0 %v636
    %656 = vmatpush.bf16.msra.mxu0 %v635
    %657 = vmatpush.bf16.msra.mxu0 %v634
    %658 = vmatmul.bf16.gmra.mxu0 %v305
    %v659 = vpop.f32.mrf.mxu0
    %v660 = vadd.f32 0.0, %v659
    %v661 = vpop.f32.mrf.mxu0
    %v662 = vadd.f32 0.0, %v661
    %663 = vmatmul.bf16.gmra.mxu0 %v306
    %v664 = vpop.f32.mrf.mxu0
    %v665 = vadd.f32 0.0, %v664
    %v666 = vpop.f32.mrf.mxu0
    %v667 = vadd.f32 0.0, %v666
    %668 = vmatmul.bf16.gmra.mxu0 %v307
    %v669 = vpop.f32.mrf.mxu0
    %v670 = vadd.f32 0.0, %v669
    %v671 = vpop.f32.mrf.mxu0
    %v672 = vadd.f32 0.0, %v671
    %673 = vmatmul.bf16.gmra.mxu0 %v308
    %v674 = vpop.f32.mrf.mxu0
    %v675 = vadd.f32 0.0, %v674
    %v676 = vpop.f32.mrf.mxu0
    %v677 = vadd.f32 0.0, %v676
    %678 = vmatmul.bf16.gmra.mxu0 %v309
    %v679 = vpop.f32.mrf.mxu0
    %v680 = vadd.f32 0.0, %v679
    %v681 = vpop.f32.mrf.mxu0
    %v682 = vadd.f32 0.0, %v681
    %683 = vmatmul.bf16.gmra.mxu0 %v310
    %v684 = vpop.f32.mrf.mxu0
    %v685 = vadd.f32 0.0, %v684
    %v686 = vpop.f32.mrf.mxu0
    %v687 = vadd.f32 0.0, %v686
    %688 = vmatmul.bf16.gmra.mxu0 %v311
    %v689 = vpop.f32.mrf.mxu0
    %v690 = vadd.f32 0.0, %v689
    %v691 = vpop.f32.mrf.mxu0
    %v692 = vadd.f32 0.0, %v691
    %693 = vmatmul.bf16.gmra.mxu0 %v312
    %v694 = vpop.f32.mrf.mxu0
    %v695 = vadd.f32 0.0, %v694
    %v696 = vpop.f32.mrf.mxu0
    %v697 = vadd.f32 0.0, %v696
    %698 = vmatmul.bf16.gmra.mxu0 %v313
    %v699 = vpop.f32.mrf.mxu0
    %v700 = vadd.f32 0.0, %v699
    %v701 = vpop.f32.mrf.mxu0
    %v702 = vadd.f32 0.0, %v701
    %703 = vmatmul.bf16.gmra.mxu0 %v314
    %v704 = vpop.f32.mrf.mxu0
    %v705 = vadd.f32 0.0, %v704
    %v706 = vpop.f32.mrf.mxu0
    %v707 = vadd.f32 0.0, %v706
    %708 = vmatmul.bf16.gmra.mxu0 %v315
    %v709 = vpop.f32.mrf.mxu0
    %v710 = vadd.f32 0.0, %v709
    %v711 = vpop.f32.mrf.mxu0
    %v712 = vadd.f32 0.0, %v711
    %713 = vmatmul.bf16.gmra.mxu0 %v316
    %v714 = vpop.f32.mrf.mxu0
    %v715 = vadd.f32 0.0, %v714
    %v716 = vpop.f32.mrf.mxu0
    %v717 = vadd.f32 0.0, %v716
    %718 = vmatmul.bf16.gmra.mxu0 %v317
    %v719 = vpop.f32.mrf.mxu0
    %v720 = vadd.f32 0.0, %v719
    %v721 = vpop.f32.mrf.mxu0
    %v722 = vadd.f32 0.0, %v721
    %723 = vmatmul.bf16.gmra.mxu0 %v318
    %v724 = vpop.f32.mrf.mxu0
    %v725 = vadd.f32 0.0, %v724
    %v726 = vpop.f32.mrf.mxu0
    %v727 = vadd.f32 0.0, %v726
    %728 = vmatmul.bf16.gmra.mxu0 %v319
    %v729 = vpop.f32.mrf.mxu0
    %v730 = vadd.f32 0.0, %v729
    %v731 = vpop.f32.mrf.mxu0
    %v732 = vadd.f32 0.0, %v731
    %733 = vmatmul.bf16.gmra.mxu0 %v320
    %v734 = vpop.f32.mrf.mxu0
    %v735 = vadd.f32 0.0, %v734
    %v736 = vpop.f32.mrf.mxu0
    %v737 = vadd.f32 0.0, %v736
    %738 = vmatmul.bf16.gmra.mxu0 %v321
    %v739 = vpop.f32.mrf.mxu0
    %v740 = vadd.f32 0.0, %v739
    %v741 = vpop.f32.mrf.mxu0
    %v742 = vadd.f32 0.0, %v741
    %743 = vmatmul.bf16.gmra.mxu0 %v322
    %v744 = vpop.f32.mrf.mxu0
    %v745 = vadd.f32 0.0, %v744
    %v746 = vpop.f32.mrf.mxu0
    %v747 = vadd.f32 0.0, %v746
    %748 = vmatmul.bf16.gmra.mxu0 %v323
    %v749 = vpop.f32.mrf.mxu0
    %v750 = vadd.f32 0.0, %v749
    %v751 = vpop.f32.mrf.mxu0
    %v752 = vadd.f32 0.0, %v751
    %753 = vmatmul.bf16.gmra.mxu0 %v324
    %v754 = vpop.f32.mrf.mxu0
    %v755 = vadd.f32 0.0, %v754
    %v756 = vpop.f32.mrf.mxu0
    %v757 = vadd.f32 0.0, %v756
    %758 = vmatmul.bf16.gmra.mxu0 %v325
    %v759 = vpop.f32.mrf.mxu0
    %v760 = vadd.f32 0.0, %v759
    %v761 = vpop.f32.mrf.mxu0
    %v762 = vadd.f32 0.0, %v761
    %763 = vmatmul.bf16.gmra.mxu0 %v326
    %v764 = vpop.f32.mrf.mxu0
    %v765 = vadd.f32 0.0, %v764
    %v766 = vpop.f32.mrf.mxu0
    %v767 = vadd.f32 0.0, %v766
    %768 = vmatmul.bf16.gmra.mxu0 %v327
    %v769 = vpop.f32.mrf.mxu0
    %v770 = vadd.f32 0.0, %v769
    %v771 = vpop.f32.mrf.mxu0
    %v772 = vadd.f32 0.0, %v771
    %773 = vmatmul.bf16.gmra.mxu0 %v328
    %v774 = vpop.f32.mrf.mxu0
    %v775 = vadd.f32 0.0, %v774
    %v776 = vpop.f32.mrf.mxu0
    %v777 = vadd.f32 0.0, %v776
    %778 = vmatmul.bf16.gmra.mxu0 %v329
    %v779 = vpop.f32.mrf.mxu0
    %v780 = vadd.f32 0.0, %v779
    %v781 = vpop.f32.mrf.mxu0
    %v782 = vadd.f32 0.0, %v781
    %783 = vmatmul.bf16.gmra.mxu0 %v330
    %v784 = vpop.f32.mrf.mxu0
    %v785 = vadd.f32 0.0, %v784
    %v786 = vpop.f32.mrf.mxu0
    %v787 = vadd.f32 0.0, %v786
    %788 = vmatmul.bf16.gmra.mxu0 %v331
    %v789 = vpop.f32.mrf.mxu0
    %v790 = vadd.f32 0.0, %v789
    %v791 = vpop.f32.mrf.mxu0
    %v792 = vadd.f32 0.0, %v791
    %793 = vmatmul.bf16.gmra.mxu0 %v332
    %v794 = vpop.f32.mrf.mxu0
    %v795 = vadd.f32 0.0, %v794
    %v796 = vpop.f32.mrf.mxu0
    %v797 = vadd.f32 0.0, %v796
    %798 = vmatmul.bf16.gmra.mxu0 %v333
    %v799 = vpop.f32.mrf.mxu0
    %v800 = vadd.f32 0.0, %v799
    %v801 = vpop.f32.mrf.mxu0
    %v802 = vadd.f32 0.0, %v801
    %803 = vmatmul.bf16.gmra.mxu0 %v334
    %v804 = vpop.f32.mrf.mxu0
    %v805 = vadd.f32 0.0, %v804
    %v806 = vpop.f32.mrf.mxu0
    %v807 = vadd.f32 0.0, %v806
    %808 = vmatmul.bf16.gmra.mxu0 %v335
    %v809 = vpop.f32.mrf.mxu0
    %v810 = vadd.f32 0.0, %v809
    %v811 = vpop.f32.mrf.mxu0
    %v812 = vadd.f32 0.0, %v811
    %813 = vmatmul.bf16.gmra.mxu0 %v336
    %v814 = vpop.f32.mrf.mxu0
    %v815 = vadd.f32 0.0, %v814
    %v816 = vpop.f32.mrf.mxu0
    %v817 = vadd.f32 0.0, %v816
    %818 = vdwg.mxu0
    %v819 = vpack.c.bf16 %v662, %v660
    %v820 = vpack.c.bf16 %v667, %v665
    %v821 = vpack.c.bf16 %v672, %v670
    %v822 = vpack.c.bf16 %v677, %v675
    %v823 = vpack.c.bf16 %v682, %v680
    %v824 = vpack.c.bf16 %v687, %v685
    %v825 = vpack.c.bf16 %v692, %v690
    %v826 = vpack.c.bf16 %v697, %v695
    %v827 = vpack.c.bf16 %v702, %v700
    %v828 = vpack.c.bf16 %v707, %v705
    %v829 = vpack.c.bf16 %v712, %v710
    %v830 = vpack.c.bf16 %v717, %v715
    %v831 = vpack.c.bf16 %v722, %v720
    %v832 = vpack.c.bf16 %v727, %v725
    %v833 = vpack.c.bf16 %v732, %v730
    %v834 = vpack.c.bf16 %v737, %v735
    %v835 = vpack.c.bf16 %v742, %v740
    %v836 = vpack.c.bf16 %v747, %v745
    %v837 = vpack.c.bf16 %v752, %v750
    %v838 = vpack.c.bf16 %v757, %v755
    %v839 = vpack.c.bf16 %v762, %v760
    %v840 = vpack.c.bf16 %v767, %v765
    %v841 = vpack.c.bf16 %v772, %v770
    %v842 = vpack.c.bf16 %v777, %v775
    %v843 = vpack.c.bf16 %v782, %v780
    %v844 = vpack.c.bf16 %v787, %v785
    %v845 = vpack.c.bf16 %v792, %v790
    %v846 = vpack.c.bf16 %v797, %v795
    %v847 = vpack.c.bf16 %v802, %v800
    %v848 = vpack.c.bf16 %v807, %v805
    %v849 = vpack.c.bf16 %v812, %v810
    %v850 = vpack.c.bf16 %v817, %v815
    %v851 = vld [vmem:[#allocation8] sm:$0xf]
    %v852 = vld [vmem:[#allocation8 + $0x4] sm:$0xf]
    %v853 = vld [vmem:[#allocation8 + $0x8] sm:$0xf]
    %v854 = vld [vmem:[#allocation8 + $0xc] sm:$0xf]
    %v855 = vld [vmem:[#allocation8 + $0x10] sm:$0xf]
    %v856 = vld [vmem:[#allocation8 + $0x14] sm:$0xf]
    %v857 = vld [vmem:[#allocation8 + $0x18] sm:$0xf]
    %v858 = vld [vmem:[#allocation8 + $0x1c] sm:$0xf]
    %v859 = vld [vmem:[#allocation8 + $0x20] sm:$0xf]
    %v860 = vld [vmem:[#allocation8 + $0x24] sm:$0xf]
    %v861 = vld [vmem:[#allocation8 + $0x28] sm:$0xf]
    %v862 = vld [vmem:[#allocation8 + $0x2c] sm:$0xf]
    %v863 = vld [vmem:[#allocation8 + $0x30] sm:$0xf]
    %v864 = vld [vmem:[#allocation8 + $0x34] sm:$0xf]
    %v865 = vld [vmem:[#allocation8 + $0x38] sm:$0xf]
    %v866 = vld [vmem:[#allocation8 + $0x3c] sm:$0xf]
    %v867 = vld [vmem:[%s5] sm:$0x1]
    %v869 = vperm.slane %v867, 0
    %v887 = vunpack.c.l.b16 %v851
    %v888 = vunpack.c.l.b16 %v852
    %v889 = vunpack.c.l.b16 %v853
    %v890 = vunpack.c.l.b16 %v854
    %v891 = vunpack.c.l.b16 %v855
    %v892 = vunpack.c.l.b16 %v856
    %v893 = vunpack.c.l.b16 %v857
    %v894 = vunpack.c.l.b16 %v858
    %v895 = vunpack.c.l.b16 %v859
    %v896 = vunpack.c.l.b16 %v860
    %v897 = vunpack.c.l.b16 %v861
    %v898 = vunpack.c.l.b16 %v862
    %v899 = vunpack.c.l.b16 %v863
    %v900 = vunpack.c.l.b16 %v864
    %v901 = vunpack.c.l.b16 %v865
    %v902 = vunpack.c.l.b16 %v866
    %v903 = vpack.c.b16 %v888, %v887
    %v904 = vpack.c.b16 %v890, %v889
    %v905 = vpack.c.b16 %v892, %v891
    %v906 = vpack.c.b16 %v894, %v893
    %v907 = vpack.c.b16 %v896, %v895
    %v908 = vpack.c.b16 %v898, %v897
    %v909 = vpack.c.b16 %v900, %v899
    %v910 = vpack.c.b16 %v902, %v901
    %919 = vmatpush.bf16.msra.mxu0 %v910
    %920 = vmatpush.bf16.msra.mxu0 %v909
    %921 = vmatpush.bf16.msra.mxu0 %v908
    %922 = vmatpush.bf16.msra.mxu0 %v907
    %923 = vmatpush.bf16.msra.mxu0 %v906
    %924 = vmatpush.bf16.msra.mxu0 %v905
    %925 = vmatpush.bf16.msra.mxu0 %v904
    %926 = vmatpush.bf16.msra.mxu0 %v903
    %927 = vmatmul.bf16.gmra.mxu0 %v819
    %v928 = vpop.f32.mrf.mxu0
    %v929 = vadd.f32 %v869, %v928
    %v930 = vpop.f32.mrf.mxu0
    %v931 = vadd.f32 %v869, %v930
    %932 = vmatmul.bf16.gmra.mxu0 %v820
    %v933 = vpop.f32.mrf.mxu0
    %v934 = vadd.f32 %v869, %v933
    %v935 = vpop.f32.mrf.mxu0
    %v936 = vadd.f32 %v869, %v935
    %937 = vmatmul.bf16.gmra.mxu0 %v821
    %v938 = vpop.f32.mrf.mxu0
    %v939 = vadd.f32 %v869, %v938
    %v940 = vpop.f32.mrf.mxu0
    %v941 = vadd.f32 %v869, %v940
    %942 = vmatmul.bf16.gmra.mxu0 %v822
    %v943 = vpop.f32.mrf.mxu0
    %v944 = vadd.f32 %v869, %v943
    %v945 = vpop.f32.mrf.mxu0
    %v946 = vadd.f32 %v869, %v945
    %947 = vmatmul.bf16.gmra.mxu0 %v823
    %v948 = vpop.f32.mrf.mxu0
    %v949 = vadd.f32 %v869, %v948
    %v950 = vpop.f32.mrf.mxu0
    %v951 = vadd.f32 %v869, %v950
    %952 = vmatmul.bf16.gmra.mxu0 %v824
    %v953 = vpop.f32.mrf.mxu0
    %v954 = vadd.f32 %v869, %v953
    %v955 = vpop.f32.mrf.mxu0
    %v956 = vadd.f32 %v869, %v955
    %957 = vmatmul.bf16.gmra.mxu0 %v825
    %v958 = vpop.f32.mrf.mxu0
    %v959 = vadd.f32 %v869, %v958
    %v960 = vpop.f32.mrf.mxu0
    %v961 = vadd.f32 %v869, %v960
    %962 = vmatmul.bf16.gmra.mxu0 %v826
    %v963 = vpop.f32.mrf.mxu0
    %v964 = vadd.f32 %v869, %v963
    %v965 = vpop.f32.mrf.mxu0
    %v966 = vadd.f32 %v869, %v965
    %967 = vmatmul.bf16.gmra.mxu0 %v827
    %v968 = vpop.f32.mrf.mxu0
    %v969 = vadd.f32 %v869, %v968
    %v970 = vpop.f32.mrf.mxu0
    %v971 = vadd.f32 %v869, %v970
    %972 = vmatmul.bf16.gmra.mxu0 %v828
    %v973 = vpop.f32.mrf.mxu0
    %v974 = vadd.f32 %v869, %v973
    %v975 = vpop.f32.mrf.mxu0
    %v976 = vadd.f32 %v869, %v975
    %977 = vmatmul.bf16.gmra.mxu0 %v829
    %v978 = vpop.f32.mrf.mxu0
    %v979 = vadd.f32 %v869, %v978
    %v980 = vpop.f32.mrf.mxu0
    %v981 = vadd.f32 %v869, %v980
    %982 = vmatmul.bf16.gmra.mxu0 %v830
    %v983 = vpop.f32.mrf.mxu0
    %v984 = vadd.f32 %v869, %v983
    %v985 = vpop.f32.mrf.mxu0
    %v986 = vadd.f32 %v869, %v985
    %987 = vmatmul.bf16.gmra.mxu0 %v831
    %v988 = vpop.f32.mrf.mxu0
    %v989 = vadd.f32 %v869, %v988
    %v990 = vpop.f32.mrf.mxu0
    %v991 = vadd.f32 %v869, %v990
    %992 = vmatmul.bf16.gmra.mxu0 %v832
    %v993 = vpop.f32.mrf.mxu0
    %v994 = vadd.f32 %v869, %v993
    %v995 = vpop.f32.mrf.mxu0
    %v996 = vadd.f32 %v869, %v995
    %997 = vmatmul.bf16.gmra.mxu0 %v833
    %v998 = vpop.f32.mrf.mxu0
    %v999 = vadd.f32 %v869, %v998
    %v1000 = vpop.f32.mrf.mxu0
    %v1001 = vadd.f32 %v869, %v1000
    %1002 = vmatmul.bf16.gmra.mxu0 %v834
    %v1003 = vpop.f32.mrf.mxu0
    %v1004 = vadd.f32 %v869, %v1003
    %v1005 = vpop.f32.mrf.mxu0
    %v1006 = vadd.f32 %v869, %v1005
    %1007 = vmatmul.bf16.gmra.mxu0 %v835
    %v1008 = vpop.f32.mrf.mxu0
    %v1009 = vadd.f32 %v869, %v1008
    %v1010 = vpop.f32.mrf.mxu0
    %v1011 = vadd.f32 %v869, %v1010
    %1012 = vmatmul.bf16.gmra.mxu0 %v836
    %v1013 = vpop.f32.mrf.mxu0
    %v1014 = vadd.f32 %v869, %v1013
    %v1015 = vpop.f32.mrf.mxu0
    %v1016 = vadd.f32 %v869, %v1015
    %1017 = vmatmul.bf16.gmra.mxu0 %v837
    %v1018 = vpop.f32.mrf.mxu0
    %v1019 = vadd.f32 %v869, %v1018
    %v1020 = vpop.f32.mrf.mxu0
    %v1021 = vadd.f32 %v869, %v1020
    %1022 = vmatmul.bf16.gmra.mxu0 %v838
    %v1023 = vpop.f32.mrf.mxu0
    %v1024 = vadd.f32 %v869, %v1023
    %v1025 = vpop.f32.mrf.mxu0
    %v1026 = vadd.f32 %v869, %v1025
    %1027 = vmatmul.bf16.gmra.mxu0 %v839
    %v1028 = vpop.f32.mrf.mxu0
    %v1029 = vadd.f32 %v869, %v1028
    %v1030 = vpop.f32.mrf.mxu0
    %v1031 = vadd.f32 %v869, %v1030
    %1032 = vmatmul.bf16.gmra.mxu0 %v840
    %v1033 = vpop.f32.mrf.mxu0
    %v1034 = vadd.f32 %v869, %v1033
    %v1035 = vpop.f32.mrf.mxu0
    %v1036 = vadd.f32 %v869, %v1035
    %1037 = vmatmul.bf16.gmra.mxu0 %v841
    %v1038 = vpop.f32.mrf.mxu0
    %v1039 = vadd.f32 %v869, %v1038
    %v1040 = vpop.f32.mrf.mxu0
    %v1041 = vadd.f32 %v869, %v1040
    %1042 = vmatmul.bf16.gmra.mxu0 %v842
    %v1043 = vpop.f32.mrf.mxu0
    %v1044 = vadd.f32 %v869, %v1043
    %v1045 = vpop.f32.mrf.mxu0
    %v1046 = vadd.f32 %v869, %v1045
    %1047 = vmatmul.bf16.gmra.mxu0 %v843
    %v1048 = vpop.f32.mrf.mxu0
    %v1049 = vadd.f32 %v869, %v1048
    %v1050 = vpop.f32.mrf.mxu0
    %v1051 = vadd.f32 %v869, %v1050
    %1052 = vmatmul.bf16.gmra.mxu0 %v844
    %v1053 = vpop.f32.mrf.mxu0
    %v1054 = vadd.f32 %v869, %v1053
    %v1055 = vpop.f32.mrf.mxu0
    %v1056 = vadd.f32 %v869, %v1055
    %1057 = vmatmul.bf16.gmra.mxu0 %v845
    %v1058 = vpop.f32.mrf.mxu0
    %v1059 = vadd.f32 %v869, %v1058
    %v1060 = vpop.f32.mrf.mxu0
    %v1061 = vadd.f32 %v869, %v1060
    %1062 = vmatmul.bf16.gmra.mxu0 %v846
    %v1063 = vpop.f32.mrf.mxu0
    %v1064 = vadd.f32 %v869, %v1063
    %v1065 = vpop.f32.mrf.mxu0
    %v1066 = vadd.f32 %v869, %v1065
    %1067 = vmatmul.bf16.gmra.mxu0 %v847
    %v1068 = vpop.f32.mrf.mxu0
    %v1069 = vadd.f32 %v869, %v1068
    %v1070 = vpop.f32.mrf.mxu0
    %v1071 = vadd.f32 %v869, %v1070
    %1072 = vmatmul.bf16.gmra.mxu0 %v848
    %v1073 = vpop.f32.mrf.mxu0
    %v1074 = vadd.f32 %v869, %v1073
    %v1075 = vpop.f32.mrf.mxu0
    %v1076 = vadd.f32 %v869, %v1075
    %1077 = vmatmul.bf16.gmra.mxu0 %v849
    %v1078 = vpop.f32.mrf.mxu0
    %v1079 = vadd.f32 %v869, %v1078
    %v1080 = vpop.f32.mrf.mxu0
    %v1081 = vadd.f32 %v869, %v1080
    %1082 = vmatmul.bf16.gmra.mxu0 %v850
    %v1083 = vpop.f32.mrf.mxu0
    %v1084 = vadd.f32 %v869, %v1083
    %v1085 = vpop.f32.mrf.mxu0
    %v1086 = vadd.f32 %v869, %v1085
    %1087 = vdwg.mxu0
    %1088 = vst [vmem:[#allocation10] sm:$0xff] %v427
    %1089 = vst [vmem:[#allocation10 + $0x8] sm:$0xff] %v429
    %1090 = vst [vmem:[#allocation10 + $0x10] sm:$0xff] %v432
    %1091 = vst [vmem:[#allocation10 + $0x18] sm:$0xff] %v434
    %1092 = vst [vmem:[#allocation10 + $0x20] sm:$0xff] %v437
    %1093 = vst [vmem:[#allocation10 + $0x28] sm:$0xff] %v439
    %1094 = vst [vmem:[#allocation10 + $0x30] sm:$0xff] %v442
    %1095 = vst [vmem:[#allocation10 + $0x38] sm:$0xff] %v444
    %1096 = vst [vmem:[#allocation10 + $0x40] sm:$0xff] %v447
    %1097 = vst [vmem:[#allocation10 + $0x48] sm:$0xff] %v449
    %1098 = vst [vmem:[#allocation10 + $0x50] sm:$0xff] %v452
    %1099 = vst [vmem:[#allocation10 + $0x58] sm:$0xff] %v454
    %1100 = vst [vmem:[#allocation10 + $0x60] sm:$0xff] %v457
    %1101 = vst [vmem:[#allocation10 + $0x68] sm:$0xff] %v459
    %1102 = vst [vmem:[#allocation10 + $0x70] sm:$0xff] %v462
    %1103 = vst [vmem:[#allocation10 + $0x78] sm:$0xff] %v464
    %1104 = vst [vmem:[#allocation10 + $0x80] sm:$0xff] %v467
    %1105 = vst [vmem:[#allocation10 + $0x88] sm:$0xff] %v469
    %1106 = vst [vmem:[#allocation10 + $0x90] sm:$0xff] %v472
    %1107 = vst [vmem:[#allocation10 + $0x98] sm:$0xff] %v474
    %1108 = vst [vmem:[#allocation10 + $0xa0] sm:$0xff] %v477
    %1109 = vst [vmem:[#allocation10 + $0xa8] sm:$0xff] %v479
    %1110 = vst [vmem:[#allocation10 + $0xb0] sm:$0xff] %v482
    %1111 = vst [vmem:[#allocation10 + $0xb8] sm:$0xff] %v484
    %1112 = vst [vmem:[#allocation10 + $0xc0] sm:$0xff] %v487
    %1113 = vst [vmem:[#allocation10 + $0xc8] sm:$0xff] %v489
    %1114 = vst [vmem:[#allocation10 + $0xd0] sm:$0xff] %v492
    %1115 = vst [vmem:[#allocation10 + $0xd8] sm:$0xff] %v494
    %1116 = vst [vmem:[#allocation10 + $0xe0] sm:$0xff] %v497
    %1117 = vst [vmem:[#allocation10 + $0xe8] sm:$0xff] %v499
    %1118 = vst [vmem:[#allocation10 + $0xf0] sm:$0xff] %v502
    %1119 = vst [vmem:[#allocation10 + $0xf8] sm:$0xff] %v504
    %1120 = vst [vmem:[#allocation10 + $0x100] sm:$0xff] %v507
    %1121 = vst [vmem:[#allocation10 + $0x108] sm:$0xff] %v509
    %1122 = vst [vmem:[#allocation10 + $0x110] sm:$0xff] %v512
    %1123 = vst [vmem:[#allocation10 + $0x118] sm:$0xff] %v514
    %1124 = vst [vmem:[#allocation10 + $0x120] sm:$0xff] %v517
    %1125 = vst [vmem:[#allocation10 + $0x128] sm:$0xff] %v519
    %1126 = vst [vmem:[#allocation10 + $0x130] sm:$0xff] %v522
    %1127 = vst [vmem:[#allocation10 + $0x138] sm:$0xff] %v524
    %1128 = vst [vmem:[#allocation10 + $0x140] sm:$0xff] %v527
    %1129 = vst [vmem:[#allocation10 + $0x148] sm:$0xff] %v529
    %1130 = vst [vmem:[#allocation10 + $0x150] sm:$0xff] %v532
    %1131 = vst [vmem:[#allocation10 + $0x158] sm:$0xff] %v534
    %1132 = vst [vmem:[#allocation10 + $0x160] sm:$0xff] %v537
    %1133 = vst [vmem:[#allocation10 + $0x168] sm:$0xff] %v539
    %1134 = vst [vmem:[#allocation10 + $0x170] sm:$0xff] %v542
    %1135 = vst [vmem:[#allocation10 + $0x178] sm:$0xff] %v544
    %1136 = vst [vmem:[#allocation10 + $0x180] sm:$0xff] %v547
    %1137 = vst [vmem:[#allocation10 + $0x188] sm:$0xff] %v549
    %1138 = vst [vmem:[#allocation10 + $0x190] sm:$0xff] %v552
    %1139 = vst [vmem:[#allocation10 + $0x198] sm:$0xff] %v554
    %1140 = vst [vmem:[#allocation10 + $0x1a0] sm:$0xff] %v557
    %1141 = vst [vmem:[#allocation10 + $0x1a8] sm:$0xff] %v559
    %1142 = vst [vmem:[#allocation10 + $0x1b0] sm:$0xff] %v562
    %1143 = vst [vmem:[#allocation10 + $0x1b8] sm:$0xff] %v564
    %1144 = vst [vmem:[#allocation10 + $0x1c0] sm:$0xff] %v567
    %1145 = vst [vmem:[#allocation10 + $0x1c8] sm:$0xff] %v569
    %1146 = vst [vmem:[#allocation10 + $0x1d0] sm:$0xff] %v572
    %1147 = vst [vmem:[#allocation10 + $0x1d8] sm:$0xff] %v574
    %1148 = vst [vmem:[#allocation10 + $0x1e0] sm:$0xff] %v577
    %1149 = vst [vmem:[#allocation10 + $0x1e8] sm:$0xff] %v579
    %1150 = vst [vmem:[#allocation10 + $0x1f0] sm:$0xff] %v582
    %1151 = vst [vmem:[#allocation10 + $0x1f8] sm:$0xff] %v584
    %s1152 = smul.u32 0, 512
    %v1153 = vlaneseq
    %v1154 = vshrl.u32 %v1153, 7
    %v1155 = vadd.s32 %v1154, 8
    %v1156 = vadd.s32 %v1154, 16
    %v1157 = vadd.s32 %v1154, 24
    %v1158 = vadd.s32 %v1154, 32
    %v1159 = vadd.s32 %v1154, 40
    %v1160 = vadd.s32 %v1154, 48
    %v1161 = vadd.s32 %v1154, 56
    %v1162 = vadd.s32 %v1154, 64
    %v1163 = vadd.s32 %v1154, 72
    %v1164 = vadd.s32 %v1154, 80
    %v1165 = vadd.s32 %v1154, 88
    %v1166 = vadd.s32 %v1154, 96
    %v1167 = vadd.s32 %v1154, 104
    %v1168 = vadd.s32 %v1154, 112
    %v1169 = vadd.s32 %v1154, 120
    %v1170 = vadd.s32 %v1154, 128
    %v1171 = vadd.s32 %v1154, 136
    %v1172 = vadd.s32 %v1154, 144
    %v1173 = vadd.s32 %v1154, 152
    %v1174 = vadd.s32 %v1154, 160
    %v1175 = vadd.s32 %v1154, 168
    %v1176 = vadd.s32 %v1154, 176
    %v1177 = vadd.s32 %v1154, 184
    %v1178 = vadd.s32 %v1154, 192
    %v1179 = vadd.s32 %v1154, 200
    %v1180 = vadd.s32 %v1154, 208
    %v1181 = vadd.s32 %v1154, 216
    %v1182 = vadd.s32 %v1154, 224
    %v1183 = vadd.s32 %v1154, 232
    %v1184 = vadd.s32 %v1154, 240
    %v1185 = vadd.s32 %v1154, 248
    %v1186 = vadd.s32 %v1154, 256
    %v1187 = vadd.s32 %v1154, 264
    %v1188 = vadd.s32 %v1154, 272
    %v1189 = vadd.s32 %v1154, 280
    %v1190 = vadd.s32 %v1154, 288
    %v1191 = vadd.s32 %v1154, 296
    %v1192 = vadd.s32 %v1154, 304
    %v1193 = vadd.s32 %v1154, 312
    %v1194 = vadd.s32 %v1154, 320
    %v1195 = vadd.s32 %v1154, 328
    %v1196 = vadd.s32 %v1154, 336
    %v1197 = vadd.s32 %v1154, 344
    %v1198 = vadd.s32 %v1154, 352
    %v1199 = vadd.s32 %v1154, 360
    %v1200 = vadd.s32 %v1154, 368
    %v1201 = vadd.s32 %v1154, 376
    %v1202 = vadd.s32 %v1154, 384
    %v1203 = vadd.s32 %v1154, 392
    %v1204 = vadd.s32 %v1154, 400
    %v1205 = vadd.s32 %v1154, 408
    %v1206 = vadd.s32 %v1154, 416
    %v1207 = vadd.s32 %v1154, 424
    %v1208 = vadd.s32 %v1154, 432
    %v1209 = vadd.s32 %v1154, 440
    %v1210 = vadd.s32 %v1154, 448
    %v1211 = vadd.s32 %v1154, 456
    %v1212 = vadd.s32 %v1154, 464
    %v1213 = vadd.s32 %v1154, 472
    %v1214 = vadd.s32 %v1154, 480
    %v1215 = vadd.s32 %v1154, 488
    %v1216 = vadd.s32 %v1154, 496
    %v1217 = vadd.s32 %v1154, 504
    %v1218 = vstv %s1152
    %v1219 = vadd.s32 %v1218, %v1154
    %v1220 = vadd.s32 %v1218, %v1155
    %v1221 = vadd.s32 %v1218, %v1156
    %v1222 = vadd.s32 %v1218, %v1157
    %v1223 = vadd.s32 %v1218, %v1158
    %v1224 = vadd.s32 %v1218, %v1159
    %v1225 = vadd.s32 %v1218, %v1160
    %v1226 = vadd.s32 %v1218, %v1161
    %v1227 = vadd.s32 %v1218, %v1162
    %v1228 = vadd.s32 %v1218, %v1163
    %v1229 = vadd.s32 %v1218, %v1164
    %v1230 = vadd.s32 %v1218, %v1165
    %v1231 = vadd.s32 %v1218, %v1166
    %v1232 = vadd.s32 %v1218, %v1167
    %v1233 = vadd.s32 %v1218, %v1168
    %v1234 = vadd.s32 %v1218, %v1169
    %v1235 = vadd.s32 %v1218, %v1170
    %v1236 = vadd.s32 %v1218, %v1171
    %v1237 = vadd.s32 %v1218, %v1172
    %v1238 = vadd.s32 %v1218, %v1173
    %v1239 = vadd.s32 %v1218, %v1174
    %v1240 = vadd.s32 %v1218, %v1175
    %v1241 = vadd.s32 %v1218, %v1176
    %v1242 = vadd.s32 %v1218, %v1177
    %v1243 = vadd.s32 %v1218, %v1178
    %v1244 = vadd.s32 %v1218, %v1179
    %v1245 = vadd.s32 %v1218, %v1180
    %v1246 = vadd.s32 %v1218, %v1181
    %v1247 = vadd.s32 %v1218, %v1182
    %v1248 = vadd.s32 %v1218, %v1183
    %v1249 = vadd.s32 %v1218, %v1184
    %v1250 = vadd.s32 %v1218, %v1185
    %v1251 = vadd.s32 %v1218, %v1186
    %v1252 = vadd.s32 %v1218, %v1187
    %v1253 = vadd.s32 %v1218, %v1188
    %v1254 = vadd.s32 %v1218, %v1189
    %v1255 = vadd.s32 %v1218, %v1190
    %v1256 = vadd.s32 %v1218, %v1191
    %v1257 = vadd.s32 %v1218, %v1192
    %v1258 = vadd.s32 %v1218, %v1193
    %v1259 = vadd.s32 %v1218, %v1194
    %v1260 = vadd.s32 %v1218, %v1195
    %v1261 = vadd.s32 %v1218, %v1196
    %v1262 = vadd.s32 %v1218, %v1197
    %v1263 = vadd.s32 %v1218, %v1198
    %v1264 = vadd.s32 %v1218, %v1199
    %v1265 = vadd.s32 %v1218, %v1200
    %v1266 = vadd.s32 %v1218, %v1201
    %v1267 = vadd.s32 %v1218, %v1202
    %v1268 = vadd.s32 %v1218, %v1203
    %v1269 = vadd.s32 %v1218, %v1204
    %v1270 = vadd.s32 %v1218, %v1205
    %v1271 = vadd.s32 %v1218, %v1206
    %v1272 = vadd.s32 %v1218, %v1207
    %v1273 = vadd.s32 %v1218, %v1208
    %v1274 = vadd.s32 %v1218, %v1209
    %v1275 = vadd.s32 %v1218, %v1210
    %v1276 = vadd.s32 %v1218, %v1211
    %v1277 = vadd.s32 %v1218, %v1212
    %v1278 = vadd.s32 %v1218, %v1213
    %v1279 = vadd.s32 %v1218, %v1214
    %v1280 = vadd.s32 %v1218, %v1215
    %v1281 = vadd.s32 %v1218, %v1216
    %v1282 = vadd.s32 %v1218, %v1217
    %vm1283 = vcmp.lt.s32.totalorder %v1219, 512
    %vm1284 = vcmp.lt.s32.totalorder %v1220, 512
    %vm1285 = vcmp.lt.s32.totalorder %v1221, 512
    %vm1286 = vcmp.lt.s32.totalorder %v1222, 512
    %vm1287 = vcmp.lt.s32.totalorder %v1223, 512
    %vm1288 = vcmp.lt.s32.totalorder %v1224, 512
    %vm1289 = vcmp.lt.s32.totalorder %v1225, 512
    %vm1290 = vcmp.lt.s32.totalorder %v1226, 512
    %vm1291 = vcmp.lt.s32.totalorder %v1227, 512
    %vm1292 = vcmp.lt.s32.totalorder %v1228, 512
    %vm1293 = vcmp.lt.s32.totalorder %v1229, 512
    %vm1294 = vcmp.lt.s32.totalorder %v1230, 512
    %vm1295 = vcmp.lt.s32.totalorder %v1231, 512
    %vm1296 = vcmp.lt.s32.totalorder %v1232, 512
    %vm1297 = vcmp.lt.s32.totalorder %v1233, 512
    %vm1298 = vcmp.lt.s32.totalorder %v1234, 512
    %vm1299 = vcmp.lt.s32.totalorder %v1235, 512
    %vm1300 = vcmp.lt.s32.totalorder %v1236, 512
    %vm1301 = vcmp.lt.s32.totalorder %v1237, 512
    %vm1302 = vcmp.lt.s32.totalorder %v1238, 512
    %vm1303 = vcmp.lt.s32.totalorder %v1239, 512
    %vm1304 = vcmp.lt.s32.totalorder %v1240, 512
    %vm1305 = vcmp.lt.s32.totalorder %v1241, 512
    %vm1306 = vcmp.lt.s32.totalorder %v1242, 512
    %vm1307 = vcmp.lt.s32.totalorder %v1243, 512
    %vm1308 = vcmp.lt.s32.totalorder %v1244, 512
    %vm1309 = vcmp.lt.s32.totalorder %v1245, 512
    %vm1310 = vcmp.lt.s32.totalorder %v1246, 512
    %vm1311 = vcmp.lt.s32.totalorder %v1247, 512
    %vm1312 = vcmp.lt.s32.totalorder %v1248, 512
    %vm1313 = vcmp.lt.s32.totalorder %v1249, 512
    %vm1314 = vcmp.lt.s32.totalorder %v1250, 512
    %vm1315 = vcmp.lt.s32.totalorder %v1251, 512
    %vm1316 = vcmp.lt.s32.totalorder %v1252, 512
    %vm1317 = vcmp.lt.s32.totalorder %v1253, 512
    %vm1318 = vcmp.lt.s32.totalorder %v1254, 512
    %vm1319 = vcmp.lt.s32.totalorder %v1255, 512
    %vm1320 = vcmp.lt.s32.totalorder %v1256, 512
    %vm1321 = vcmp.lt.s32.totalorder %v1257, 512
    %vm1322 = vcmp.lt.s32.totalorder %v1258, 512
    %vm1323 = vcmp.lt.s32.totalorder %v1259, 512
    %vm1324 = vcmp.lt.s32.totalorder %v1260, 512
    %vm1325 = vcmp.lt.s32.totalorder %v1261, 512
    %vm1326 = vcmp.lt.s32.totalorder %v1262, 512
    %vm1327 = vcmp.lt.s32.totalorder %v1263, 512
    %vm1328 = vcmp.lt.s32.totalorder %v1264, 512
    %vm1329 = vcmp.lt.s32.totalorder %v1265, 512
    %vm1330 = vcmp.lt.s32.totalorder %v1266, 512
    %vm1331 = vcmp.lt.s32.totalorder %v1267, 512
    %vm1332 = vcmp.lt.s32.totalorder %v1268, 512
    %vm1333 = vcmp.lt.s32.totalorder %v1269, 512
    %vm1334 = vcmp.lt.s32.totalorder %v1270, 512
    %vm1335 = vcmp.lt.s32.totalorder %v1271, 512
    %vm1336 = vcmp.lt.s32.totalorder %v1272, 512
    %vm1337 = vcmp.lt.s32.totalorder %v1273, 512
    %vm1338 = vcmp.lt.s32.totalorder %v1274, 512
    %vm1339 = vcmp.lt.s32.totalorder %v1275, 512
    %vm1340 = vcmp.lt.s32.totalorder %v1276, 512
    %vm1341 = vcmp.lt.s32.totalorder %v1277, 512
    %vm1342 = vcmp.lt.s32.totalorder %v1278, 512
    %vm1343 = vcmp.lt.s32.totalorder %v1279, 512
    %vm1344 = vcmp.lt.s32.totalorder %v1280, 512
    %vm1345 = vcmp.lt.s32.totalorder %v1281, 512
    %vm1346 = vcmp.lt.s32.totalorder %v1282, 512
    %v1347 = vsel %vm1283, 1, 0
    %v1348 = vsel %vm1284, 1, 0
    %v1349 = vsel %vm1285, 1, 0
    %v1350 = vsel %vm1286, 1, 0
    %v1351 = vsel %vm1287, 1, 0
    %v1352 = vsel %vm1288, 1, 0
    %v1353 = vsel %vm1289, 1, 0
    %v1354 = vsel %vm1290, 1, 0
    %v1355 = vsel %vm1291, 1, 0
    %v1356 = vsel %vm1292, 1, 0
    %v1357 = vsel %vm1293, 1, 0
    %v1358 = vsel %vm1294, 1, 0
    %v1359 = vsel %vm1295, 1, 0
    %v1360 = vsel %vm1296, 1, 0
    %v1361 = vsel %vm1297, 1, 0
    %v1362 = vsel %vm1298, 1, 0
    %v1363 = vsel %vm1299, 1, 0
    %v1364 = vsel %vm1300, 1, 0
    %v1365 = vsel %vm1301, 1, 0
    %v1366 = vsel %vm1302, 1, 0
    %v1367 = vsel %vm1303, 1, 0
    %v1368 = vsel %vm1304, 1, 0
    %v1369 = vsel %vm1305, 1, 0
    %v1370 = vsel %vm1306, 1, 0
    %v1371 = vsel %vm1307, 1, 0
    %v1372 = vsel %vm1308, 1, 0
    %v1373 = vsel %vm1309, 1, 0
    %v1374 = vsel %vm1310, 1, 0
    %v1375 = vsel %vm1311, 1, 0
    %v1376 = vsel %vm1312, 1, 0
    %v1377 = vsel %vm1313, 1, 0
    %v1378 = vsel %vm1314, 1, 0
    %v1379 = vsel %vm1315, 1, 0
    %v1380 = vsel %vm1316, 1, 0
    %v1381 = vsel %vm1317, 1, 0
    %v1382 = vsel %vm1318, 1, 0
    %v1383 = vsel %vm1319, 1, 0
    %v1384 = vsel %vm1320, 1, 0
    %v1385 = vsel %vm1321, 1, 0
    %v1386 = vsel %vm1322, 1, 0
    %v1387 = vsel %vm1323, 1, 0
    %v1388 = vsel %vm1324, 1, 0
    %v1389 = vsel %vm1325, 1, 0
    %v1390 = vsel %vm1326, 1, 0
    %v1391 = vsel %vm1327, 1, 0
    %v1392 = vsel %vm1328, 1, 0
    %v1393 = vsel %vm1329, 1, 0
    %v1394 = vsel %vm1330, 1, 0
    %v1395 = vsel %vm1331, 1, 0
    %v1396 = vsel %vm1332, 1, 0
    %v1397 = vsel %vm1333, 1, 0
    %v1398 = vsel %vm1334, 1, 0
    %v1399 = vsel %vm1335, 1, 0
    %v1400 = vsel %vm1336, 1, 0
    %v1401 = vsel %vm1337, 1, 0
    %v1402 = vsel %vm1338, 1, 0
    %v1403 = vsel %vm1339, 1, 0
    %v1404 = vsel %vm1340, 1, 0
    %v1405 = vsel %vm1341, 1, 0
    %v1406 = vsel %vm1342, 1, 0
    %v1407 = vsel %vm1343, 1, 0
    %v1408 = vsel %vm1344, 1, 0
    %v1409 = vsel %vm1345, 1, 0
    %v1410 = vsel %vm1346, 1, 0
    %v1411 = vcvt.s32.f32 %v1347
    %v1412 = vcvt.s32.f32 %v1348
    %v1413 = vcvt.s32.f32 %v1349
    %v1414 = vcvt.s32.f32 %v1350
    %v1415 = vcvt.s32.f32 %v1351
    %v1416 = vcvt.s32.f32 %v1352
    %v1417 = vcvt.s32.f32 %v1353
    %v1418 = vcvt.s32.f32 %v1354
    %v1419 = vcvt.s32.f32 %v1355
    %v1420 = vcvt.s32.f32 %v1356
    %v1421 = vcvt.s32.f32 %v1357
    %v1422 = vcvt.s32.f32 %v1358
    %v1423 = vcvt.s32.f32 %v1359
    %v1424 = vcvt.s32.f32 %v1360
    %v1425 = vcvt.s32.f32 %v1361
    %v1426 = vcvt.s32.f32 %v1362
    %v1427 = vcvt.s32.f32 %v1363
    %v1428 = vcvt.s32.f32 %v1364
    %v1429 = vcvt.s32.f32 %v1365
    %v1430 = vcvt.s32.f32 %v1366
    %v1431 = vcvt.s32.f32 %v1367
    %v1432 = vcvt.s32.f32 %v1368
    %v1433 = vcvt.s32.f32 %v1369
    %v1434 = vcvt.s32.f32 %v1370
    %v1435 = vcvt.s32.f32 %v1371
    %v1436 = vcvt.s32.f32 %v1372
    %v1437 = vcvt.s32.f32 %v1373
    %v1438 = vcvt.s32.f32 %v1374
    %v1439 = vcvt.s32.f32 %v1375
    %v1440 = vcvt.s32.f32 %v1376
    %v1441 = vcvt.s32.f32 %v1377
    %v1442 = vcvt.s32.f32 %v1378
    %v1443 = vcvt.s32.f32 %v1379
    %v1444 = vcvt.s32.f32 %v1380
    %v1445 = vcvt.s32.f32 %v1381
    %v1446 = vcvt.s32.f32 %v1382
    %v1447 = vcvt.s32.f32 %v1383
    %v1448 = vcvt.s32.f32 %v1384
    %v1449 = vcvt.s32.f32 %v1385
    %v1450 = vcvt.s32.f32 %v1386
    %v1451 = vcvt.s32.f32 %v1387
    %v1452 = vcvt.s32.f32 %v1388
    %v1453 = vcvt.s32.f32 %v1389
    %v1454 = vcvt.s32.f32 %v1390
    %v1455 = vcvt.s32.f32 %v1391
    %v1456 = vcvt.s32.f32 %v1392
    %v1457 = vcvt.s32.f32 %v1393
    %v1458 = vcvt.s32.f32 %v1394
    %v1459 = vcvt.s32.f32 %v1395
    %v1460 = vcvt.s32.f32 %v1396
    %v1461 = vcvt.s32.f32 %v1397
    %v1462 = vcvt.s32.f32 %v1398
    %v1463 = vcvt.s32.f32 %v1399
    %v1464 = vcvt.s32.f32 %v1400
    %v1465 = vcvt.s32.f32 %v1401
    %v1466 = vcvt.s32.f32 %v1402
    %v1467 = vcvt.s32.f32 %v1403
    %v1468 = vcvt.s32.f32 %v1404
    %v1469 = vcvt.s32.f32 %v1405
    %v1470 = vcvt.s32.f32 %v1406
    %v1471 = vcvt.s32.f32 %v1407
    %v1472 = vcvt.s32.f32 %v1408
    %v1473 = vcvt.s32.f32 %v1409
    %v1474 = vcvt.s32.f32 %v1410
    %v1475 = vmul.f32 %v427, %v1411
    %v1476 = vmul.f32 %v429, %v1412
    %v1477 = vmul.f32 %v432, %v1413
    %v1478 = vmul.f32 %v434, %v1414
    %v1479 = vmul.f32 %v437, %v1415
    %v1480 = vmul.f32 %v439, %v1416
    %v1481 = vmul.f32 %v442, %v1417
    %v1482 = vmul.f32 %v444, %v1418
    %v1483 = vmul.f32 %v447, %v1419
    %v1484 = vmul.f32 %v449, %v1420
    %v1485 = vmul.f32 %v452, %v1421
    %v1486 = vmul.f32 %v454, %v1422
    %v1487 = vmul.f32 %v457, %v1423
    %v1488 = vmul.f32 %v459, %v1424
    %v1489 = vmul.f32 %v462, %v1425
    %v1490 = vmul.f32 %v464, %v1426
    %v1491 = vmul.f32 %v467, %v1427
    %v1492 = vmul.f32 %v469, %v1428
    %v1493 = vmul.f32 %v472, %v1429
    %v1494 = vmul.f32 %v474, %v1430
    %v1495 = vmul.f32 %v477, %v1431
    %v1496 = vmul.f32 %v479, %v1432
    %v1497 = vmul.f32 %v482, %v1433
    %v1498 = vmul.f32 %v484, %v1434
    %v1499 = vmul.f32 %v487, %v1435
    %v1500 = vmul.f32 %v489, %v1436
    %v1501 = vmul.f32 %v492, %v1437
    %v1502 = vmul.f32 %v494, %v1438
    %v1503 = vmul.f32 %v497, %v1439
    %v1504 = vmul.f32 %v499, %v1440
    %v1505 = vmul.f32 %v502, %v1441
    %v1506 = vmul.f32 %v504, %v1442
    %v1507 = vmul.f32 %v507, %v1443
    %v1508 = vmul.f32 %v509, %v1444
    %v1509 = vmul.f32 %v512, %v1445
    %v1510 = vmul.f32 %v514, %v1446
    %v1511 = vmul.f32 %v517, %v1447
    %v1512 = vmul.f32 %v519, %v1448
    %v1513 = vmul.f32 %v522, %v1449
    %v1514 = vmul.f32 %v524, %v1450
    %v1515 = vmul.f32 %v527, %v1451
    %v1516 = vmul.f32 %v529, %v1452
    %v1517 = vmul.f32 %v532, %v1453
    %v1518 = vmul.f32 %v534, %v1454
    %v1519 = vmul.f32 %v537, %v1455
    %v1520 = vmul.f32 %v539, %v1456
    %v1521 = vmul.f32 %v542, %v1457
    %v1522 = vmul.f32 %v544, %v1458
    %v1523 = vmul.f32 %v547, %v1459
    %v1524 = vmul.f32 %v549, %v1460
    %v1525 = vmul.f32 %v552, %v1461
    %v1526 = vmul.f32 %v554, %v1462
    %v1527 = vmul.f32 %v557, %v1463
    %v1528 = vmul.f32 %v559, %v1464
    %v1529 = vmul.f32 %v562, %v1465
    %v1530 = vmul.f32 %v564, %v1466
    %v1531 = vmul.f32 %v567, %v1467
    %v1532 = vmul.f32 %v569, %v1468
    %v1533 = vmul.f32 %v572, %v1469
    %v1534 = vmul.f32 %v574, %v1470
    %v1535 = vmul.f32 %v577, %v1471
    %v1536 = vmul.f32 %v579, %v1472
    %v1537 = vmul.f32 %v582, %v1473
    %v1538 = vmul.f32 %v584, %v1474
    %v1539 = vsub.f32 %v929, %v427
    %v1540 = vsub.f32 %v931, %v429
    %v1541 = vsub.f32 %v934, %v432
    %v1542 = vsub.f32 %v936, %v434
    %v1543 = vsub.f32 %v939, %v437
    %v1544 = vsub.f32 %v941, %v439
    %v1545 = vsub.f32 %v944, %v442
    %v1546 = vsub.f32 %v946, %v444
    %v1547 = vsub.f32 %v949, %v447
    %v1548 = vsub.f32 %v951, %v449
    %v1549 = vsub.f32 %v954, %v452
    %v1550 = vsub.f32 %v956, %v454
    %v1551 = vsub.f32 %v959, %v457
    %v1552 = vsub.f32 %v961, %v459
    %v1553 = vsub.f32 %v964, %v462
    %v1554 = vsub.f32 %v966, %v464
    %v1555 = vsub.f32 %v969, %v467
    %v1556 = vsub.f32 %v971, %v469
    %v1557 = vsub.f32 %v974, %v472
    %v1558 = vsub.f32 %v976, %v474
    %v1559 = vsub.f32 %v979, %v477
    %v1560 = vsub.f32 %v981, %v479
    %v1561 = vsub.f32 %v984, %v482
    %v1562 = vsub.f32 %v986, %v484
    %v1563 = vsub.f32 %v989, %v487
    %v1564 = vsub.f32 %v991, %v489
    %v1565 = vsub.f32 %v994, %v492
    %v1566 = vsub.f32 %v996, %v494
    %v1567 = vsub.f32 %v999, %v497
    %v1568 = vsub.f32 %v1001, %v499
    %v1569 = vsub.f32 %v1004, %v502
    %v1570 = vsub.f32 %v1006, %v504
    %v1571 = vsub.f32 %v1009, %v507
    %v1572 = vsub.f32 %v1011, %v509
    %v1573 = vsub.f32 %v1014, %v512
    %v1574 = vsub.f32 %v1016, %v514
    %v1575 = vsub.f32 %v1019, %v517
    %v1576 = vsub.f32 %v1021, %v519
    %v1577 = vsub.f32 %v1024, %v522
    %v1578 = vsub.f32 %v1026, %v524
    %v1579 = vsub.f32 %v1029, %v527
    %v1580 = vsub.f32 %v1031, %v529
    %v1581 = vsub.f32 %v1034, %v532
    %v1582 = vsub.f32 %v1036, %v534
    %v1583 = vsub.f32 %v1039, %v537
    %v1584 = vsub.f32 %v1041, %v539
    %v1585 = vsub.f32 %v1044, %v542
    %v1586 = vsub.f32 %v1046, %v544
    %v1587 = vsub.f32 %v1049, %v547
    %v1588 = vsub.f32 %v1051, %v549
    %v1589 = vsub.f32 %v1054, %v552
    %v1590 = vsub.f32 %v1056, %v554
    %v1591 = vsub.f32 %v1059, %v557
    %v1592 = vsub.f32 %v1061, %v559
    %v1593 = vsub.f32 %v1064, %v562
    %v1594 = vsub.f32 %v1066, %v564
    %v1595 = vsub.f32 %v1069, %v567
    %v1596 = vsub.f32 %v1071, %v569
    %v1597 = vsub.f32 %v1074, %v572
    %v1598 = vsub.f32 %v1076, %v574
    %v1599 = vsub.f32 %v1079, %v577
    %v1600 = vsub.f32 %v1081, %v579
    %v1601 = vsub.f32 %v1084, %v582
    %v1602 = vsub.f32 %v1086, %v584
    %v1603 = vmul.f32 %v1539, %v1411
    %v1604 = vmul.f32 %v1540, %v1412
    %v1605 = vmul.f32 %v1541, %v1413
    %v1606 = vmul.f32 %v1542, %v1414
    %v1607 = vmul.f32 %v1543, %v1415
    %v1608 = vmul.f32 %v1544, %v1416
    %v1609 = vmul.f32 %v1545, %v1417
    %v1610 = vmul.f32 %v1546, %v1418
    %v1611 = vmul.f32 %v1547, %v1419
    %v1612 = vmul.f32 %v1548, %v1420
    %v1613 = vmul.f32 %v1549, %v1421
    %v1614 = vmul.f32 %v1550, %v1422
    %v1615 = vmul.f32 %v1551, %v1423
    %v1616 = vmul.f32 %v1552, %v1424
    %v1617 = vmul.f32 %v1553, %v1425
    %v1618 = vmul.f32 %v1554, %v1426
    %v1619 = vmul.f32 %v1555, %v1427
    %v1620 = vmul.f32 %v1556, %v1428
    %v1621 = vmul.f32 %v1557, %v1429
    %v1622 = vmul.f32 %v1558, %v1430
    %v1623 = vmul.f32 %v1559, %v1431
    %v1624 = vmul.f32 %v1560, %v1432
    %v1625 = vmul.f32 %v1561, %v1433
    %v1626 = vmul.f32 %v1562, %v1434
    %v1627 = vmul.f32 %v1563, %v1435
    %v1628 = vmul.f32 %v1564, %v1436
    %v1629 = vmul.f32 %v1565, %v1437
    %v1630 = vmul.f32 %v1566, %v1438
    %v1631 = vmul.f32 %v1567, %v1439
    %v1632 = vmul.f32 %v1568, %v1440
    %v1633 = vmul.f32 %v1569, %v1441
    %v1634 = vmul.f32 %v1570, %v1442
    %v1635 = vmul.f32 %v1571, %v1443
    %v1636 = vmul.f32 %v1572, %v1444
    %v1637 = vmul.f32 %v1573, %v1445
    %v1638 = vmul.f32 %v1574, %v1446
    %v1639 = vmul.f32 %v1575, %v1447
    %v1640 = vmul.f32 %v1576, %v1448
    %v1641 = vmul.f32 %v1577, %v1449
    %v1642 = vmul.f32 %v1578, %v1450
    %v1643 = vmul.f32 %v1579, %v1451
    %v1644 = vmul.f32 %v1580, %v1452
    %v1645 = vmul.f32 %v1581, %v1453
    %v1646 = vmul.f32 %v1582, %v1454
    %v1647 = vmul.f32 %v1583, %v1455
    %v1648 = vmul.f32 %v1584, %v1456
    %v1649 = vmul.f32 %v1585, %v1457
    %v1650 = vmul.f32 %v1586, %v1458
    %v1651 = vmul.f32 %v1587, %v1459
    %v1652 = vmul.f32 %v1588, %v1460
    %v1653 = vmul.f32 %v1589, %v1461
    %v1654 = vmul.f32 %v1590, %v1462
    %v1655 = vmul.f32 %v1591, %v1463
    %v1656 = vmul.f32 %v1592, %v1464
    %v1657 = vmul.f32 %v1593, %v1465
    %v1658 = vmul.f32 %v1594, %v1466
    %v1659 = vmul.f32 %v1595, %v1467
    %v1660 = vmul.f32 %v1596, %v1468
    %v1661 = vmul.f32 %v1597, %v1469
    %v1662 = vmul.f32 %v1598, %v1470
    %v1663 = vmul.f32 %v1599, %v1471
    %v1664 = vmul.f32 %v1600, %v1472
    %v1665 = vmul.f32 %v1601, %v1473
    %v1666 = vmul.f32 %v1602, %v1474
    %v1667 = vadd.f32 %v1475, %v1476
    %v1668 = vadd.f32 %v1667, %v1477
    %v1669 = vadd.f32 %v1668, %v1478
    %v1670 = vadd.f32 %v1669, %v1479
    %v1671 = vadd.f32 %v1670, %v1480
    %v1672 = vadd.f32 %v1671, %v1481
    %v1673 = vadd.f32 %v1672, %v1482
    %v1674 = vadd.f32 %v1673, %v1483
    %v1675 = vadd.f32 %v1674, %v1484
    %v1676 = vadd.f32 %v1675, %v1485
    %v1677 = vadd.f32 %v1676, %v1486
    %v1678 = vadd.f32 %v1677, %v1487
    %v1679 = vadd.f32 %v1678, %v1488
    %v1680 = vadd.f32 %v1679, %v1489
    %v1681 = vadd.f32 %v1680, %v1490
    %v1682 = vadd.f32 %v1681, %v1491
    %v1683 = vadd.f32 %v1682, %v1492
    %v1684 = vadd.f32 %v1683, %v1493
    %v1685 = vadd.f32 %v1684, %v1494
    %v1686 = vadd.f32 %v1685, %v1495
    %v1687 = vadd.f32 %v1686, %v1496
    %v1688 = vadd.f32 %v1687, %v1497
    %v1689 = vadd.f32 %v1688, %v1498
    %v1690 = vadd.f32 %v1689, %v1499
    %v1691 = vadd.f32 %v1690, %v1500
    %v1692 = vadd.f32 %v1691, %v1501
    %v1693 = vadd.f32 %v1692, %v1502
    %v1694 = vadd.f32 %v1693, %v1503
    %v1695 = vadd.f32 %v1694, %v1504
    %v1696 = vadd.f32 %v1695, %v1505
    %v1697 = vadd.f32 %v1696, %v1506
    %v1698 = vadd.f32 %v1697, %v1507
    %v1699 = vadd.f32 %v1698, %v1508
    %v1700 = vadd.f32 %v1699, %v1509
    %v1701 = vadd.f32 %v1700, %v1510
    %v1702 = vadd.f32 %v1701, %v1511
    %v1703 = vadd.f32 %v1702, %v1512
    %v1704 = vadd.f32 %v1703, %v1513
    %v1705 = vadd.f32 %v1704, %v1514
    %v1706 = vadd.f32 %v1705, %v1515
    %v1707 = vadd.f32 %v1706, %v1516
    %v1708 = vadd.f32 %v1707, %v1517
    %v1709 = vadd.f32 %v1708, %v1518
    %v1710 = vadd.f32 %v1709, %v1519
    %v1711 = vadd.f32 %v1710, %v1520
    %v1712 = vadd.f32 %v1711, %v1521
    %v1713 = vadd.f32 %v1712, %v1522
    %v1714 = vadd.f32 %v1713, %v1523
    %v1715 = vadd.f32 %v1714, %v1524
    %v1716 = vadd.f32 %v1715, %v1525
    %v1717 = vadd.f32 %v1716, %v1526
    %v1718 = vadd.f32 %v1717, %v1527
    %v1719 = vadd.f32 %v1718, %v1528
    %v1720 = vadd.f32 %v1719, %v1529
    %v1721 = vadd.f32 %v1720, %v1530
    %v1722 = vadd.f32 %v1721, %v1531
    %v1723 = vadd.f32 %v1722, %v1532
    %v1724 = vadd.f32 %v1723, %v1533
    %v1725 = vadd.f32 %v1724, %v1534
    %v1726 = vadd.f32 %v1725, %v1535
    %v1727 = vadd.f32 %v1726, %v1536
    %v1728 = vadd.f32 %v1727, %v1537
    %v1729 = vadd.f32 %v1728, %v1538
    %1730 = vst [vmem:[#allocation11] sm:$0xff] %v1729
    %v1731 = vmul.f32 %v1475, %v427
    %v1732 = vmul.f32 %v1476, %v429
    %v1733 = vmul.f32 %v1477, %v432
    %v1734 = vmul.f32 %v1478, %v434
    %v1735 = vmul.f32 %v1479, %v437
    %v1736 = vmul.f32 %v1480, %v439
    %v1737 = vmul.f32 %v1481, %v442
    %v1738 = vmul.f32 %v1482, %v444
    %v1739 = vmul.f32 %v1483, %v447
    %v1740 = vmul.f32 %v1484, %v449
    %v1741 = vmul.f32 %v1485, %v452
    %v1742 = vmul.f32 %v1486, %v454
    %v1743 = vmul.f32 %v1487, %v457
    %v1744 = vmul.f32 %v1488, %v459
    %v1745 = vmul.f32 %v1489, %v462
    %v1746 = vmul.f32 %v1490, %v464
    %v1747 = vmul.f32 %v1491, %v467
    %v1748 = vmul.f32 %v1492, %v469
    %v1749 = vmul.f32 %v1493, %v472
    %v1750 = vmul.f32 %v1494, %v474
    %v1751 = vmul.f32 %v1495, %v477
    %v1752 = vmul.f32 %v1496, %v479
    %v1753 = vmul.f32 %v1497, %v482
    %v1754 = vmul.f32 %v1498, %v484
    %v1755 = vmul.f32 %v1499, %v487
    %v1756 = vmul.f32 %v1500, %v489
    %v1757 = vmul.f32 %v1501, %v492
    %v1758 = vmul.f32 %v1502, %v494
    %v1759 = vmul.f32 %v1503, %v497
    %v1760 = vmul.f32 %v1504, %v499
    %v1761 = vmul.f32 %v1505, %v502
    %v1762 = vmul.f32 %v1506, %v504
    %v1763 = vmul.f32 %v1507, %v507
    %v1764 = vmul.f32 %v1508, %v509
    %v1765 = vmul.f32 %v1509, %v512
    %v1766 = vmul.f32 %v1510, %v514
    %v1767 = vmul.f32 %v1511, %v517
    %v1768 = vmul.f32 %v1512, %v519
    %v1769 = vmul.f32 %v1513, %v522
    %v1770 = vmul.f32 %v1514, %v524
    %v1771 = vmul.f32 %v1515, %v527
    %v1772 = vmul.f32 %v1516, %v529
    %v1773 = vmul.f32 %v1517, %v532
    %v1774 = vmul.f32 %v1518, %v534
    %v1775 = vmul.f32 %v1519, %v537
    %v1776 = vmul.f32 %v1520, %v539
    %v1777 = vmul.f32 %v1521, %v542
    %v1778 = vmul.f32 %v1522, %v544
    %v1779 = vmul.f32 %v1523, %v547
    %v1780 = vmul.f32 %v1524, %v549
    %v1781 = vmul.f32 %v1525, %v552
    %v1782 = vmul.f32 %v1526, %v554
    %v1783 = vmul.f32 %v1527, %v557
    %v1784 = vmul.f32 %v1528, %v559
    %v1785 = vmul.f32 %v1529, %v562
    %v1786 = vmul.f32 %v1530, %v564
    %v1787 = vmul.f32 %v1531, %v567
    %v1788 = vmul.f32 %v1532, %v569
    %v1789 = vmul.f32 %v1533, %v572
    %v1790 = vmul.f32 %v1534, %v574
    %v1791 = vmul.f32 %v1535, %v577
    %v1792 = vmul.f32 %v1536, %v579
    %v1793 = vmul.f32 %v1537, %v582
    %v1794 = vmul.f32 %v1538, %v584
    %v1795 = vadd.f32 %v1731, %v1732
    %v1796 = vadd.f32 %v1795, %v1733
    %v1797 = vadd.f32 %v1796, %v1734
    %v1798 = vadd.f32 %v1797, %v1735
    %v1799 = vadd.f32 %v1798, %v1736
    %v1800 = vadd.f32 %v1799, %v1737
    %v1801 = vadd.f32 %v1800, %v1738
    %v1802 = vadd.f32 %v1801, %v1739
    %v1803 = vadd.f32 %v1802, %v1740
    %v1804 = vadd.f32 %v1803, %v1741
    %v1805 = vadd.f32 %v1804, %v1742
    %v1806 = vadd.f32 %v1805, %v1743
    %v1807 = vadd.f32 %v1806, %v1744
    %v1808 = vadd.f32 %v1807, %v1745
    %v1809 = vadd.f32 %v1808, %v1746
    %v1810 = vadd.f32 %v1809, %v1747
    %v1811 = vadd.f32 %v1810, %v1748
    %v1812 = vadd.f32 %v1811, %v1749
    %v1813 = vadd.f32 %v1812, %v1750
    %v1814 = vadd.f32 %v1813, %v1751
    %v1815 = vadd.f32 %v1814, %v1752
    %v1816 = vadd.f32 %v1815, %v1753
    %v1817 = vadd.f32 %v1816, %v1754
    %v1818 = vadd.f32 %v1817, %v1755
    %v1819 = vadd.f32 %v1818, %v1756
    %v1820 = vadd.f32 %v1819, %v1757
    %v1821 = vadd.f32 %v1820, %v1758
    %v1822 = vadd.f32 %v1821, %v1759
    %v1823 = vadd.f32 %v1822, %v1760
    %v1824 = vadd.f32 %v1823, %v1761
    %v1825 = vadd.f32 %v1824, %v1762
    %v1826 = vadd.f32 %v1825, %v1763
    %v1827 = vadd.f32 %v1826, %v1764
    %v1828 = vadd.f32 %v1827, %v1765
    %v1829 = vadd.f32 %v1828, %v1766
    %v1830 = vadd.f32 %v1829, %v1767
    %v1831 = vadd.f32 %v1830, %v1768
    %v1832 = vadd.f32 %v1831, %v1769
    %v1833 = vadd.f32 %v1832, %v1770
    %v1834 = vadd.f32 %v1833, %v1771
    %v1835 = vadd.f32 %v1834, %v1772
    %v1836 = vadd.f32 %v1835, %v1773
    %v1837 = vadd.f32 %v1836, %v1774
    %v1838 = vadd.f32 %v1837, %v1775
    %v1839 = vadd.f32 %v1838, %v1776
    %v1840 = vadd.f32 %v1839, %v1777
    %v1841 = vadd.f32 %v1840, %v1778
    %v1842 = vadd.f32 %v1841, %v1779
    %v1843 = vadd.f32 %v1842, %v1780
    %v1844 = vadd.f32 %v1843, %v1781
    %v1845 = vadd.f32 %v1844, %v1782
    %v1846 = vadd.f32 %v1845, %v1783
    %v1847 = vadd.f32 %v1846, %v1784
    %v1848 = vadd.f32 %v1847, %v1785
    %v1849 = vadd.f32 %v1848, %v1786
    %v1850 = vadd.f32 %v1849, %v1787
    %v1851 = vadd.f32 %v1850, %v1788
    %v1852 = vadd.f32 %v1851, %v1789
    %v1853 = vadd.f32 %v1852, %v1790
    %v1854 = vadd.f32 %v1853, %v1791
    %v1855 = vadd.f32 %v1854, %v1792
    %v1856 = vadd.f32 %v1855, %v1793
    %v1857 = vadd.f32 %v1856, %v1794
    %1858 = vst [vmem:[#allocation13] sm:$0xff] %v1857
    %v1859 = vmul.f32 %v1603, %v1603
    %v1860 = vmul.f32 %v1604, %v1604
    %v1861 = vmul.f32 %v1605, %v1605
    %v1862 = vmul.f32 %v1606, %v1606
    %v1863 = vmul.f32 %v1607, %v1607
    %v1864 = vmul.f32 %v1608, %v1608
    %v1865 = vmul.f32 %v1609, %v1609
    %v1866 = vmul.f32 %v1610, %v1610
    %v1867 = vmul.f32 %v1611, %v1611
    %v1868 = vmul.f32 %v1612, %v1612
    %v1869 = vmul.f32 %v1613, %v1613
    %v1870 = vmul.f32 %v1614, %v1614
    %v1871 = vmul.f32 %v1615, %v1615
    %v1872 = vmul.f32 %v1616, %v1616
    %v1873 = vmul.f32 %v1617, %v1617
    %v1874 = vmul.f32 %v1618, %v1618
    %v1875 = vmul.f32 %v1619, %v1619
    %v1876 = vmul.f32 %v1620, %v1620
    %v1877 = vmul.f32 %v1621, %v1621
    %v1878 = vmul.f32 %v1622, %v1622
    %v1879 = vmul.f32 %v1623, %v1623
    %v1880 = vmul.f32 %v1624, %v1624
    %v1881 = vmul.f32 %v1625, %v1625
    %v1882 = vmul.f32 %v1626, %v1626
    %v1883 = vmul.f32 %v1627, %v1627
    %v1884 = vmul.f32 %v1628, %v1628
    %v1885 = vmul.f32 %v1629, %v1629
    %v1886 = vmul.f32 %v1630, %v1630
    %v1887 = vmul.f32 %v1631, %v1631
    %v1888 = vmul.f32 %v1632, %v1632
    %v1889 = vmul.f32 %v1633, %v1633
    %v1890 = vmul.f32 %v1634, %v1634
    %v1891 = vmul.f32 %v1635, %v1635
    %v1892 = vmul.f32 %v1636, %v1636
    %v1893 = vmul.f32 %v1637, %v1637
    %v1894 = vmul.f32 %v1638, %v1638
    %v1895 = vmul.f32 %v1639, %v1639
    %v1896 = vmul.f32 %v1640, %v1640
    %v1897 = vmul.f32 %v1641, %v1641
    %v1898 = vmul.f32 %v1642, %v1642
    %v1899 = vmul.f32 %v1643, %v1643
    %v1900 = vmul.f32 %v1644, %v1644
    %v1901 = vmul.f32 %v1645, %v1645
    %v1902 = vmul.f32 %v1646, %v1646
    %v1903 = vmul.f32 %v1647, %v1647
    %v1904 = vmul.f32 %v1648, %v1648
    %v1905 = vmul.f32 %v1649, %v1649
    %v1906 = vmul.f32 %v1650, %v1650
    %v1907 = vmul.f32 %v1651, %v1651
    %v1908 = vmul.f32 %v1652, %v1652
    %v1909 = vmul.f32 %v1653, %v1653
    %v1910 = vmul.f32 %v1654, %v1654
    %v1911 = vmul.f32 %v1655, %v1655
    %v1912 = vmul.f32 %v1656, %v1656
    %v1913 = vmul.f32 %v1657, %v1657
    %v1914 = vmul.f32 %v1658, %v1658
    %v1915 = vmul.f32 %v1659, %v1659
    %v1916 = vmul.f32 %v1660, %v1660
    %v1917 = vmul.f32 %v1661, %v1661
    %v1918 = vmul.f32 %v1662, %v1662
    %v1919 = vmul.f32 %v1663, %v1663
    %v1920 = vmul.f32 %v1664, %v1664
    %v1921 = vmul.f32 %v1665, %v1665
    %v1922 = vmul.f32 %v1666, %v1666
    %v1923 = vadd.f32 %v1859, %v1860
    %v1924 = vadd.f32 %v1923, %v1861
    %v1925 = vadd.f32 %v1924, %v1862
    %v1926 = vadd.f32 %v1925, %v1863
    %v1927 = vadd.f32 %v1926, %v1864
    %v1928 = vadd.f32 %v1927, %v1865
    %v1929 = vadd.f32 %v1928, %v1866
    %v1930 = vadd.f32 %v1929, %v1867
    %v1931 = vadd.f32 %v1930, %v1868
    %v1932 = vadd.f32 %v1931, %v1869
    %v1933 = vadd.f32 %v1932, %v1870
    %v1934 = vadd.f32 %v1933, %v1871
    %v1935 = vadd.f32 %v1934, %v1872
    %v1936 = vadd.f32 %v1935, %v1873
    %v1937 = vadd.f32 %v1936, %v1874
    %v1938 = vadd.f32 %v1937, %v1875
    %v1939 = vadd.f32 %v1938, %v1876
    %v1940 = vadd.f32 %v1939, %v1877
    %v1941 = vadd.f32 %v1940, %v1878
    %v1942 = vadd.f32 %v1941, %v1879
    %v1943 = vadd.f32 %v1942, %v1880
    %v1944 = vadd.f32 %v1943, %v1881
    %v1945 = vadd.f32 %v1944, %v1882
    %v1946 = vadd.f32 %v1945, %v1883
    %v1947 = vadd.f32 %v1946, %v1884
    %v1948 = vadd.f32 %v1947, %v1885
    %v1949 = vadd.f32 %v1948, %v1886
    %v1950 = vadd.f32 %v1949, %v1887
    %v1951 = vadd.f32 %v1950, %v1888
    %v1952 = vadd.f32 %v1951, %v1889
    %v1953 = vadd.f32 %v1952, %v1890
    %v1954 = vadd.f32 %v1953, %v1891
    %v1955 = vadd.f32 %v1954, %v1892
    %v1956 = vadd.f32 %v1955, %v1893
    %v1957 = vadd.f32 %v1956, %v1894
    %v1958 = vadd.f32 %v1957, %v1895
    %v1959 = vadd.f32 %v1958, %v1896
    %v1960 = vadd.f32 %v1959, %v1897
    %v1961 = vadd.f32 %v1960, %v1898
    %v1962 = vadd.f32 %v1961, %v1899
    %v1963 = vadd.f32 %v1962, %v1900
    %v1964 = vadd.f32 %v1963, %v1901
    %v1965 = vadd.f32 %v1964, %v1902
    %v1966 = vadd.f32 %v1965, %v1903
    %v1967 = vadd.f32 %v1966, %v1904
    %v1968 = vadd.f32 %v1967, %v1905
    %v1969 = vadd.f32 %v1968, %v1906
    %v1970 = vadd.f32 %v1969, %v1907
    %v1971 = vadd.f32 %v1970, %v1908
    %v1972 = vadd.f32 %v1971, %v1909
    %v1973 = vadd.f32 %v1972, %v1910
    %v1974 = vadd.f32 %v1973, %v1911
    %v1975 = vadd.f32 %v1974, %v1912
    %v1976 = vadd.f32 %v1975, %v1913
    %v1977 = vadd.f32 %v1976, %v1914
    %v1978 = vadd.f32 %v1977, %v1915
    %v1979 = vadd.f32 %v1978, %v1916
    %v1980 = vadd.f32 %v1979, %v1917
    %v1981 = vadd.f32 %v1980, %v1918
    %v1982 = vadd.f32 %v1981, %v1919
    %v1983 = vadd.f32 %v1982, %v1920
    %v1984 = vadd.f32 %v1983, %v1921
    %v1985 = vadd.f32 %v1984, %v1922
    %1986 = vst [vmem:[#allocation14] sm:$0xff] %v1985
    // Predicated region
    $region42: #{tpu_custom_call.1} parent=1 // pred_check
      _
    $region43: #{tpu_custom_call.1} parent=1 // pred_check_branch
      %1988 = sbr.rel (0) target = $region45
    $region44: #{tpu_custom_call.1} parent=1 // pred_region
      %1990 = vsyncadd [#allocation4], 0
      %s1991 = sshll.u32 [#allocation10], 4
      %s1992 = int_to_ptr.vmem [resolvable:$true] %s1991
      %s1993 = sshll.u32 %s6, 4
      %s1994 = int_to_ptr.hbm [resolvable:$true] %s1993
      %1999 = dma.vmem_to_hbm [thread:$0]  %s1992, 8192, %s1994, [#allocation4], 128, 128, 8
    $region45: #{tpu_custom_call.1} parent=1 // pred_fallthru
      _
    // Predicated region
    $region46: #{tpu_custom_call.1} parent=1 // pred_check
      _
    $region47: #{tpu_custom_call.1} parent=1 // pred_check_branch
      %2001 = sbr.rel (0) target = $region49
    $region48: #{tpu_custom_call.1} parent=1 // pred_region
      %2003 = vsyncadd [#allocation12], 0
      %s2005 = sshll.u32 [#allocation11], 4
      %s2006 = int_to_ptr.vmem [resolvable:$true] %s2005
      %s2007 = sshll.u32 %s7, 4
      %s2008 = int_to_ptr.hbm [resolvable:$true] %s2007
      %2010 = dma.vmem_to_hbm [thread:$0]  %s2006, 128, %s2008, [#allocation12]
    $region49: #{tpu_custom_call.1} parent=1 // pred_fallthru
      _
    // Predicated region
    $region50: #{tpu_custom_call.1} parent=1 // pred_check
      _
    $region51: #{tpu_custom_call.1} parent=1 // pred_check_branch
      %2012 = sbr.rel (0) target = $region53
    $region52: #{tpu_custom_call.1} parent=1 // pred_region
      %2014 = vsyncadd [#allocation12], 0
      %s2016 = sshll.u32 [#allocation13], 4
      %s2017 = int_to_ptr.vmem [resolvable:$true] %s2016
      %s2018 = sshll.u32 %s8, 4
      %s2019 = int_to_ptr.hbm [resolvable:$true] %s2018
      %2021 = dma.vmem_to_hbm [thread:$0]  %s2017, 128, %s2019, [#allocation12]
    $region53: #{tpu_custom_call.1} parent=1 // pred_fallthru
      _
    // Predicated region
    $region54: #{tpu_custom_call.1} parent=1 // pred_check
      _
    $region55: #{tpu_custom_call.1} parent=1 // pred_check_branch
      %2023 = sbr.rel (0) target = $region57
    $region56: #{tpu_custom_call.1} parent=1 // pred_region
      %2025 = vsyncadd [#allocation15], 0
      %s2027 = sshll.u32 [#allocation14], 4
      %s2028 = int_to_ptr.vmem [resolvable:$true] %s2027
      %s2029 = sshll.u32 %s9, 4
      %s2030 = int_to_ptr.hbm [resolvable:$true] %s2029
      %2032 = dma.vmem_to_hbm [thread:$0]  %s2028, 128, %s2030, [#allocation15]
    $region57: #{tpu_custom_call.1} parent=1 // pred_fallthru
      _
    // Predicated region
    $region58: #{tpu_custom_call.1} parent=1 // pred_check
      _
    $region59: #{tpu_custom_call.1} parent=1 // pred_check_branch
      %2034 = sbr.rel (0) target = $region61
    $region60: #{tpu_custom_call.1} parent=1 // pred_region
      %2036 = dma.done [#allocation4], 8192
    $region61: #{tpu_custom_call.1} parent=1 // pred_fallthru
      _
    // Predicated region
    $region62: #{tpu_custom_call.1} parent=1 // pred_check
      _
    $region63: #{tpu_custom_call.1} parent=1 // pred_check_branch
      %2038 = sbr.rel (0) target = $region65
    $region64: #{tpu_custom_call.1} parent=1 // pred_region
      %2040 = dma.done [#allocation12], 128
    $region65: #{tpu_custom_call.1} parent=1 // pred_fallthru
      _
    // Predicated region
    $region66: #{tpu_custom_call.1} parent=1 // pred_check
      _
    $region67: #{tpu_custom_call.1} parent=1 // pred_check_branch
      %2042 = sbr.rel (0) target = $region69
    $region68: #{tpu_custom_call.1} parent=1 // pred_region
      %2044 = dma.done [#allocation12], 128
    $region69: #{tpu_custom_call.1} parent=1 // pred_fallthru
      _
    // Predicated region
    $region70: #{tpu_custom_call.1} parent=1 // pred_check
      _
    $region71: #{tpu_custom_call.1} parent=1 // pred_check_branch
      %2046 = sbr.rel (0) target = $region73
    $region72: #{tpu_custom_call.1} parent=1 // pred_region
      %2048 = dma.done [#allocation15], 128
    $region73: #{tpu_custom_call.1} parent=1 // pred_fallthru
      _
    %2049 = vsyncpa [#allocation3], 1
    %2050 = vsyncpa [#allocation6], 1
    %2051 = vsyncpa [#allocation9], 1
    %2052 = vsyncpa [#allocation4], 1
    %2053 = vsyncpa [#allocation12], 1
    %2054 = vsyncpa [#allocation15], 1

// kernel: tpu_custom_call.1
$region0: #{tpu_custom_call.1}
  #allocation0 [shape = 'u32[]', space=smem, size = 0x4, offset = 0x4, fixed_abs, tag = 'smem constant byte address 0x4 - core index']
  #allocation1 [shape = 'u32[72,128]{1,0:T(1,128)}', space=vmem, size = 0x9000, scoped, tag = 'internal scratch']
  %s0 = inlined_call_operand.hbm [shape: bf16[512,128], index: 0, kind: input, shape index: {}]
  %s1 = inlined_call_operand.hbm [shape: bf16[128,128], index: 1, kind: input, shape index: {}]
  %s2 = inlined_call_operand.vmem [shape: f32[1,128], index: 2, kind: input, shape index: {}]
  %s3 = inlined_call_operand.hbm [shape: bf16[128,128], index: 3, kind: input, shape index: {}]
  %s4 = inlined_call_operand.hbm [shape: bf16[128,128], index: 4, kind: input, shape index: {}]
  %s5 = inlined_call_operand.vmem [shape: f32[1,128], index: 5, kind: input, shape index: {}]
  %s6 = inlined_call_operand.hbm [shape: f32[512,128], index: 6, kind: output, shape index: {0}]
  %s7 = inlined_call_operand.hbm [shape: f32[1,8,128], index: 7, kind: output, shape index: {1}]
  %s8 = inlined_call_operand.hbm [shape: f32[1,8,128], index: 8, kind: output, shape index: {2}]
  %s9 = inlined_call_operand.hbm [shape: f32[1,8,128], index: 9, kind: output, shape index: {3}]
  %10 = xla_tuple %s6, %s7, %s8, %s9
  %s11 = sld [smem:[#allocation0]]
  $region74: #{tpu_custom_call.1} parent=0
    _
  %s13 = ssub.s32 1, %s11
  %s14 = scalar_select 0, %s13, %s11
  $region1: #{tpu_custom_call.1} parent=0
    #allocation2 [shape = 'u8[131072]{0}', space=vmem, size = 0x20000, scoped, tag = 'input window, operand 0, single buffered']
    #allocation3 [shape = 's32[1]{0}', space=sflag, size = 0x4, scoped, tag = 'scoped memory for tpu_custom_call.1']
    #allocation4 [shape = 's32[1]{0}', space=sflag, size = 0x4, scoped, tag = 'scoped memory for tpu_custom_call.1']
    #allocation5 [shape = 'u8[32768]{0}', space=vmem, size = 0x8000, scoped, tag = 'input window, operand 1, single buffered']
    #allocation6 [shape = 's32[1]{0}', space=sflag, size = 0x4, scoped, tag = 'scoped memory for tpu_custom_call.1']
    #allocation7 [shape = 'u8[32768]{0}', space=vmem, size = 0x8000, scoped, tag = 'input window, operand 3, single buffered']
    #allocation8 [shape = 'u8[32768]{0}', space=vmem, size = 0x8000, scoped, tag = 'input window, operand 4, single buffered']
    #allocation9 [shape = 's32[1]{0}', space=sflag, size = 0x4, scoped, tag = 'scoped memory for tpu_custom_call.1']
    #allocation10 [shape = 'u8[262144]{0}', space=vmem, size = 0x40000, scoped, tag = 'output window, operand 0, single buffered']
    #allocation11 [shape = 'u8[4096]{0}', space=vmem, size = 0x1000, scoped, tag = 'output window, operand 1, single buffered']
    #allocation12 [shape = 's32[1]{0}', space=sflag, size = 0x4, scoped, tag = 'scoped memory for tpu_custom_call.1']
    #allocation13 [shape = 'u8[4096]{0}', space=vmem, size = 0x1000, scoped, tag = 'output window, operand 2, single buffered']
    #allocation14 [shape = 'u8[4096]{0}', space=vmem, size = 0x1000, scoped, tag = 'output window, operand 3, single buffered']
    #allocation15 [shape = 's32[1]{0}', space=sflag, size = 0x4, scoped, tag = 'scoped memory for tpu_custom_call.1']
    %15 = vsyncpa [#allocation3], 0
    %16 = vsyncpa [#allocation6], 0
    %17 = vsyncpa [#allocation9], 0
    %18 = vsyncpa [#allocation4], 0
    %19 = vsyncpa [#allocation12], 0
    %20 = vsyncpa [#allocation15], 0
    // Predicated region
    $region2: #{tpu_custom_call.1} parent=1 // pred_check
      _
    $region3: #{tpu_custom_call.1} parent=1 // pred_check_branch
      %22 = sbr.rel (0) target = $region5
    $region4: #{tpu_custom_call.1} parent=1 // pred_region
      %24 = vsyncadd [#allocation3], 0
      %s25 = sshll.u32 %s0, 4
      %s26 = int_to_ptr.hbm [resolvable:$true] %s25
      %s27 = sshll.u32 [#allocation2], 4
      %s28 = int_to_ptr.vmem [resolvable:$true] %s27
      %33 = dma.hbm_to_vmem [thread:$0]  %s26, 4096, %s28, [#allocation3], 64, 64, 4
    $region5: #{tpu_custom_call.1} parent=1 // pred_fallthru
      _
    // Predicated region
    $region6: #{tpu_custom_call.1} parent=1 // pred_check
      _
    $region7: #{tpu_custom_call.1} parent=1 // pred_check_branch
      %35 = sbr.rel (0) target = $region9
    $region8: #{tpu_custom_call.1} parent=1 // pred_region
      %37 = vsyncadd [#allocation6], 0
      %s38 = sshll.u32 %s1, 4
      %s39 = int_to_ptr.hbm [resolvable:$true] %s38
      %s40 = sshll.u32 [#allocation5], 4
      %s41 = int_to_ptr.vmem [resolvable:$true] %s40
      %46 = dma.hbm_to_vmem [thread:$0]  %s39, 1024, %s41, [#allocation6], 64, 64, 4
    $region9: #{tpu_custom_call.1} parent=1 // pred_fallthru
      _
    // Predicated region
    $region10: #{tpu_custom_call.1} parent=1 // pred_check
      _
    $region11: #{tpu_custom_call.1} parent=1 // pred_check_branch
      %48 = sbr.rel (0) target = $region13
    $region12: #{tpu_custom_call.1} parent=1 // pred_region
      _
    $region13: #{tpu_custom_call.1} parent=1 // pred_fallthru
      _
    // Predicated region
    $region14: #{tpu_custom_call.1} parent=1 // pred_check
      _
    $region15: #{tpu_custom_call.1} parent=1 // pred_check_branch
      %50 = sbr.rel (0) target = $region17
    $region16: #{tpu_custom_call.1} parent=1 // pred_region
      %52 = vsyncadd [#allocation6], 0
      %s53 = sshll.u32 %s3, 4
      %s54 = int_to_ptr.hbm [resolvable:$true] %s53
      %s55 = sshll.u32 [#allocation7], 4
      %s56 = int_to_ptr.vmem [resolvable:$true] %s55
      %61 = dma.hbm_to_vmem [thread:$0]  %s54, 1024, %s56, [#allocation6], 64, 64, 4
    $region17: #{tpu_custom_call.1} parent=1 // pred_fallthru
      _
    // Predicated region
    $region18: #{tpu_custom_call.1} parent=1 // pred_check
      _
    $region19: #{tpu_custom_call.1} parent=1 // pred_check_branch
      %63 = sbr.rel (0) target = $region21
    $region20: #{tpu_custom_call.1} parent=1 // pred_region
      %65 = vsyncadd [#allocation9], 0
      %s66 = sshll.u32 %s4, 4
      %s67 = int_to_ptr.hbm [resolvable:$true] %s66
      %s68 = sshll.u32 [#allocation8], 4
      %s69 = int_to_ptr.vmem [resolvable:$true] %s68
      %74 = dma.hbm_to_vmem [thread:$0]  %s67, 1024, %s69, [#allocation9], 64, 64, 4
    $region21: #{tpu_custom_call.1} parent=1 // pred_fallthru
      _
    // Predicated region
    $region22: #{tpu_custom_call.1} parent=1 // pred_check
      _
    $region23: #{tpu_custom_call.1} parent=1 // pred_check_branch
      %76 = sbr.rel (0) target = $region25
    $region24: #{tpu_custom_call.1} parent=1 // pred_region
      _
    $region25: #{tpu_custom_call.1} parent=1 // pred_fallthru
      _
    // Predicated region
    $region26: #{tpu_custom_call.1} parent=1 // pred_check
      _
    $region27: #{tpu_custom_call.1} parent=1 // pred_check_branch
      %78 = sbr.rel (0) target = $region29
    $region28: #{tpu_custom_call.1} parent=1 // pred_region
      %80 = dma.done [#allocation3], 4096
    $region29: #{tpu_custom_call.1} parent=1 // pred_fallthru
      _
    // Predicated region
    $region30: #{tpu_custom_call.1} parent=1 // pred_check
      _
    $region31: #{tpu_custom_call.1} parent=1 // pred_check_branch
      %82 = sbr.rel (0) target = $region33
    $region32: #{tpu_custom_call.1} parent=1 // pred_region
      %84 = dma.done [#allocation6], 1024
    $region33: #{tpu_custom_call.1} parent=1 // pred_fallthru
      _
    // Predicated region
    $region34: #{tpu_custom_call.1} parent=1 // pred_check
      _
    $region35: #{tpu_custom_call.1} parent=1 // pred_check_branch
      %86 = sbr.rel (0) target = $region37
    $region36: #{tpu_custom_call.1} parent=1 // pred_region
      %88 = dma.done [#allocation6], 1024
    $region37: #{tpu_custom_call.1} parent=1 // pred_fallthru
      _
    // Predicated region
    $region38: #{tpu_custom_call.1} parent=1 // pred_check
      _
    $region39: #{tpu_custom_call.1} parent=1 // pred_check_branch
      %90 = sbr.rel (0) target = $region41
    $region40: #{tpu_custom_call.1} parent=1 // pred_region
      %92 = dma.done [#allocation9], 1024
    $region41: #{tpu_custom_call.1} parent=1 // pred_fallthru
      _
    %v93 = vld [vmem:[#allocation2] sm:$0xf]
    %v94 = vld [vmem:[#allocation2 + $0x4] sm:$0xf]
    %v95 = vld [vmem:[#allocation2 + $0x8] sm:$0xf]
    %v96 = vld [vmem:[#allocation2 + $0xc] sm:$0xf]
    %v97 = vld [vmem:[#allocation2 + $0x10] sm:$0xf]
    %v98 = vld [vmem:[#allocation2 + $0x14] sm:$0xf]
    %v99 = vld [vmem:[#allocation2 + $0x18] sm:$0xf]
    %v100 = vld [vmem:[#allocation2 + $0x1c] sm:$0xf]
    %v101 = vld [vmem:[#allocation2 + $0x20] sm:$0xf]
    %v102 = vld [vmem:[#allocation2 + $0x24] sm:$0xf]
    %v103 = vld [vmem:[#allocation2 + $0x28] sm:$0xf]
    %v104 = vld [vmem:[#allocation2 + $0x2c] sm:$0xf]
    %v105 = vld [vmem:[#allocation2 + $0x30] sm:$0xf]
    %v106 = vld [vmem:[#allocation2 + $0x34] sm:$0xf]
    %v107 = vld [vmem:[#allocation2 + $0x38] sm:$0xf]
    %v108 = vld [vmem:[#allocation2 + $0x3c] sm:$0xf]
    %v109 = vld [vmem:[#allocation2 + $0x40] sm:$0xf]
    %v110 = vld [vmem:[#allocation2 + $0x44] sm:$0xf]
    %v111 = vld [vmem:[#allocation2 + $0x48] sm:$0xf]
    %v112 = vld [vmem:[#allocation2 + $0x4c] sm:$0xf]
    %v113 = vld [vmem:[#allocation2 + $0x50] sm:$0xf]
    %v114 = vld [vmem:[#allocation2 + $0x54] sm:$0xf]
    %v115 = vld [vmem:[#allocation2 + $0x58] sm:$0xf]
    %v116 = vld [vmem:[#allocation2 + $0x5c] sm:$0xf]
    %v117 = vld [vmem:[#allocation2 + $0x60] sm:$0xf]
    %v118 = vld [vmem:[#allocation2 + $0x64] sm:$0xf]
    %v119 = vld [vmem:[#allocation2 + $0x68] sm:$0xf]
    %v120 = vld [vmem:[#allocation2 + $0x6c] sm:$0xf]
    %v121 = vld [vmem:[#allocation2 + $0x70] sm:$0xf]
    %v122 = vld [vmem:[#allocation2 + $0x74] sm:$0xf]
    %v123 = vld [vmem:[#allocation2 + $0x78] sm:$0xf]
    %v124 = vld [vmem:[#allocation2 + $0x7c] sm:$0xf]
    %v125 = vld [vmem:[#allocation2 + $0x80] sm:$0xf]
    %v126 = vld [vmem:[#allocation2 + $0x84] sm:$0xf]
    %v127 = vld [vmem:[#allocation2 + $0x88] sm:$0xf]
    %v128 = vld [vmem:[#allocation2 + $0x8c] sm:$0xf]
    %v129 = vld [vmem:[#allocation2 + $0x90] sm:$0xf]
    %v130 = vld [vmem:[#allocation2 + $0x94] sm:$0xf]
    %v131 = vld [vmem:[#allocation2 + $0x98] sm:$0xf]
    %v132 = vld [vmem:[#allocation2 + $0x9c] sm:$0xf]
    %v133 = vld [vmem:[#allocation2 + $0xa0] sm:$0xf]
    %v134 = vld [vmem:[#allocation2 + $0xa4] sm:$0xf]
    %v135 = vld [vmem:[#allocation2 + $0xa8] sm:$0xf]
    %v136 = vld [vmem:[#allocation2 + $0xac] sm:$0xf]
    %v137 = vld [vmem:[#allocation2 + $0xb0] sm:$0xf]
    %v138 = vld [vmem:[#allocation2 + $0xb4] sm:$0xf]
    %v139 = vld [vmem:[#allocation2 + $0xb8] sm:$0xf]
    %v140 = vld [vmem:[#allocation2 + $0xbc] sm:$0xf]
    %v141 = vld [vmem:[#allocation2 + $0xc0] sm:$0xf]
    %v142 = vld [vmem:[#allocation2 + $0xc4] sm:$0xf]
    %v143 = vld [vmem:[#allocation2 + $0xc8] sm:$0xf]
    %v144 = vld [vmem:[#allocation2 + $0xcc] sm:$0xf]
    %v145 = vld [vmem:[#allocation2 + $0xd0] sm:$0xf]
    %v146 = vld [vmem:[#allocation2 + $0xd4] sm:$0xf]
    %v147 = vld [vmem:[#allocation2 + $0xd8] sm:$0xf]
    %v148 = vld [vmem:[#allocation2 + $0xdc] sm:$0xf]
    %v149 = vld [vmem:[#allocation2 + $0xe0] sm:$0xf]
    %v150 = vld [vmem:[#allocation2 + $0xe4] sm:$0xf]
    %v151 = vld [vmem:[#allocation2 + $0xe8] sm:$0xf]
    %v152 = vld [vmem:[#allocation2 + $0xec] sm:$0xf]
    %v153 = vld [vmem:[#allocation2 + $0xf0] sm:$0xf]
    %v154 = vld [vmem:[#allocation2 + $0xf4] sm:$0xf]
    %v155 = vld [vmem:[#allocation2 + $0xf8] sm:$0xf]
    %v156 = vld [vmem:[#allocation2 + $0xfc] sm:$0xf]
    %v157 = vld [vmem:[#allocation5] sm:$0xf]
    %v158 = vld [vmem:[#allocation5 + $0x4] sm:$0xf]
    %v159 = vld [vmem:[#allocation5 + $0x8] sm:$0xf]
    %v160 = vld [vmem:[#allocation5 + $0xc] sm:$0xf]
    %v161 = vld [vmem:[#allocation5 + $0x10] sm:$0xf]
    %v162 = vld [vmem:[#allocation5 + $0x14] sm:$0xf]
    %v163 = vld [vmem:[#allocation5 + $0x18] sm:$0xf]
    %v164 = vld [vmem:[#allocation5 + $0x1c] sm:$0xf]
    %v165 = vld [vmem:[#allocation5 + $0x20] sm:$0xf]
    %v166 = vld [vmem:[#allocation5 + $0x24] sm:$0xf]
    %v167 = vld [vmem:[#allocation5 + $0x28] sm:$0xf]
    %v168 = vld [vmem:[#allocation5 + $0x2c] sm:$0xf]
    %v169 = vld [vmem:[#allocation5 + $0x30] sm:$0xf]
    %v170 = vld [vmem:[#allocation5 + $0x34] sm:$0xf]
    %v171 = vld [vmem:[#allocation5 + $0x38] sm:$0xf]
    %v172 = vld [vmem:[#allocation5 + $0x3c] sm:$0xf]
    %v173 = vld [vmem:[%s2] sm:$0x1]
    %v175 = vperm.slane %v173, 0
    %v241 = vunpack.c.l.b16 %v93
    %v242 = vunpack.c.l.b16 %v94
    %v243 = vunpack.c.l.b16 %v95
    %v244 = vunpack.c.l.b16 %v96
    %v245 = vunpack.c.l.b16 %v97
    %v246 = vunpack.c.l.b16 %v98
    %v247 = vunpack.c.l.b16 %v99
    %v248 = vunpack.c.l.b16 %v100
    %v249 = vunpack.c.l.b16 %v101
    %v250 = vunpack.c.l.b16 %v102
    %v251 = vunpack.c.l.b16 %v103
    %v252 = vunpack.c.l.b16 %v104
    %v253 = vunpack.c.l.b16 %v105
    %v254 = vunpack.c.l.b16 %v106
    %v255 = vunpack.c.l.b16 %v107
    %v256 = vunpack.c.l.b16 %v108
    %v257 = vunpack.c.l.b16 %v109
    %v258 = vunpack.c.l.b16 %v110
    %v259 = vunpack.c.l.b16 %v111
    %v260 = vunpack.c.l.b16 %v112
    %v261 = vunpack.c.l.b16 %v113
    %v262 = vunpack.c.l.b16 %v114
    %v263 = vunpack.c.l.b16 %v115
    %v264 = vunpack.c.l.b16 %v116
    %v265 = vunpack.c.l.b16 %v117
    %v266 = vunpack.c.l.b16 %v118
    %v267 = vunpack.c.l.b16 %v119
    %v268 = vunpack.c.l.b16 %v120
    %v269 = vunpack.c.l.b16 %v121
    %v270 = vunpack.c.l.b16 %v122
    %v271 = vunpack.c.l.b16 %v123
    %v272 = vunpack.c.l.b16 %v124
    %v273 = vunpack.c.l.b16 %v125
    %v274 = vunpack.c.l.b16 %v126
    %v275 = vunpack.c.l.b16 %v127
    %v276 = vunpack.c.l.b16 %v128
    %v277 = vunpack.c.l.b16 %v129
    %v278 = vunpack.c.l.b16 %v130
    %v279 = vunpack.c.l.b16 %v131
    %v280 = vunpack.c.l.b16 %v132
    %v281 = vunpack.c.l.b16 %v133
    %v282 = vunpack.c.l.b16 %v134
    %v283 = vunpack.c.l.b16 %v135
    %v284 = vunpack.c.l.b16 %v136
    %v285 = vunpack.c.l.b16 %v137
    %v286 = vunpack.c.l.b16 %v138
    %v287 = vunpack.c.l.b16 %v139
    %v288 = vunpack.c.l.b16 %v140
    %v289 = vunpack.c.l.b16 %v141
    %v290 = vunpack.c.l.b16 %v142
    %v291 = vunpack.c.l.b16 %v143
    %v292 = vunpack.c.l.b16 %v144
    %v293 = vunpack.c.l.b16 %v145
    %v294 = vunpack.c.l.b16 %v146
    %v295 = vunpack.c.l.b16 %v147
    %v296 = vunpack.c.l.b16 %v148
    %v297 = vunpack.c.l.b16 %v149
    %v298 = vunpack.c.l.b16 %v150
    %v299 = vunpack.c.l.b16 %v151
    %v300 = vunpack.c.l.b16 %v152
    %v301 = vunpack.c.l.b16 %v153
    %v302 = vunpack.c.l.b16 %v154
    %v303 = vunpack.c.l.b16 %v155
    %v304 = vunpack.c.l.b16 %v156
    %v305 = vpack.c.b16 %v242, %v241
    %v306 = vpack.c.b16 %v244, %v243
    %v307 = vpack.c.b16 %v246, %v245
    %v308 = vpack.c.b16 %v248, %v247
    %v309 = vpack.c.b16 %v250, %v249
    %v310 = vpack.c.b16 %v252, %v251
    %v311 = vpack.c.b16 %v254, %v253
    %v312 = vpack.c.b16 %v256, %v255
    %v313 = vpack.c.b16 %v258, %v257
    %v314 = vpack.c.b16 %v260, %v259
    %v315 = vpack.c.b16 %v262, %v261
    %v316 = vpack.c.b16 %v264, %v263
    %v317 = vpack.c.b16 %v266, %v265
    %v318 = vpack.c.b16 %v268, %v267
    %v319 = vpack.c.b16 %v270, %v269
    %v320 = vpack.c.b16 %v272, %v271
    %v321 = vpack.c.b16 %v274, %v273
    %v322 = vpack.c.b16 %v276, %v275
    %v323 = vpack.c.b16 %v278, %v277
    %v324 = vpack.c.b16 %v280, %v279
    %v325 = vpack.c.b16 %v282, %v281
    %v326 = vpack.c.b16 %v284, %v283
    %v327 = vpack.c.b16 %v286, %v285
    %v328 = vpack.c.b16 %v288, %v287
    %v329 = vpack.c.b16 %v290, %v289
    %v330 = vpack.c.b16 %v292, %v291
    %v331 = vpack.c.b16 %v294, %v293
    %v332 = vpack.c.b16 %v296, %v295
    %v333 = vpack.c.b16 %v298, %v297
    %v334 = vpack.c.b16 %v300, %v299
    %v335 = vpack.c.b16 %v302, %v301
    %v336 = vpack.c.b16 %v304, %v303
    %v385 = vunpack.c.l.b16 %v157
    %v386 = vunpack.c.l.b16 %v158
    %v387 = vunpack.c.l.b16 %v159
    %v388 = vunpack.c.l.b16 %v160
    %v389 = vunpack.c.l.b16 %v161
    %v390 = vunpack.c.l.b16 %v162
    %v391 = vunpack.c.l.b16 %v163
    %v392 = vunpack.c.l.b16 %v164
    %v393 = vunpack.c.l.b16 %v165
    %v394 = vunpack.c.l.b16 %v166
    %v395 = vunpack.c.l.b16 %v167
    %v396 = vunpack.c.l.b16 %v168
    %v397 = vunpack.c.l.b16 %v169
    %v398 = vunpack.c.l.b16 %v170
    %v399 = vunpack.c.l.b16 %v171
    %v400 = vunpack.c.l.b16 %v172
    %v401 = vpack.c.b16 %v386, %v385
    %v402 = vpack.c.b16 %v388, %v387
    %v403 = vpack.c.b16 %v390, %v389
    %v404 = vpack.c.b16 %v392, %v391
    %v405 = vpack.c.b16 %v394, %v393
    %v406 = vpack.c.b16 %v396, %v395
    %v407 = vpack.c.b16 %v398, %v397
    %v408 = vpack.c.b16 %v400, %v399
    %417 = vmatpush.bf16.msra.mxu0 %v408
    %418 = vmatpush.bf16.msra.mxu0 %v407
    %419 = vmatpush.bf16.msra.mxu0 %v406
    %420 = vmatpush.bf16.msra.mxu0 %v405
    %421 = vmatpush.bf16.msra.mxu0 %v404
    %422 = vmatpush.bf16.msra.mxu0 %v403
    %423 = vmatpush.bf16.msra.mxu0 %v402
    %424 = vmatpush.bf16.msra.mxu0 %v401
    %425 = vmatmul.bf16.gmra.mxu0 %v305
    %v426 = vpop.f32.mrf.mxu0
    %v427 = vadd.f32 %v175, %v426
    %v428 = vpop.f32.mrf.mxu0
    %v429 = vadd.f32 %v175, %v428
    %430 = vmatmul.bf16.gmra.mxu0 %v306
    %v431 = vpop.f32.mrf.mxu0
    %v432 = vadd.f32 %v175, %v431
    %v433 = vpop.f32.mrf.mxu0
    %v434 = vadd.f32 %v175, %v433
    %435 = vmatmul.bf16.gmra.mxu0 %v307
    %v436 = vpop.f32.mrf.mxu0
    %v437 = vadd.f32 %v175, %v436
    %v438 = vpop.f32.mrf.mxu0
    %v439 = vadd.f32 %v175, %v438
    %440 = vmatmul.bf16.gmra.mxu0 %v308
    %v441 = vpop.f32.mrf.mxu0
    %v442 = vadd.f32 %v175, %v441
    %v443 = vpop.f32.mrf.mxu0
    %v444 = vadd.f32 %v175, %v443
    %445 = vmatmul.bf16.gmra.mxu0 %v309
    %v446 = vpop.f32.mrf.mxu0
    %v447 = vadd.f32 %v175, %v446
    %v448 = vpop.f32.mrf.mxu0
    %v449 = vadd.f32 %v175, %v448
    %450 = vmatmul.bf16.gmra.mxu0 %v310
    %v451 = vpop.f32.mrf.mxu0
    %v452 = vadd.f32 %v175, %v451
    %v453 = vpop.f32.mrf.mxu0
    %v454 = vadd.f32 %v175, %v453
    %455 = vmatmul.bf16.gmra.mxu0 %v311
    %v456 = vpop.f32.mrf.mxu0
    %v457 = vadd.f32 %v175, %v456
    %v458 = vpop.f32.mrf.mxu0
    %v459 = vadd.f32 %v175, %v458
    %460 = vmatmul.bf16.gmra.mxu0 %v312
    %v461 = vpop.f32.mrf.mxu0
    %v462 = vadd.f32 %v175, %v461
    %v463 = vpop.f32.mrf.mxu0
    %v464 = vadd.f32 %v175, %v463
    %465 = vmatmul.bf16.gmra.mxu0 %v313
    %v466 = vpop.f32.mrf.mxu0
    %v467 = vadd.f32 %v175, %v466
    %v468 = vpop.f32.mrf.mxu0
    %v469 = vadd.f32 %v175, %v468
    %470 = vmatmul.bf16.gmra.mxu0 %v314
    %v471 = vpop.f32.mrf.mxu0
    %v472 = vadd.f32 %v175, %v471
    %v473 = vpop.f32.mrf.mxu0
    %v474 = vadd.f32 %v175, %v473
    %475 = vmatmul.bf16.gmra.mxu0 %v315
    %v476 = vpop.f32.mrf.mxu0
    %v477 = vadd.f32 %v175, %v476
    %v478 = vpop.f32.mrf.mxu0
    %v479 = vadd.f32 %v175, %v478
    %480 = vmatmul.bf16.gmra.mxu0 %v316
    %v481 = vpop.f32.mrf.mxu0
    %v482 = vadd.f32 %v175, %v481
    %v483 = vpop.f32.mrf.mxu0
    %v484 = vadd.f32 %v175, %v483
    %485 = vmatmul.bf16.gmra.mxu0 %v317
    %v486 = vpop.f32.mrf.mxu0
    %v487 = vadd.f32 %v175, %v486
    %v488 = vpop.f32.mrf.mxu0
    %v489 = vadd.f32 %v175, %v488
    %490 = vmatmul.bf16.gmra.mxu0 %v318
    %v491 = vpop.f32.mrf.mxu0
    %v492 = vadd.f32 %v175, %v491
    %v493 = vpop.f32.mrf.mxu0
    %v494 = vadd.f32 %v175, %v493
    %495 = vmatmul.bf16.gmra.mxu0 %v319
    %v496 = vpop.f32.mrf.mxu0
    %v497 = vadd.f32 %v175, %v496
    %v498 = vpop.f32.mrf.mxu0
    %v499 = vadd.f32 %v175, %v498
    %500 = vmatmul.bf16.gmra.mxu0 %v320
    %v501 = vpop.f32.mrf.mxu0
    %v502 = vadd.f32 %v175, %v501
    %v503 = vpop.f32.mrf.mxu0
    %v504 = vadd.f32 %v175, %v503
    %505 = vmatmul.bf16.gmra.mxu0 %v321
    %v506 = vpop.f32.mrf.mxu0
    %v507 = vadd.f32 %v175, %v506
    %v508 = vpop.f32.mrf.mxu0
    %v509 = vadd.f32 %v175, %v508
    %510 = vmatmul.bf16.gmra.mxu0 %v322
    %v511 = vpop.f32.mrf.mxu0
    %v512 = vadd.f32 %v175, %v511
    %v513 = vpop.f32.mrf.mxu0
    %v514 = vadd.f32 %v175, %v513
    %515 = vmatmul.bf16.gmra.mxu0 %v323
    %v516 = vpop.f32.mrf.mxu0
    %v517 = vadd.f32 %v175, %v516
    %v518 = vpop.f32.mrf.mxu0
    %v519 = vadd.f32 %v175, %v518
    %520 = vmatmul.bf16.gmra.mxu0 %v324
    %v521 = vpop.f32.mrf.mxu0
    %v522 = vadd.f32 %v175, %v521
    %v523 = vpop.f32.mrf.mxu0
    %v524 = vadd.f32 %v175, %v523
    %525 = vmatmul.bf16.gmra.mxu0 %v325
    %v526 = vpop.f32.mrf.mxu0
    %v527 = vadd.f32 %v175, %v526
    %v528 = vpop.f32.mrf.mxu0
    %v529 = vadd.f32 %v175, %v528
    %530 = vmatmul.bf16.gmra.mxu0 %v326
    %v531 = vpop.f32.mrf.mxu0
    %v532 = vadd.f32 %v175, %v531
    %v533 = vpop.f32.mrf.mxu0
    %v534 = vadd.f32 %v175, %v533
    %535 = vmatmul.bf16.gmra.mxu0 %v327
    %v536 = vpop.f32.mrf.mxu0
    %v537 = vadd.f32 %v175, %v536
    %v538 = vpop.f32.mrf.mxu0
    %v539 = vadd.f32 %v175, %v538
    %540 = vmatmul.bf16.gmra.mxu0 %v328
    %v541 = vpop.f32.mrf.mxu0
    %v542 = vadd.f32 %v175, %v541
    %v543 = vpop.f32.mrf.mxu0
    %v544 = vadd.f32 %v175, %v543
    %545 = vmatmul.bf16.gmra.mxu0 %v329
    %v546 = vpop.f32.mrf.mxu0
    %v547 = vadd.f32 %v175, %v546
    %v548 = vpop.f32.mrf.mxu0
    %v549 = vadd.f32 %v175, %v548
    %550 = vmatmul.bf16.gmra.mxu0 %v330
    %v551 = vpop.f32.mrf.mxu0
    %v552 = vadd.f32 %v175, %v551
    %v553 = vpop.f32.mrf.mxu0
    %v554 = vadd.f32 %v175, %v553
    %555 = vmatmul.bf16.gmra.mxu0 %v331
    %v556 = vpop.f32.mrf.mxu0
    %v557 = vadd.f32 %v175, %v556
    %v558 = vpop.f32.mrf.mxu0
    %v559 = vadd.f32 %v175, %v558
    %560 = vmatmul.bf16.gmra.mxu0 %v332
    %v561 = vpop.f32.mrf.mxu0
    %v562 = vadd.f32 %v175, %v561
    %v563 = vpop.f32.mrf.mxu0
    %v564 = vadd.f32 %v175, %v563
    %565 = vmatmul.bf16.gmra.mxu0 %v333
    %v566 = vpop.f32.mrf.mxu0
    %v567 = vadd.f32 %v175, %v566
    %v568 = vpop.f32.mrf.mxu0
    %v569 = vadd.f32 %v175, %v568
    %570 = vmatmul.bf16.gmra.mxu0 %v334
    %v571 = vpop.f32.mrf.mxu0
    %v572 = vadd.f32 %v175, %v571
    %v573 = vpop.f32.mrf.mxu0
    %v574 = vadd.f32 %v175, %v573
    %575 = vmatmul.bf16.gmra.mxu0 %v335
    %v576 = vpop.f32.mrf.mxu0
    %v577 = vadd.f32 %v175, %v576
    %v578 = vpop.f32.mrf.mxu0
    %v579 = vadd.f32 %v175, %v578
    %580 = vmatmul.bf16.gmra.mxu0 %v336
    %v581 = vpop.f32.mrf.mxu0
    %v582 = vadd.f32 %v175, %v581
    %v583 = vpop.f32.mrf.mxu0
    %v584 = vadd.f32 %v175, %v583
    %585 = vdwg.mxu0
    %v586 = vld [vmem:[#allocation7] sm:$0xf]
    %v587 = vld [vmem:[#allocation7 + $0x4] sm:$0xf]
    %v588 = vld [vmem:[#allocation7 + $0x8] sm:$0xf]
    %v589 = vld [vmem:[#allocation7 + $0xc] sm:$0xf]
    %v590 = vld [vmem:[#allocation7 + $0x10] sm:$0xf]
    %v591 = vld [vmem:[#allocation7 + $0x14] sm:$0xf]
    %v592 = vld [vmem:[#allocation7 + $0x18] sm:$0xf]
    %v593 = vld [vmem:[#allocation7 + $0x1c] sm:$0xf]
    %v594 = vld [vmem:[#allocation7 + $0x20] sm:$0xf]
    %v595 = vld [vmem:[#allocation7 + $0x24] sm:$0xf]
    %v596 = vld [vmem:[#allocation7 + $0x28] sm:$0xf]
    %v597 = vld [vmem:[#allocation7 + $0x2c] sm:$0xf]
    %v598 = vld [vmem:[#allocation7 + $0x30] sm:$0xf]
    %v599 = vld [vmem:[#allocation7 + $0x34] sm:$0xf]
    %v600 = vld [vmem:[#allocation7 + $0x38] sm:$0xf]
    %v601 = vld [vmem:[#allocation7 + $0x3c] sm:$0xf]
    %v618 = vunpack.c.l.b16 %v586
    %v619 = vunpack.c.l.b16 %v587
    %v620 = vunpack.c.l.b16 %v588
    %v621 = vunpack.c.l.b16 %v589
    %v622 = vunpack.c.l.b16 %v590
    %v623 = vunpack.c.l.b16 %v591
    %v624 = vunpack.c.l.b16 %v592
    %v625 = vunpack.c.l.b16 %v593
    %v626 = vunpack.c.l.b16 %v594
    %v627 = vunpack.c.l.b16 %v595
    %v628 = vunpack.c.l.b16 %v596
    %v629 = vunpack.c.l.b16 %v597
    %v630 = vunpack.c.l.b16 %v598
    %v631 = vunpack.c.l.b16 %v599
    %v632 = vunpack.c.l.b16 %v600
    %v633 = vunpack.c.l.b16 %v601
    %v634 = vpack.c.b16 %v619, %v618
    %v635 = vpack.c.b16 %v621, %v620
    %v636 = vpack.c.b16 %v623, %v622
    %v637 = vpack.c.b16 %v625, %v624
    %v638 = vpack.c.b16 %v627, %v626
    %v639 = vpack.c.b16 %v629, %v628
    %v640 = vpack.c.b16 %v631, %v630
    %v641 = vpack.c.b16 %v633, %v632
    %650 = vmatpush.bf16.msra.mxu0 %v641
    %651 = vmatpush.bf16.msra.mxu0 %v640
    %652 = vmatpush.bf16.msra.mxu0 %v639
    %653 = vmatpush.bf16.msra.mxu0 %v638
    %654 = vmatpush.bf16.msra.mxu0 %v637
    %655 = vmatpush.bf16.msra.mxu0 %v636
    %656 = vmatpush.bf16.msra.mxu0 %v635
    %657 = vmatpush.bf16.msra.mxu0 %v634
    %658 = vmatmul.bf16.gmra.mxu0 %v305
    %v659 = vpop.f32.mrf.mxu0
    %v660 = vadd.f32 0.0, %v659
    %v661 = vpop.f32.mrf.mxu0
    %v662 = vadd.f32 0.0, %v661
    %663 = vmatmul.bf16.gmra.mxu0 %v306
    %v664 = vpop.f32.mrf.mxu0
    %v665 = vadd.f32 0.0, %v664
    %v666 = vpop.f32.mrf.mxu0
    %v667 = vadd.f32 0.0, %v666
    %668 = vmatmul.bf16.gmra.mxu0 %v307
    %v669 = vpop.f32.mrf.mxu0
    %v670 = vadd.f32 0.0, %v669
    %v671 = vpop.f32.mrf.mxu0
    %v672 = vadd.f32 0.0, %v671
    %673 = vmatmul.bf16.gmra.mxu0 %v308
    %v674 = vpop.f32.mrf.mxu0
    %v675 = vadd.f32 0.0, %v674
    %v676 = vpop.f32.mrf.mxu0
    %v677 = vadd.f32 0.0, %v676
    %678 = vmatmul.bf16.gmra.mxu0 %v309
    %v679 = vpop.f32.mrf.mxu0
    %v680 = vadd.f32 0.0, %v679
    %v681 = vpop.f32.mrf.mxu0
    %v682 = vadd.f32 0.0, %v681
    %683 = vmatmul.bf16.gmra.mxu0 %v310
    %v684 = vpop.f32.mrf.mxu0
    %v685 = vadd.f32 0.0, %v684
    %v686 = vpop.f32.mrf.mxu0
    %v687 = vadd.f32 0.0, %v686
    %688 = vmatmul.bf16.gmra.mxu0 %v311
    %v689 = vpop.f32.mrf.mxu0
    %v690 = vadd.f32 0.0, %v689
    %v691 = vpop.f32.mrf.mxu0
    %v692 = vadd.f32 0.0, %v691
    %693 = vmatmul.bf16.gmra.mxu0 %v312
    %v694 = vpop.f32.mrf.mxu0
    %v695 = vadd.f32 0.0, %v694
    %v696 = vpop.f32.mrf.mxu0
    %v697 = vadd.f32 0.0, %v696
    %698 = vmatmul.bf16.gmra.mxu0 %v313
    %v699 = vpop.f32.mrf.mxu0
    %v700 = vadd.f32 0.0, %v699
    %v701 = vpop.f32.mrf.mxu0
    %v702 = vadd.f32 0.0, %v701
    %703 = vmatmul.bf16.gmra.mxu0 %v314
    %v704 = vpop.f32.mrf.mxu0
    %v705 = vadd.f32 0.0, %v704
    %v706 = vpop.f32.mrf.mxu0
    %v707 = vadd.f32 0.0, %v706
    %708 = vmatmul.bf16.gmra.mxu0 %v315
    %v709 = vpop.f32.mrf.mxu0
    %v710 = vadd.f32 0.0, %v709
    %v711 = vpop.f32.mrf.mxu0
    %v712 = vadd.f32 0.0, %v711
    %713 = vmatmul.bf16.gmra.mxu0 %v316
    %v714 = vpop.f32.mrf.mxu0
    %v715 = vadd.f32 0.0, %v714
    %v716 = vpop.f32.mrf.mxu0
    %v717 = vadd.f32 0.0, %v716
    %718 = vmatmul.bf16.gmra.mxu0 %v317
    %v719 = vpop.f32.mrf.mxu0
    %v720 = vadd.f32 0.0, %v719
    %v721 = vpop.f32.mrf.mxu0
    %v722 = vadd.f32 0.0, %v721
    %723 = vmatmul.bf16.gmra.mxu0 %v318
    %v724 = vpop.f32.mrf.mxu0
    %v725 = vadd.f32 0.0, %v724
    %v726 = vpop.f32.mrf.mxu0
    %v727 = vadd.f32 0.0, %v726
    %728 = vmatmul.bf16.gmra.mxu0 %v319
    %v729 = vpop.f32.mrf.mxu0
    %v730 = vadd.f32 0.0, %v729
    %v731 = vpop.f32.mrf.mxu0
    %v732 = vadd.f32 0.0, %v731
    %733 = vmatmul.bf16.gmra.mxu0 %v320
    %v734 = vpop.f32.mrf.mxu0
    %v735 = vadd.f32 0.0, %v734
    %v736 = vpop.f32.mrf.mxu0
    %v737 = vadd.f32 0.0, %v736
    %738 = vmatmul.bf16.gmra.mxu0 %v321
    %v739 = vpop.f32.mrf.mxu0
    %v740 = vadd.f32 0.0, %v739
    %v741 = vpop.f32.mrf.mxu0
    %v742 = vadd.f32 0.0, %v741
    %743 = vmatmul.bf16.gmra.mxu0 %v322
    %v744 = vpop.f32.mrf.mxu0
    %v745 = vadd.f32 0.0, %v744
    %v746 = vpop.f32.mrf.mxu0
    %v747 = vadd.f32 0.0, %v746
    %748 = vmatmul.bf16.gmra.mxu0 %v323
    %v749 = vpop.f32.mrf.mxu0
    %v750 = vadd.f32 0.0, %v749
    %v751 = vpop.f32.mrf.mxu0
    %v752 = vadd.f32 0.0, %v751
    %753 = vmatmul.bf16.gmra.mxu0 %v324
    %v754 = vpop.f32.mrf.mxu0
    %v755 = vadd.f32 0.0, %v754
    %v756 = vpop.f32.mrf.mxu0
    %v757 = vadd.f32 0.0, %v756
    %758 = vmatmul.bf16.gmra.mxu0 %v325
    %v759 = vpop.f32.mrf.mxu0
    %v760 = vadd.f32 0.0, %v759
    %v761 = vpop.f32.mrf.mxu0
    %v762 = vadd.f32 0.0, %v761
    %763 = vmatmul.bf16.gmra.mxu0 %v326
    %v764 = vpop.f32.mrf.mxu0
    %v765 = vadd.f32 0.0, %v764
    %v766 = vpop.f32.mrf.mxu0
    %v767 = vadd.f32 0.0, %v766
    %768 = vmatmul.bf16.gmra.mxu0 %v327
    %v769 = vpop.f32.mrf.mxu0
    %v770 = vadd.f32 0.0, %v769
    %v771 = vpop.f32.mrf.mxu0
    %v772 = vadd.f32 0.0, %v771
    %773 = vmatmul.bf16.gmra.mxu0 %v328
    %v774 = vpop.f32.mrf.mxu0
    %v775 = vadd.f32 0.0, %v774
    %v776 = vpop.f32.mrf.mxu0
    %v777 = vadd.f32 0.0, %v776
    %778 = vmatmul.bf16.gmra.mxu0 %v329
    %v779 = vpop.f32.mrf.mxu0
    %v780 = vadd.f32 0.0, %v779
    %v781 = vpop.f32.mrf.mxu0
    %v782 = vadd.f32 0.0, %v781
    %783 = vmatmul.bf16.gmra.mxu0 %v330
    %v784 = vpop.f32.mrf.mxu0
    %v785 = vadd.f32 0.0, %v784
    %v786 = vpop.f32.mrf.mxu0
    %v787 = vadd.f32 0.0, %v786
    %788 = vmatmul.bf16.gmra.mxu0 %v331
    %v789 = vpop.f32.mrf.mxu0
    %v790 = vadd.f32 0.0, %v789
    %v791 = vpop.f32.mrf.mxu0
    %v792 = vadd.f32 0.0, %v791
    %793 = vmatmul.bf16.gmra.mxu0 %v332
    %v794 = vpop.f32.mrf.mxu0
    %v795 = vadd.f32 0.0, %v794
    %v796 = vpop.f32.mrf.mxu0
    %v797 = vadd.f32 0.0, %v796
    %798 = vmatmul.bf16.gmra.mxu0 %v333
    %v799 = vpop.f32.mrf.mxu0
    %v800 = vadd.f32 0.0, %v799
    %v801 = vpop.f32.mrf.mxu0
    %v802 = vadd.f32 0.0, %v801
    %803 = vmatmul.bf16.gmra.mxu0 %v334
    %v804 = vpop.f32.mrf.mxu0
    %v805 = vadd.f32 0.0, %v804
    %v806 = vpop.f32.mrf.mxu0
    %v807 = vadd.f32 0.0, %v806
    %808 = vmatmul.bf16.gmra.mxu0 %v335
    %v809 = vpop.f32.mrf.mxu0
    %v810 = vadd.f32 0.0, %v809
    %v811 = vpop.f32.mrf.mxu0
    %v812 = vadd.f32 0.0, %v811
    %813 = vmatmul.bf16.gmra.mxu0 %v336
    %v814 = vpop.f32.mrf.mxu0
    %v815 = vadd.f32 0.0, %v814
    %v816 = vpop.f32.mrf.mxu0
    %v817 = vadd.f32 0.0, %v816
    %818 = vdwg.mxu0
    %v819 = vpack.c.bf16 %v662, %v660
    %v820 = vpack.c.bf16 %v667, %v665
    %v821 = vpack.c.bf16 %v672, %v670
    %v822 = vpack.c.bf16 %v677, %v675
    %v823 = vpack.c.bf16 %v682, %v680
    %v824 = vpack.c.bf16 %v687, %v685
    %v825 = vpack.c.bf16 %v692, %v690
    %v826 = vpack.c.bf16 %v697, %v695
    %v827 = vpack.c.bf16 %v702, %v700
    %v828 = vpack.c.bf16 %v707, %v705
    %v829 = vpack.c.bf16 %v712, %v710
    %v830 = vpack.c.bf16 %v717, %v715
    %v831 = vpack.c.bf16 %v722, %v720
    %v832 = vpack.c.bf16 %v727, %v725
    %v833 = vpack.c.bf16 %v732, %v730
    %v834 = vpack.c.bf16 %v737, %v735
    %v835 = vpack.c.bf16 %v742, %v740
    %v836 = vpack.c.bf16 %v747, %v745
    %v837 = vpack.c.bf16 %v752, %v750
    %v838 = vpack.c.bf16 %v757, %v755
    %v839 = vpack.c.bf16 %v762, %v760
    %v840 = vpack.c.bf16 %v767, %v765
    %v841 = vpack.c.bf16 %v772, %v770
    %v842 = vpack.c.bf16 %v777, %v775
    %v843 = vpack.c.bf16 %v782, %v780
    %v844 = vpack.c.bf16 %v787, %v785
    %v845 = vpack.c.bf16 %v792, %v790
    %v846 = vpack.c.bf16 %v797, %v795
    %v847 = vpack.c.bf16 %v802, %v800
    %v848 = vpack.c.bf16 %v807, %v805
    %v849 = vpack.c.bf16 %v812, %v810
    %v850 = vpack.c.bf16 %v817, %v815
    %v851 = vld [vmem:[#allocation8] sm:$0xf]
    %v852 = vld [vmem:[#allocation8 + $0x4] sm:$0xf]
    %v853 = vld [vmem:[#allocation8 + $0x8] sm:$0xf]
    %v854 = vld [vmem:[#allocation8 + $0xc] sm:$0xf]
    %v855 = vld [vmem:[#allocation8 + $0x10] sm:$0xf]
    %v856 = vld [vmem:[#allocation8 + $0x14] sm:$0xf]
    %v857 = vld [vmem:[#allocation8 + $0x18] sm:$0xf]
    %v858 = vld [vmem:[#allocation8 + $0x1c] sm:$0xf]
    %v859 = vld [vmem:[#allocation8 + $0x20] sm:$0xf]
    %v860 = vld [vmem:[#allocation8 + $0x24] sm:$0xf]
    %v861 = vld [vmem:[#allocation8 + $0x28] sm:$0xf]
    %v862 = vld [vmem:[#allocation8 + $0x2c] sm:$0xf]
    %v863 = vld [vmem:[#allocation8 + $0x30] sm:$0xf]
    %v864 = vld [vmem:[#allocation8 + $0x34] sm:$0xf]
    %v865 = vld [vmem:[#allocation8 + $0x38] sm:$0xf]
    %v866 = vld [vmem:[#allocation8 + $0x3c] sm:$0xf]
    %v867 = vld [vmem:[%s5] sm:$0x1]
    %v869 = vperm.slane %v867, 0
    %v887 = vunpack.c.l.b16 %v851
    %v888 = vunpack.c.l.b16 %v852
    %v889 = vunpack.c.l.b16 %v853
    %v890 = vunpack.c.l.b16 %v854
    %v891 = vunpack.c.l.b16 %v855
    %v892 = vunpack.c.l.b16 %v856
    %v893 = vunpack.c.l.b16 %v857
    %v894 = vunpack.c.l.b16 %v858
    %v895 = vunpack.c.l.b16 %v859
    %v896 = vunpack.c.l.b16 %v860
    %v897 = vunpack.c.l.b16 %v861
    %v898 = vunpack.c.l.b16 %v862
    %v899 = vunpack.c.l.b16 %v863
    %v900 = vunpack.c.l.b16 %v864
    %v901 = vunpack.c.l.b16 %v865
    %v902 = vunpack.c.l.b16 %v866
    %v903 = vpack.c.b16 %v888, %v887
    %v904 = vpack.c.b16 %v890, %v889
    %v905 = vpack.c.b16 %v892, %v891
    %v906 = vpack.c.b16 %v894, %v893
    %v907 = vpack.c.b16 %v896, %v895
    %v908 = vpack.c.b16 %v898, %v897
    %v909 = vpack.c.b16 %v900, %v899
    %v910 = vpack.c.b16 %v902, %v901
    %919 = vmatpush.bf16.msra.mxu0 %v910
    %920 = vmatpush.bf16.msra.mxu0 %v909
    %921 = vmatpush.bf16.msra.mxu0 %v908
    %922 = vmatpush.bf16.msra.mxu0 %v907
    %923 = vmatpush.bf16.msra.mxu0 %v906
    %924 = vmatpush.bf16.msra.mxu0 %v905
    %925 = vmatpush.bf16.msra.mxu0 %v904
    %926 = vmatpush.bf16.msra.mxu0 %v903
    %927 = vmatmul.bf16.gmra.mxu0 %v819
    %v928 = vpop.f32.mrf.mxu0
    %v929 = vadd.f32 %v869, %v928
    %v930 = vpop.f32.mrf.mxu0
    %v931 = vadd.f32 %v869, %v930
    %932 = vmatmul.bf16.gmra.mxu0 %v820
    %v933 = vpop.f32.mrf.mxu0
    %v934 = vadd.f32 %v869, %v933
    %v935 = vpop.f32.mrf.mxu0
    %v936 = vadd.f32 %v869, %v935
    %937 = vmatmul.bf16.gmra.mxu0 %v821
    %v938 = vpop.f32.mrf.mxu0
    %v939 = vadd.f32 %v869, %v938
    %v940 = vpop.f32.mrf.mxu0
    %v941 = vadd.f32 %v869, %v940
    %942 = vmatmul.bf16.gmra.mxu0 %v822
    %v943 = vpop.f32.mrf.mxu0
    %v944 = vadd.f32 %v869, %v943
    %v945 = vpop.f32.mrf.mxu0
    %v946 = vadd.f32 %v869, %v945
    %947 = vmatmul.bf16.gmra.mxu0 %v823
    %v948 = vpop.f32.mrf.mxu0
    %v949 = vadd.f32 %v869, %v948
    %v950 = vpop.f32.mrf.mxu0
    %v951 = vadd.f32 %v869, %v950
    %952 = vmatmul.bf16.gmra.mxu0 %v824
    %v953 = vpop.f32.mrf.mxu0
    %v954 = vadd.f32 %v869, %v953
    %v955 = vpop.f32.mrf.mxu0
    %v956 = vadd.f32 %v869, %v955
    %957 = vmatmul.bf16.gmra.mxu0 %v825
    %v958 = vpop.f32.mrf.mxu0
    %v959 = vadd.f32 %v869, %v958
    %v960 = vpop.f32.mrf.mxu0
    %v961 = vadd.f32 %v869, %v960
    %962 = vmatmul.bf16.gmra.mxu0 %v826
    %v963 = vpop.f32.mrf.mxu0
    %v964 = vadd.f32 %v869, %v963
    %v965 = vpop.f32.mrf.mxu0
    %v966 = vadd.f32 %v869, %v965
    %967 = vmatmul.bf16.gmra.mxu0 %v827
    %v968 = vpop.f32.mrf.mxu0
    %v969 = vadd.f32 %v869, %v968
    %v970 = vpop.f32.mrf.mxu0
    %v971 = vadd.f32 %v869, %v970
    %972 = vmatmul.bf16.gmra.mxu0 %v828
    %v973 = vpop.f32.mrf.mxu0
    %v974 = vadd.f32 %v869, %v973
    %v975 = vpop.f32.mrf.mxu0
    %v976 = vadd.f32 %v869, %v975
    %977 = vmatmul.bf16.gmra.mxu0 %v829
    %v978 = vpop.f32.mrf.mxu0
    %v979 = vadd.f32 %v869, %v978
    %v980 = vpop.f32.mrf.mxu0
    %v981 = vadd.f32 %v869, %v980
    %982 = vmatmul.bf16.gmra.mxu0 %v830
    %v983 = vpop.f32.mrf.mxu0
    %v984 = vadd.f32 %v869, %v983
    %v985 = vpop.f32.mrf.mxu0
    %v986 = vadd.f32 %v869, %v985
    %987 = vmatmul.bf16.gmra.mxu0 %v831
    %v988 = vpop.f32.mrf.mxu0
    %v989 = vadd.f32 %v869, %v988
    %v990 = vpop.f32.mrf.mxu0
    %v991 = vadd.f32 %v869, %v990
    %992 = vmatmul.bf16.gmra.mxu0 %v832
    %v993 = vpop.f32.mrf.mxu0
    %v994 = vadd.f32 %v869, %v993
    %v995 = vpop.f32.mrf.mxu0
    %v996 = vadd.f32 %v869, %v995
    %997 = vmatmul.bf16.gmra.mxu0 %v833
    %v998 = vpop.f32.mrf.mxu0
    %v999 = vadd.f32 %v869, %v998
    %v1000 = vpop.f32.mrf.mxu0
    %v1001 = vadd.f32 %v869, %v1000
    %1002 = vmatmul.bf16.gmra.mxu0 %v834
    %v1003 = vpop.f32.mrf.mxu0
    %v1004 = vadd.f32 %v869, %v1003
    %v1005 = vpop.f32.mrf.mxu0
    %v1006 = vadd.f32 %v869, %v1005
    %1007 = vmatmul.bf16.gmra.mxu0 %v835
    %v1008 = vpop.f32.mrf.mxu0
    %v1009 = vadd.f32 %v869, %v1008
    %v1010 = vpop.f32.mrf.mxu0
    %v1011 = vadd.f32 %v869, %v1010
    %1012 = vmatmul.bf16.gmra.mxu0 %v836
    %v1013 = vpop.f32.mrf.mxu0
    %v1014 = vadd.f32 %v869, %v1013
    %v1015 = vpop.f32.mrf.mxu0
    %v1016 = vadd.f32 %v869, %v1015
    %1017 = vmatmul.bf16.gmra.mxu0 %v837
    %v1018 = vpop.f32.mrf.mxu0
    %v1019 = vadd.f32 %v869, %v1018
    %v1020 = vpop.f32.mrf.mxu0
    %v1021 = vadd.f32 %v869, %v1020
    %1022 = vmatmul.bf16.gmra.mxu0 %v838
    %v1023 = vpop.f32.mrf.mxu0
    %v1024 = vadd.f32 %v869, %v1023
    %v1025 = vpop.f32.mrf.mxu0
    %v1026 = vadd.f32 %v869, %v1025
    %1027 = vmatmul.bf16.gmra.mxu0 %v839
    %v1028 = vpop.f32.mrf.mxu0
    %v1029 = vadd.f32 %v869, %v1028
    %v1030 = vpop.f32.mrf.mxu0
    %v1031 = vadd.f32 %v869, %v1030
    %1032 = vmatmul.bf16.gmra.mxu0 %v840
    %v1033 = vpop.f32.mrf.mxu0
    %v1034 = vadd.f32 %v869, %v1033
    %v1035 = vpop.f32.mrf.mxu0
    %v1036 = vadd.f32 %v869, %v1035
    %1037 = vmatmul.bf16.gmra.mxu0 %v841
    %v1038 = vpop.f32.mrf.mxu0
    %v1039 = vadd.f32 %v869, %v1038
    %v1040 = vpop.f32.mrf.mxu0
    %v1041 = vadd.f32 %v869, %v1040
    %1042 = vmatmul.bf16.gmra.mxu0 %v842
    %v1043 = vpop.f32.mrf.mxu0
    %v1044 = vadd.f32 %v869, %v1043
    %v1045 = vpop.f32.mrf.mxu0
    %v1046 = vadd.f32 %v869, %v1045
    %1047 = vmatmul.bf16.gmra.mxu0 %v843
    %v1048 = vpop.f32.mrf.mxu0
    %v1049 = vadd.f32 %v869, %v1048
    %v1050 = vpop.f32.mrf.mxu0
    %v1051 = vadd.f32 %v869, %v1050
    %1052 = vmatmul.bf16.gmra.mxu0 %v844
    %v1053 = vpop.f32.mrf.mxu0
    %v1054 = vadd.f32 %v869, %v1053
    %v1055 = vpop.f32.mrf.mxu0
    %v1056 = vadd.f32 %v869, %v1055
    %1057 = vmatmul.bf16.gmra.mxu0 %v845
    %v1058 = vpop.f32.mrf.mxu0
    %v1059 = vadd.f32 %v869, %v1058
    %v1060 = vpop.f32.mrf.mxu0
    %v1061 = vadd.f32 %v869, %v1060
    %1062 = vmatmul.bf16.gmra.mxu0 %v846
    %v1063 = vpop.f32.mrf.mxu0
    %v1064 = vadd.f32 %v869, %v1063
    %v1065 = vpop.f32.mrf.mxu0
    %v1066 = vadd.f32 %v869, %v1065
    %1067 = vmatmul.bf16.gmra.mxu0 %v847
    %v1068 = vpop.f32.mrf.mxu0
    %v1069 = vadd.f32 %v869, %v1068
    %v1070 = vpop.f32.mrf.mxu0
    %v1071 = vadd.f32 %v869, %v1070
    %1072 = vmatmul.bf16.gmra.mxu0 %v848
    %v1073 = vpop.f32.mrf.mxu0
    %v1074 = vadd.f32 %v869, %v1073
    %v1075 = vpop.f32.mrf.mxu0
    %v1076 = vadd.f32 %v869, %v1075
    %1077 = vmatmul.bf16.gmra.mxu0 %v849
    %v1078 = vpop.f32.mrf.mxu0
    %v1079 = vadd.f32 %v869, %v1078
    %v1080 = vpop.f32.mrf.mxu0
    %v1081 = vadd.f32 %v869, %v1080
    %1082 = vmatmul.bf16.gmra.mxu0 %v850
    %v1083 = vpop.f32.mrf.mxu0
    %v1084 = vadd.f32 %v869, %v1083
    %v1085 = vpop.f32.mrf.mxu0
    %v1086 = vadd.f32 %v869, %v1085
    %1087 = vdwg.mxu0
    %1088 = vst [vmem:[#allocation10] sm:$0xff] %v427
    %1089 = vst [vmem:[#allocation10 + $0x8] sm:$0xff] %v429
    %1090 = vst [vmem:[#allocation10 + $0x10] sm:$0xff] %v432
    %1091 = vst [vmem:[#allocation10 + $0x18] sm:$0xff] %v434
    %1092 = vst [vmem:[#allocation10 + $0x20] sm:$0xff] %v437
    %1093 = vst [vmem:[#allocation10 + $0x28] sm:$0xff] %v439
    %1094 = vst [vmem:[#allocation10 + $0x30] sm:$0xff] %v442
    %1095 = vst [vmem:[#allocation10 + $0x38] sm:$0xff] %v444
    %1096 = vst [vmem:[#allocation10 + $0x40] sm:$0xff] %v447
    %1097 = vst [vmem:[#allocation10 + $0x48] sm:$0xff] %v449
    %1098 = vst [vmem:[#allocation10 + $0x50] sm:$0xff] %v452
    %1099 = vst [vmem:[#allocation10 + $0x58] sm:$0xff] %v454
    %1100 = vst [vmem:[#allocation10 + $0x60] sm:$0xff] %v457
    %1101 = vst [vmem:[#allocation10 + $0x68] sm:$0xff] %v459
    %1102 = vst [vmem:[#allocation10 + $0x70] sm:$0xff] %v462
    %1103 = vst [vmem:[#allocation10 + $0x78] sm:$0xff] %v464
    %1104 = vst [vmem:[#allocation10 + $0x80] sm:$0xff] %v467
    %1105 = vst [vmem:[#allocation10 + $0x88] sm:$0xff] %v469
    %1106 = vst [vmem:[#allocation10 + $0x90] sm:$0xff] %v472
    %1107 = vst [vmem:[#allocation10 + $0x98] sm:$0xff] %v474
    %1108 = vst [vmem:[#allocation10 + $0xa0] sm:$0xff] %v477
    %1109 = vst [vmem:[#allocation10 + $0xa8] sm:$0xff] %v479
    %1110 = vst [vmem:[#allocation10 + $0xb0] sm:$0xff] %v482
    %1111 = vst [vmem:[#allocation10 + $0xb8] sm:$0xff] %v484
    %1112 = vst [vmem:[#allocation10 + $0xc0] sm:$0xff] %v487
    %1113 = vst [vmem:[#allocation10 + $0xc8] sm:$0xff] %v489
    %1114 = vst [vmem:[#allocation10 + $0xd0] sm:$0xff] %v492
    %1115 = vst [vmem:[#allocation10 + $0xd8] sm:$0xff] %v494
    %1116 = vst [vmem:[#allocation10 + $0xe0] sm:$0xff] %v497
    %1117 = vst [vmem:[#allocation10 + $0xe8] sm:$0xff] %v499
    %1118 = vst [vmem:[#allocation10 + $0xf0] sm:$0xff] %v502
    %1119 = vst [vmem:[#allocation10 + $0xf8] sm:$0xff] %v504
    %1120 = vst [vmem:[#allocation10 + $0x100] sm:$0xff] %v507
    %1121 = vst [vmem:[#allocation10 + $0x108] sm:$0xff] %v509
    %1122 = vst [vmem:[#allocation10 + $0x110] sm:$0xff] %v512
    %1123 = vst [vmem:[#allocation10 + $0x118] sm:$0xff] %v514
    %1124 = vst [vmem:[#allocation10 + $0x120] sm:$0xff] %v517
    %1125 = vst [vmem:[#allocation10 + $0x128] sm:$0xff] %v519
    %1126 = vst [vmem:[#allocation10 + $0x130] sm:$0xff] %v522
    %1127 = vst [vmem:[#allocation10 + $0x138] sm:$0xff] %v524
    %1128 = vst [vmem:[#allocation10 + $0x140] sm:$0xff] %v527
    %1129 = vst [vmem:[#allocation10 + $0x148] sm:$0xff] %v529
    %1130 = vst [vmem:[#allocation10 + $0x150] sm:$0xff] %v532
    %1131 = vst [vmem:[#allocation10 + $0x158] sm:$0xff] %v534
    %1132 = vst [vmem:[#allocation10 + $0x160] sm:$0xff] %v537
    %1133 = vst [vmem:[#allocation10 + $0x168] sm:$0xff] %v539
    %1134 = vst [vmem:[#allocation10 + $0x170] sm:$0xff] %v542
    %1135 = vst [vmem:[#allocation10 + $0x178] sm:$0xff] %v544
    %1136 = vst [vmem:[#allocation10 + $0x180] sm:$0xff] %v547
    %1137 = vst [vmem:[#allocation10 + $0x188] sm:$0xff] %v549
    %1138 = vst [vmem:[#allocation10 + $0x190] sm:$0xff] %v552
    %1139 = vst [vmem:[#allocation10 + $0x198] sm:$0xff] %v554
    %1140 = vst [vmem:[#allocation10 + $0x1a0] sm:$0xff] %v557
    %1141 = vst [vmem:[#allocation10 + $0x1a8] sm:$0xff] %v559
    %1142 = vst [vmem:[#allocation10 + $0x1b0] sm:$0xff] %v562
    %1143 = vst [vmem:[#allocation10 + $0x1b8] sm:$0xff] %v564
    %1144 = vst [vmem:[#allocation10 + $0x1c0] sm:$0xff] %v567
    %1145 = vst [vmem:[#allocation10 + $0x1c8] sm:$0xff] %v569
    %1146 = vst [vmem:[#allocation10 + $0x1d0] sm:$0xff] %v572
    %1147 = vst [vmem:[#allocation10 + $0x1d8] sm:$0xff] %v574
    %1148 = vst [vmem:[#allocation10 + $0x1e0] sm:$0xff] %v577
    %1149 = vst [vmem:[#allocation10 + $0x1e8] sm:$0xff] %v579
    %1150 = vst [vmem:[#allocation10 + $0x1f0] sm:$0xff] %v582
    %1151 = vst [vmem:[#allocation10 + $0x1f8] sm:$0xff] %v584
    %s1152 = smul.u32 0, 512
    %v1153 = vlaneseq
    %v1154 = vshrl.u32 %v1153, 7
    %v1155 = vadd.s32 %v1154, 8
    %v1156 = vadd.s32 %v1154, 16
    %v1157 = vadd.s32 %v1154, 24
    %v1158 = vadd.s32 %v1154, 32
    %v1159 = vadd.s32 %v1154, 40
    %v1160 = vadd.s32 %v1154, 48
    %v1161 = vadd.s32 %v1154, 56
    %v1162 = vadd.s32 %v1154, 64
    %v1163 = vadd.s32 %v1154, 72
    %v1164 = vadd.s32 %v1154, 80
    %v1165 = vadd.s32 %v1154, 88
    %v1166 = vadd.s32 %v1154, 96
    %v1167 = vadd.s32 %v1154, 104
    %v1168 = vadd.s32 %v1154, 112
    %v1169 = vadd.s32 %v1154, 120
    %v1170 = vadd.s32 %v1154, 128
    %v1171 = vadd.s32 %v1154, 136
    %v1172 = vadd.s32 %v1154, 144
    %v1173 = vadd.s32 %v1154, 152
    %v1174 = vadd.s32 %v1154, 160
    %v1175 = vadd.s32 %v1154, 168
    %v1176 = vadd.s32 %v1154, 176
    %v1177 = vadd.s32 %v1154, 184
    %v1178 = vadd.s32 %v1154, 192
    %v1179 = vadd.s32 %v1154, 200
    %v1180 = vadd.s32 %v1154, 208
    %v1181 = vadd.s32 %v1154, 216
    %v1182 = vadd.s32 %v1154, 224
    %v1183 = vadd.s32 %v1154, 232
    %v1184 = vadd.s32 %v1154, 240
    %v1185 = vadd.s32 %v1154, 248
    %v1186 = vadd.s32 %v1154, 256
    %v1187 = vadd.s32 %v1154, 264
    %v1188 = vadd.s32 %v1154, 272
    %v1189 = vadd.s32 %v1154, 280
    %v1190 = vadd.s32 %v1154, 288
    %v1191 = vadd.s32 %v1154, 296
    %v1192 = vadd.s32 %v1154, 304
    %v1193 = vadd.s32 %v1154, 312
    %v1194 = vadd.s32 %v1154, 320
    %v1195 = vadd.s32 %v1154, 328
    %v1196 = vadd.s32 %v1154, 336
    %v1197 = vadd.s32 %v1154, 344
    %v1198 = vadd.s32 %v1154, 352
    %v1199 = vadd.s32 %v1154, 360
    %v1200 = vadd.s32 %v1154, 368
    %v1201 = vadd.s32 %v1154, 376
    %v1202 = vadd.s32 %v1154, 384
    %v1203 = vadd.s32 %v1154, 392
    %v1204 = vadd.s32 %v1154, 400
    %v1205 = vadd.s32 %v1154, 408
    %v1206 = vadd.s32 %v1154, 416
    %v1207 = vadd.s32 %v1154, 424
    %v1208 = vadd.s32 %v1154, 432
    %v1209 = vadd.s32 %v1154, 440
    %v1210 = vadd.s32 %v1154, 448
    %v1211 = vadd.s32 %v1154, 456
    %v1212 = vadd.s32 %v1154, 464
    %v1213 = vadd.s32 %v1154, 472
    %v1214 = vadd.s32 %v1154, 480
    %v1215 = vadd.s32 %v1154, 488
    %v1216 = vadd.s32 %v1154, 496
    %v1217 = vadd.s32 %v1154, 504
    %v1218 = vstv %s1152
    %v1219 = vadd.s32 %v1218, %v1154
    %v1220 = vadd.s32 %v1218, %v1155
    %v1221 = vadd.s32 %v1218, %v1156
    %v1222 = vadd.s32 %v1218, %v1157
    %v1223 = vadd.s32 %v1218, %v1158
    %v1224 = vadd.s32 %v1218, %v1159
    %v1225 = vadd.s32 %v1218, %v1160
    %v1226 = vadd.s32 %v1218, %v1161
    %v1227 = vadd.s32 %v1218, %v1162
    %v1228 = vadd.s32 %v1218, %v1163
    %v1229 = vadd.s32 %v1218, %v1164
    %v1230 = vadd.s32 %v1218, %v1165
    %v1231 = vadd.s32 %v1218, %v1166
    %v1232 = vadd.s32 %v1218, %v1167
    %v1233 = vadd.s32 %v1218, %v1168
    %v1234 = vadd.s32 %v1218, %v1169
    %v1235 = vadd.s32 %v1218, %v1170
    %v1236 = vadd.s32 %v1218, %v1171
    %v1237 = vadd.s32 %v1218, %v1172
    %v1238 = vadd.s32 %v1218, %v1173
    %v1239 = vadd.s32 %v1218, %v1174
    %v1240 = vadd.s32 %v1218, %v1175
    %v1241 = vadd.s32 %v1218, %v1176
    %v1242 = vadd.s32 %v1218, %v1177
    %v1243 = vadd.s32 %v1218, %v1178
    %v1244 = vadd.s32 %v1218, %v1179
    %v1245 = vadd.s32 %v1218, %v1180
    %v1246 = vadd.s32 %v1218, %v1181
    %v1247 = vadd.s32 %v1218, %v1182
    %v1248 = vadd.s32 %v1218, %v1183
    %v1249 = vadd.s32 %v1218, %v1184
    %v1250 = vadd.s32 %v1218, %v1185
    %v1251 = vadd.s32 %v1218, %v1186
    %v1252 = vadd.s32 %v1218, %v1187
    %v1253 = vadd.s32 %v1218, %v1188
    %v1254 = vadd.s32 %v1218, %v1189
    %v1255 = vadd.s32 %v1218, %v1190
    %v1256 = vadd.s32 %v1218, %v1191
    %v1257 = vadd.s32 %v1218, %v1192
    %v1258 = vadd.s32 %v1218, %v1193
    %v1259 = vadd.s32 %v1218, %v1194
    %v1260 = vadd.s32 %v1218, %v1195
    %v1261 = vadd.s32 %v1218, %v1196
    %v1262 = vadd.s32 %v1218, %v1197
    %v1263 = vadd.s32 %v1218, %v1198
    %v1264 = vadd.s32 %v1218, %v1199
    %v1265 = vadd.s32 %v1218, %v1200
    %v1266 = vadd.s32 %v1218, %v1201
    %v1267 = vadd.s32 %v1218, %v1202
    %v1268 = vadd.s32 %v1218, %v1203
    %v1269 = vadd.s32 %v1218, %v1204
    %v1270 = vadd.s32 %v1218, %v1205
    %v1271 = vadd.s32 %v1218, %v1206
    %v1272 = vadd.s32 %v1218, %v1207
    %v1273 = vadd.s32 %v1218, %v1208
    %v1274 = vadd.s32 %v1218, %v1209
    %v1275 = vadd.s32 %v1218, %v1210
    %v1276 = vadd.s32 %v1218, %v1211
    %v1277 = vadd.s32 %v1218, %v1212
    %v1278 = vadd.s32 %v1218, %v1213
    %v1279 = vadd.s32 %v1218, %v1214
    %v1280 = vadd.s32 %v1218, %v1215
    %v1281 = vadd.s32 %v1218, %v1216
    %v1282 = vadd.s32 %v1218, %v1217
    %vm1283 = vcmp.lt.s32.totalorder %v1219, 512
    %vm1284 = vcmp.lt.s32.totalorder %v1220, 512
    %vm1285 = vcmp.lt.s32.totalorder %v1221, 512
    %vm1286 = vcmp.lt.s32.totalorder %v1222, 512
    %vm1287 = vcmp.lt.s32.totalorder %v1223, 512
    %vm1288 = vcmp.lt.s32.totalorder %v1224, 512
    %vm1289 = vcmp.lt.s32.totalorder %v1225, 512
    %vm1290 = vcmp.lt.s32.totalorder %v1226, 512
    %vm1291 = vcmp.lt.s32.totalorder %v1227, 512
    %vm1292 = vcmp.lt.s32.totalorder %v1228, 512
    %vm1293 = vcmp.lt.s32.totalorder %v1229, 512
    %vm1294 = vcmp.lt.s32.totalorder %v1230, 512
    %vm1295 = vcmp.lt.s32.totalorder %v1231, 512
    %vm1296 = vcmp.lt.s32.totalorder %v1232, 512
    %vm1297 = vcmp.lt.s32.totalorder %v1233, 512
    %vm1298 = vcmp.lt.s32.totalorder %v1234, 512
    %vm1299 = vcmp.lt.s32.totalorder %v1235, 512
    %vm1300 = vcmp.lt.s32.totalorder %v1236, 512
    %vm1301 = vcmp.lt.s32.totalorder %v1237, 512
    %vm1302 = vcmp.lt.s32.totalorder %v1238, 512
    %vm1303 = vcmp.lt.s32.totalorder %v1239, 512
    %vm1304 = vcmp.lt.s32.totalorder %v1240, 512
    %vm1305 = vcmp.lt.s32.totalorder %v1241, 512
    %vm1306 = vcmp.lt.s32.totalorder %v1242, 512
    %vm1307 = vcmp.lt.s32.totalorder %v1243, 512
    %vm1308 = vcmp.lt.s32.totalorder %v1244, 512
    %vm1309 = vcmp.lt.s32.totalorder %v1245, 512
    %vm1310 = vcmp.lt.s32.totalorder %v1246, 512
    %vm1311 = vcmp.lt.s32.totalorder %v1247, 512
    %vm1312 = vcmp.lt.s32.totalorder %v1248, 512
    %vm1313 = vcmp.lt.s32.totalorder %v1249, 512
    %vm1314 = vcmp.lt.s32.totalorder %v1250, 512
    %vm1315 = vcmp.lt.s32.totalorder %v1251, 512
    %vm1316 = vcmp.lt.s32.totalorder %v1252, 512
    %vm1317 = vcmp.lt.s32.totalorder %v1253, 512
    %vm1318 = vcmp.lt.s32.totalorder %v1254, 512
    %vm1319 = vcmp.lt.s32.totalorder %v1255, 512
    %vm1320 = vcmp.lt.s32.totalorder %v1256, 512
    %vm1321 = vcmp.lt.s32.totalorder %v1257, 512
    %vm1322 = vcmp.lt.s32.totalorder %v1258, 512
    %vm1323 = vcmp.lt.s32.totalorder %v1259, 512
    %vm1324 = vcmp.lt.s32.totalorder %v1260, 512
    %vm1325 = vcmp.lt.s32.totalorder %v1261, 512
    %vm1326 = vcmp.lt.s32.totalorder %v1262, 512
    %vm1327 = vcmp.lt.s32.totalorder %v1263, 512
    %vm1328 = vcmp.lt.s32.totalorder %v1264, 512
    %vm1329 = vcmp.lt.s32.totalorder %v1265, 512
    %vm1330 = vcmp.lt.s32.totalorder %v1266, 512
    %vm1331 = vcmp.lt.s32.totalorder %v1267, 512
    %vm1332 = vcmp.lt.s32.totalorder %v1268, 512
    %vm1333 = vcmp.lt.s32.totalorder %v1269, 512
    %vm1334 = vcmp.lt.s32.totalorder %v1270, 512
    %vm1335 = vcmp.lt.s32.totalorder %v1271, 512
    %vm1336 = vcmp.lt.s32.totalorder %v1272, 512
    %vm1337 = vcmp.lt.s32.totalorder %v1273, 512
    %vm1338 = vcmp.lt.s32.totalorder %v1274, 512
    %vm1339 = vcmp.lt.s32.totalorder %v1275, 512
    %vm1340 = vcmp.lt.s32.totalorder %v1276, 512
    %vm1341 = vcmp.lt.s32.totalorder %v1277, 512
    %vm1342 = vcmp.lt.s32.totalorder %v1278, 512
    %vm1343 = vcmp.lt.s32.totalorder %v1279, 512
    %vm1344 = vcmp.lt.s32.totalorder %v1280, 512
    %vm1345 = vcmp.lt.s32.totalorder %v1281, 512
    %vm1346 = vcmp.lt.s32.totalorder %v1282, 512
    %v1347 = vsel %vm1283, 1, 0
    %v1348 = vsel %vm1284, 1, 0
    %v1349 = vsel %vm1285, 1, 0
    %v1350 = vsel %vm1286, 1, 0
    %v1351 = vsel %vm1287, 1, 0
    %v1352 = vsel %vm1288, 1, 0
    %v1353 = vsel %vm1289, 1, 0
    %v1354 = vsel %vm1290, 1, 0
    %v1355 = vsel %vm1291, 1, 0
    %v1356 = vsel %vm1292, 1, 0
    %v1357 = vsel %vm1293, 1, 0
    %v1358 = vsel %vm1294, 1, 0
    %v1359 = vsel %vm1295, 1, 0
    %v1360 = vsel %vm1296, 1, 0
    %v1361 = vsel %vm1297, 1, 0
    %v1362 = vsel %vm1298, 1, 0
    %v1363 = vsel %vm1299, 1, 0
    %v1364 = vsel %vm1300, 1, 0
    %v1365 = vsel %vm1301, 1, 0
    %v1366 = vsel %vm1302, 1, 0
    %v1367 = vsel %vm1303, 1, 0
    %v1368 = vsel %vm1304, 1, 0
    %v1369 = vsel %vm1305, 1, 0
    %v1370 = vsel %vm1306, 1, 0
    %v1371 = vsel %vm1307, 1, 0
    %v1372 = vsel %vm1308, 1, 0
    %v1373 = vsel %vm1309, 1, 0
    %v1374 = vsel %vm1310, 1, 0
    %v1375 = vsel %vm1311, 1, 0
    %v1376 = vsel %vm1312, 1, 0
    %v1377 = vsel %vm1313, 1, 0
    %v1378 = vsel %vm1314, 1, 0
    %v1379 = vsel %vm1315, 1, 0
    %v1380 = vsel %vm1316, 1, 0
    %v1381 = vsel %vm1317, 1, 0
    %v1382 = vsel %vm1318, 1, 0
    %v1383 = vsel %vm1319, 1, 0
    %v1384 = vsel %vm1320, 1, 0
    %v1385 = vsel %vm1321, 1, 0
    %v1386 = vsel %vm1322, 1, 0
    %v1387 = vsel %vm1323, 1, 0
    %v1388 = vsel %vm1324, 1, 0
    %v1389 = vsel %vm1325, 1, 0
    %v1390 = vsel %vm1326, 1, 0
    %v1391 = vsel %vm1327, 1, 0
    %v1392 = vsel %vm1328, 1, 0
    %v1393 = vsel %vm1329, 1, 0
    %v1394 = vsel %vm1330, 1, 0
    %v1395 = vsel %vm1331, 1, 0
    %v1396 = vsel %vm1332, 1, 0
    %v1397 = vsel %vm1333, 1, 0
    %v1398 = vsel %vm1334, 1, 0
    %v1399 = vsel %vm1335, 1, 0
    %v1400 = vsel %vm1336, 1, 0
    %v1401 = vsel %vm1337, 1, 0
    %v1402 = vsel %vm1338, 1, 0
    %v1403 = vsel %vm1339, 1, 0
    %v1404 = vsel %vm1340, 1, 0
    %v1405 = vsel %vm1341, 1, 0
    %v1406 = vsel %vm1342, 1, 0
    %v1407 = vsel %vm1343, 1, 0
    %v1408 = vsel %vm1344, 1, 0
    %v1409 = vsel %vm1345, 1, 0
    %v1410 = vsel %vm1346, 1, 0
    %v1411 = vcvt.s32.f32 %v1347
    %v1412 = vcvt.s32.f32 %v1348
    %v1413 = vcvt.s32.f32 %v1349
    %v1414 = vcvt.s32.f32 %v1350
    %v1415 = vcvt.s32.f32 %v1351
    %v1416 = vcvt.s32.f32 %v1352
    %v1417 = vcvt.s32.f32 %v1353
    %v1418 = vcvt.s32.f32 %v1354
    %v1419 = vcvt.s32.f32 %v1355
    %v1420 = vcvt.s32.f32 %v1356
    %v1421 = vcvt.s32.f32 %v1357
    %v1422 = vcvt.s32.f32 %v1358
    %v1423 = vcvt.s32.f32 %v1359
    %v1424 = vcvt.s32.f32 %v1360
    %v1425 = vcvt.s32.f32 %v1361
    %v1426 = vcvt.s32.f32 %v1362
    %v1427 = vcvt.s32.f32 %v1363
    %v1428 = vcvt.s32.f32 %v1364
    %v1429 = vcvt.s32.f32 %v1365
    %v1430 = vcvt.s32.f32 %v1366
    %v1431 = vcvt.s32.f32 %v1367
    %v1432 = vcvt.s32.f32 %v1368
    %v1433 = vcvt.s32.f32 %v1369
    %v1434 = vcvt.s32.f32 %v1370
    %v1435 = vcvt.s32.f32 %v1371
    %v1436 = vcvt.s32.f32 %v1372
    %v1437 = vcvt.s32.f32 %v1373
    %v1438 = vcvt.s32.f32 %v1374
    %v1439 = vcvt.s32.f32 %v1375
    %v1440 = vcvt.s32.f32 %v1376
    %v1441 = vcvt.s32.f32 %v1377
    %v1442 = vcvt.s32.f32 %v1378
    %v1443 = vcvt.s32.f32 %v1379
    %v1444 = vcvt.s32.f32 %v1380
    %v1445 = vcvt.s32.f32 %v1381
    %v1446 = vcvt.s32.f32 %v1382
    %v1447 = vcvt.s32.f32 %v1383
    %v1448 = vcvt.s32.f32 %v1384
    %v1449 = vcvt.s32.f32 %v1385
    %v1450 = vcvt.s32.f32 %v1386
    %v1451 = vcvt.s32.f32 %v1387
    %v1452 = vcvt.s32.f32 %v1388
    %v1453 = vcvt.s32.f32 %v1389
    %v1454 = vcvt.s32.f32 %v1390
    %v1455 = vcvt.s32.f32 %v1391
    %v1456 = vcvt.s32.f32 %v1392
    %v1457 = vcvt.s32.f32 %v1393
    %v1458 = vcvt.s32.f32 %v1394
    %v1459 = vcvt.s32.f32 %v1395
    %v1460 = vcvt.s32.f32 %v1396
    %v1461 = vcvt.s32.f32 %v1397
    %v1462 = vcvt.s32.f32 %v1398
    %v1463 = vcvt.s32.f32 %v1399
    %v1464 = vcvt.s32.f32 %v1400
    %v1465 = vcvt.s32.f32 %v1401
    %v1466 = vcvt.s32.f32 %v1402
    %v1467 = vcvt.s32.f32 %v1403
    %v1468 = vcvt.s32.f32 %v1404
    %v1469 = vcvt.s32.f32 %v1405
    %v1470 = vcvt.s32.f32 %v1406
    %v1471 = vcvt.s32.f32 %v1407
    %v1472 = vcvt.s32.f32 %v1408
    %v1473 = vcvt.s32.f32 %v1409
    %v1474 = vcvt.s32.f32 %v1410
    %v1475 = vmul.f32 %v427, %v1411
    %v1476 = vmul.f32 %v429, %v1412
    %v1477 = vmul.f32 %v432, %v1413
    %v1478 = vmul.f32 %v434, %v1414
    %v1479 = vmul.f32 %v437, %v1415
    %v1480 = vmul.f32 %v439, %v1416
    %v1481 = vmul.f32 %v442, %v1417
    %v1482 = vmul.f32 %v444, %v1418
    %v1483 = vmul.f32 %v447, %v1419
    %v1484 = vmul.f32 %v449, %v1420
    %v1485 = vmul.f32 %v452, %v1421
    %v1486 = vmul.f32 %v454, %v1422
    %v1487 = vmul.f32 %v457, %v1423
    %v1488 = vmul.f32 %v459, %v1424
    %v1489 = vmul.f32 %v462, %v1425
    %v1490 = vmul.f32 %v464, %v1426
    %v1491 = vmul.f32 %v467, %v1427
    %v1492 = vmul.f32 %v469, %v1428
    %v1493 = vmul.f32 %v472, %v1429
    %v1494 = vmul.f32 %v474, %v1430
    %v1495 = vmul.f32 %v477, %v1431
    %v1496 = vmul.f32 %v479, %v1432
    %v1497 = vmul.f32 %v482, %v1433
    %v1498 = vmul.f32 %v484, %v1434
    %v1499 = vmul.f32 %v487, %v1435
    %v1500 = vmul.f32 %v489, %v1436
    %v1501 = vmul.f32 %v492, %v1437
    %v1502 = vmul.f32 %v494, %v1438
    %v1503 = vmul.f32 %v497, %v1439
    %v1504 = vmul.f32 %v499, %v1440
    %v1505 = vmul.f32 %v502, %v1441
    %v1506 = vmul.f32 %v504, %v1442
    %v1507 = vmul.f32 %v507, %v1443
    %v1508 = vmul.f32 %v509, %v1444
    %v1509 = vmul.f32 %v512, %v1445
    %v1510 = vmul.f32 %v514, %v1446
    %v1511 = vmul.f32 %v517, %v1447
    %v1512 = vmul.f32 %v519, %v1448
    %v1513 = vmul.f32 %v522, %v1449
    %v1514 = vmul.f32 %v524, %v1450
    %v1515 = vmul.f32 %v527, %v1451
    %v1516 = vmul.f32 %v529, %v1452
    %v1517 = vmul.f32 %v532, %v1453
    %v1518 = vmul.f32 %v534, %v1454
    %v1519 = vmul.f32 %v537, %v1455
    %v1520 = vmul.f32 %v539, %v1456
    %v1521 = vmul.f32 %v542, %v1457
    %v1522 = vmul.f32 %v544, %v1458
    %v1523 = vmul.f32 %v547, %v1459
    %v1524 = vmul.f32 %v549, %v1460
    %v1525 = vmul.f32 %v552, %v1461
    %v1526 = vmul.f32 %v554, %v1462
    %v1527 = vmul.f32 %v557, %v1463
    %v1528 = vmul.f32 %v559, %v1464
    %v1529 = vmul.f32 %v562, %v1465
    %v1530 = vmul.f32 %v564, %v1466
    %v1531 = vmul.f32 %v567, %v1467
    %v1532 = vmul.f32 %v569, %v1468
    %v1533 = vmul.f32 %v572, %v1469
    %v1534 = vmul.f32 %v574, %v1470
    %v1535 = vmul.f32 %v577, %v1471
    %v1536 = vmul.f32 %v579, %v1472
    %v1537 = vmul.f32 %v582, %v1473
    %v1538 = vmul.f32 %v584, %v1474
    %v1539 = vsub.f32 %v929, %v427
    %v1540 = vsub.f32 %v931, %v429
    %v1541 = vsub.f32 %v934, %v432
    %v1542 = vsub.f32 %v936, %v434
    %v1543 = vsub.f32 %v939, %v437
    %v1544 = vsub.f32 %v941, %v439
    %v1545 = vsub.f32 %v944, %v442
    %v1546 = vsub.f32 %v946, %v444
    %v1547 = vsub.f32 %v949, %v447
    %v1548 = vsub.f32 %v951, %v449
    %v1549 = vsub.f32 %v954, %v452
    %v1550 = vsub.f32 %v956, %v454
    %v1551 = vsub.f32 %v959, %v457
    %v1552 = vsub.f32 %v961, %v459
    %v1553 = vsub.f32 %v964, %v462
    %v1554 = vsub.f32 %v966, %v464
    %v1555 = vsub.f32 %v969, %v467
    %v1556 = vsub.f32 %v971, %v469
    %v1557 = vsub.f32 %v974, %v472
    %v1558 = vsub.f32 %v976, %v474
    %v1559 = vsub.f32 %v979, %v477
    %v1560 = vsub.f32 %v981, %v479
    %v1561 = vsub.f32 %v984, %v482
    %v1562 = vsub.f32 %v986, %v484
    %v1563 = vsub.f32 %v989, %v487
    %v1564 = vsub.f32 %v991, %v489
    %v1565 = vsub.f32 %v994, %v492
    %v1566 = vsub.f32 %v996, %v494
    %v1567 = vsub.f32 %v999, %v497
    %v1568 = vsub.f32 %v1001, %v499
    %v1569 = vsub.f32 %v1004, %v502
    %v1570 = vsub.f32 %v1006, %v504
    %v1571 = vsub.f32 %v1009, %v507
    %v1572 = vsub.f32 %v1011, %v509
    %v1573 = vsub.f32 %v1014, %v512
    %v1574 = vsub.f32 %v1016, %v514
    %v1575 = vsub.f32 %v1019, %v517
    %v1576 = vsub.f32 %v1021, %v519
    %v1577 = vsub.f32 %v1024, %v522
    %v1578 = vsub.f32 %v1026, %v524
    %v1579 = vsub.f32 %v1029, %v527
    %v1580 = vsub.f32 %v1031, %v529
    %v1581 = vsub.f32 %v1034, %v532
    %v1582 = vsub.f32 %v1036, %v534
    %v1583 = vsub.f32 %v1039, %v537
    %v1584 = vsub.f32 %v1041, %v539
    %v1585 = vsub.f32 %v1044, %v542
    %v1586 = vsub.f32 %v1046, %v544
    %v1587 = vsub.f32 %v1049, %v547
    %v1588 = vsub.f32 %v1051, %v549
    %v1589 = vsub.f32 %v1054, %v552
    %v1590 = vsub.f32 %v1056, %v554
    %v1591 = vsub.f32 %v1059, %v557
    %v1592 = vsub.f32 %v1061, %v559
    %v1593 = vsub.f32 %v1064, %v562
    %v1594 = vsub.f32 %v1066, %v564
    %v1595 = vsub.f32 %v1069, %v567
    %v1596 = vsub.f32 %v1071, %v569
    %v1597 = vsub.f32 %v1074, %v572
    %v1598 = vsub.f32 %v1076, %v574
    %v1599 = vsub.f32 %v1079, %v577
    %v1600 = vsub.f32 %v1081, %v579
    %v1601 = vsub.f32 %v1084, %v582
    %v1602 = vsub.f32 %v1086, %v584
    %v1603 = vmul.f32 %v1539, %v1411
    %v1604 = vmul.f32 %v1540, %v1412
    %v1605 = vmul.f32 %v1541, %v1413
    %v1606 = vmul.f32 %v1542, %v1414
    %v1607 = vmul.f32 %v1543, %v1415
    %v1608 = vmul.f32 %v1544, %v1416
    %v1609 = vmul.f32 %v1545, %v1417
    %v1610 = vmul.f32 %v1546, %v1418
    %v1611 = vmul.f32 %v1547, %v1419
    %v1612 = vmul.f32 %v1548, %v1420
    %v1613 = vmul.f32 %v1549, %v1421
    %v1614 = vmul.f32 %v1550, %v1422
    %v1615 = vmul.f32 %v1551, %v1423
    %v1616 = vmul.f32 %v1552, %v1424
    %v1617 = vmul.f32 %v1553, %v1425
    %v1618 = vmul.f32 %v1554, %v1426
    %v1619 = vmul.f32 %v1555, %v1427
    %v1620 = vmul.f32 %v1556, %v1428
    %v1621 = vmul.f32 %v1557, %v1429
    %v1622 = vmul.f32 %v1558, %v1430
    %v1623 = vmul.f32 %v1559, %v1431
    %v1624 = vmul.f32 %v1560, %v1432
    %v1625 = vmul.f32 %v1561, %v1433
    %v1626 = vmul.f32 %v1562, %v1434
    %v1627 = vmul.f32 %v1563, %v1435
    %v1628 = vmul.f32 %v1564, %v1436
    %v1629 = vmul.f32 %v1565, %v1437
    %v1630 = vmul.f32 %v1566, %v1438
    %v1631 = vmul.f32 %v1567, %v1439
    %v1632 = vmul.f32 %v1568, %v1440
    %v1633 = vmul.f32 %v1569, %v1441
    %v1634 = vmul.f32 %v1570, %v1442
    %v1635 = vmul.f32 %v1571, %v1443
    %v1636 = vmul.f32 %v1572, %v1444
    %v1637 = vmul.f32 %v1573, %v1445
    %v1638 = vmul.f32 %v1574, %v1446
    %v1639 = vmul.f32 %v1575, %v1447
    %v1640 = vmul.f32 %v1576, %v1448
    %v1641 = vmul.f32 %v1577, %v1449
    %v1642 = vmul.f32 %v1578, %v1450
    %v1643 = vmul.f32 %v1579, %v1451
    %v1644 = vmul.f32 %v1580, %v1452
    %v1645 = vmul.f32 %v1581, %v1453
    %v1646 = vmul.f32 %v1582, %v1454
    %v1647 = vmul.f32 %v1583, %v1455
    %v1648 = vmul.f32 %v1584, %v1456
    %v1649 = vmul.f32 %v1585, %v1457
    %v1650 = vmul.f32 %v1586, %v1458
    %v1651 = vmul.f32 %v1587, %v1459
    %v1652 = vmul.f32 %v1588, %v1460
    %v1653 = vmul.f32 %v1589, %v1461
    %v1654 = vmul.f32 %v1590, %v1462
    %v1655 = vmul.f32 %v1591, %v1463
    %v1656 = vmul.f32 %v1592, %v1464
    %v1657 = vmul.f32 %v1593, %v1465
    %v1658 = vmul.f32 %v1594, %v1466
    %v1659 = vmul.f32 %v1595, %v1467
    %v1660 = vmul.f32 %v1596, %v1468
    %v1661 = vmul.f32 %v1597, %v1469
    %v1662 = vmul.f32 %v1598, %v1470
    %v1663 = vmul.f32 %v1599, %v1471
    %v1664 = vmul.f32 %v1600, %v1472
    %v1665 = vmul.f32 %v1601, %v1473
    %v1666 = vmul.f32 %v1602, %v1474
    %v1667 = vadd.f32 %v1475, %v1476
    %v1668 = vadd.f32 %v1667, %v1477
    %v1669 = vadd.f32 %v1668, %v1478
    %v1670 = vadd.f32 %v1669, %v1479
    %v1671 = vadd.f32 %v1670, %v1480
    %v1672 = vadd.f32 %v1671, %v1481
    %v1673 = vadd.f32 %v1672, %v1482
    %v1674 = vadd.f32 %v1673, %v1483
    %v1675 = vadd.f32 %v1674, %v1484
    %v1676 = vadd.f32 %v1675, %v1485
    %v1677 = vadd.f32 %v1676, %v1486
    %v1678 = vadd.f32 %v1677, %v1487
    %v1679 = vadd.f32 %v1678, %v1488
    %v1680 = vadd.f32 %v1679, %v1489
    %v1681 = vadd.f32 %v1680, %v1490
    %v1682 = vadd.f32 %v1681, %v1491
    %v1683 = vadd.f32 %v1682, %v1492
    %v1684 = vadd.f32 %v1683, %v1493
    %v1685 = vadd.f32 %v1684, %v1494
    %v1686 = vadd.f32 %v1685, %v1495
    %v1687 = vadd.f32 %v1686, %v1496
    %v1688 = vadd.f32 %v1687, %v1497
    %v1689 = vadd.f32 %v1688, %v1498
    %v1690 = vadd.f32 %v1689, %v1499
    %v1691 = vadd.f32 %v1690, %v1500
    %v1692 = vadd.f32 %v1691, %v1501
    %v1693 = vadd.f32 %v1692, %v1502
    %v1694 = vadd.f32 %v1693, %v1503
    %v1695 = vadd.f32 %v1694, %v1504
    %v1696 = vadd.f32 %v1695, %v1505
    %v1697 = vadd.f32 %v1696, %v1506
    %v1698 = vadd.f32 %v1697, %v1507
    %v1699 = vadd.f32 %v1698, %v1508
    %v1700 = vadd.f32 %v1699, %v1509
    %v1701 = vadd.f32 %v1700, %v1510
    %v1702 = vadd.f32 %v1701, %v1511
    %v1703 = vadd.f32 %v1702, %v1512
    %v1704 = vadd.f32 %v1703, %v1513
    %v1705 = vadd.f32 %v1704, %v1514
    %v1706 = vadd.f32 %v1705, %v1515
    %v1707 = vadd.f32 %v1706, %v1516
    %v1708 = vadd.f32 %v1707, %v1517
    %v1709 = vadd.f32 %v1708, %v1518
    %v1710 = vadd.f32 %v1709, %v1519
    %v1711 = vadd.f32 %v1710, %v1520
    %v1712 = vadd.f32 %v1711, %v1521
    %v1713 = vadd.f32 %v1712, %v1522
    %v1714 = vadd.f32 %v1713, %v1523
    %v1715 = vadd.f32 %v1714, %v1524
    %v1716 = vadd.f32 %v1715, %v1525
    %v1717 = vadd.f32 %v1716, %v1526
    %v1718 = vadd.f32 %v1717, %v1527
    %v1719 = vadd.f32 %v1718, %v1528
    %v1720 = vadd.f32 %v1719, %v1529
    %v1721 = vadd.f32 %v1720, %v1530
    %v1722 = vadd.f32 %v1721, %v1531
    %v1723 = vadd.f32 %v1722, %v1532
    %v1724 = vadd.f32 %v1723, %v1533
    %v1725 = vadd.f32 %v1724, %v1534
    %v1726 = vadd.f32 %v1725, %v1535
    %v1727 = vadd.f32 %v1726, %v1536
    %v1728 = vadd.f32 %v1727, %v1537
    %v1729 = vadd.f32 %v1728, %v1538
    %1730 = vst [vmem:[#allocation11] sm:$0xff] %v1729
    %v1731 = vmul.f32 %v1475, %v427
    %v1732 = vmul.f32 %v1476, %v429
    %v1733 = vmul.f32 %v1477, %v432
    %v1734 = vmul.f32 %v1478, %v434
    %v1735 = vmul.f32 %v1479, %v437
    %v1736 = vmul.f32 %v1480, %v439
    %v1737 = vmul.f32 %v1481, %v442
    %v1738 = vmul.f32 %v1482, %v444
    %v1739 = vmul.f32 %v1483, %v447
    %v1740 = vmul.f32 %v1484, %v449
    %v1741 = vmul.f32 %v1485, %v452
    %v1742 = vmul.f32 %v1486, %v454
    %v1743 = vmul.f32 %v1487, %v457
    %v1744 = vmul.f32 %v1488, %v459
    %v1745 = vmul.f32 %v1489, %v462
    %v1746 = vmul.f32 %v1490, %v464
    %v1747 = vmul.f32 %v1491, %v467
    %v1748 = vmul.f32 %v1492, %v469
    %v1749 = vmul.f32 %v1493, %v472
    %v1750 = vmul.f32 %v1494, %v474
    %v1751 = vmul.f32 %v1495, %v477
    %v1752 = vmul.f32 %v1496, %v479
    %v1753 = vmul.f32 %v1497, %v482
    %v1754 = vmul.f32 %v1498, %v484
    %v1755 = vmul.f32 %v1499, %v487
    %v1756 = vmul.f32 %v1500, %v489
    %v1757 = vmul.f32 %v1501, %v492
    %v1758 = vmul.f32 %v1502, %v494
    %v1759 = vmul.f32 %v1503, %v497
    %v1760 = vmul.f32 %v1504, %v499
    %v1761 = vmul.f32 %v1505, %v502
    %v1762 = vmul.f32 %v1506, %v504
    %v1763 = vmul.f32 %v1507, %v507
    %v1764 = vmul.f32 %v1508, %v509
    %v1765 = vmul.f32 %v1509, %v512
    %v1766 = vmul.f32 %v1510, %v514
    %v1767 = vmul.f32 %v1511, %v517
    %v1768 = vmul.f32 %v1512, %v519
    %v1769 = vmul.f32 %v1513, %v522
    %v1770 = vmul.f32 %v1514, %v524
    %v1771 = vmul.f32 %v1515, %v527
    %v1772 = vmul.f32 %v1516, %v529
    %v1773 = vmul.f32 %v1517, %v532
    %v1774 = vmul.f32 %v1518, %v534
    %v1775 = vmul.f32 %v1519, %v537
    %v1776 = vmul.f32 %v1520, %v539
    %v1777 = vmul.f32 %v1521, %v542
    %v1778 = vmul.f32 %v1522, %v544
    %v1779 = vmul.f32 %v1523, %v547
    %v1780 = vmul.f32 %v1524, %v549
    %v1781 = vmul.f32 %v1525, %v552
    %v1782 = vmul.f32 %v1526, %v554
    %v1783 = vmul.f32 %v1527, %v557
    %v1784 = vmul.f32 %v1528, %v559
    %v1785 = vmul.f32 %v1529, %v562
    %v1786 = vmul.f32 %v1530, %v564
    %v1787 = vmul.f32 %v1531, %v567
    %v1788 = vmul.f32 %v1532, %v569
    %v1789 = vmul.f32 %v1533, %v572
    %v1790 = vmul.f32 %v1534, %v574
    %v1791 = vmul.f32 %v1535, %v577
    %v1792 = vmul.f32 %v1536, %v579
    %v1793 = vmul.f32 %v1537, %v582
    %v1794 = vmul.f32 %v1538, %v584
    %v1795 = vadd.f32 %v1731, %v1732
    %v1796 = vadd.f32 %v1795, %v1733
    %v1797 = vadd.f32 %v1796, %v1734
    %v1798 = vadd.f32 %v1797, %v1735
    %v1799 = vadd.f32 %v1798, %v1736
    %v1800 = vadd.f32 %v1799, %v1737
    %v1801 = vadd.f32 %v1800, %v1738
    %v1802 = vadd.f32 %v1801, %v1739
    %v1803 = vadd.f32 %v1802, %v1740
    %v1804 = vadd.f32 %v1803, %v1741
    %v1805 = vadd.f32 %v1804, %v1742
    %v1806 = vadd.f32 %v1805, %v1743
    %v1807 = vadd.f32 %v1806, %v1744
    %v1808 = vadd.f32 %v1807, %v1745
    %v1809 = vadd.f32 %v1808, %v1746
    %v1810 = vadd.f32 %v1809, %v1747
    %v1811 = vadd.f32 %v1810, %v1748
    %v1812 = vadd.f32 %v1811, %v1749
    %v1813 = vadd.f32 %v1812, %v1750
    %v1814 = vadd.f32 %v1813, %v1751
    %v1815 = vadd.f32 %v1814, %v1752
    %v1816 = vadd.f32 %v1815, %v1753
    %v1817 = vadd.f32 %v1816, %v1754
    %v1818 = vadd.f32 %v1817, %v1755
    %v1819 = vadd.f32 %v1818, %v1756
    %v1820 = vadd.f32 %v1819, %v1757
    %v1821 = vadd.f32 %v1820, %v1758
    %v1822 = vadd.f32 %v1821, %v1759
    %v1823 = vadd.f32 %v1822, %v1760
    %v1824 = vadd.f32 %v1823, %v1761
    %v1825 = vadd.f32 %v1824, %v1762
    %v1826 = vadd.f32 %v1825, %v1763
    %v1827 = vadd.f32 %v1826, %v1764
    %v1828 = vadd.f32 %v1827, %v1765
    %v1829 = vadd.f32 %v1828, %v1766
    %v1830 = vadd.f32 %v1829, %v1767
    %v1831 = vadd.f32 %v1830, %v1768
    %v1832 = vadd.f32 %v1831, %v1769
    %v1833 = vadd.f32 %v1832, %v1770
    %v1834 = vadd.f32 %v1833, %v1771
    %v1835 = vadd.f32 %v1834, %v1772
    %v1836 = vadd.f32 %v1835, %v1773
    %v1837 = vadd.f32 %v1836, %v1774
    %v1838 = vadd.f32 %v1837, %v1775
    %v1839 = vadd.f32 %v1838, %v1776
    %v1840 = vadd.f32 %v1839, %v1777
    %v1841 = vadd.f32 %v1840, %v1778
    %v1842 = vadd.f32 %v1841, %v1779
    %v1843 = vadd.f32 %v1842, %v1780
    %v1844 = vadd.f32 %v1843, %v1781
    %v1845 = vadd.f32 %v1844, %v1782
    %v1846 = vadd.f32 %v1845, %v1783
    %v1847 = vadd.f32 %v1846, %v1784
    %v1848 = vadd.f32 %v1847, %v1785
    %v1849 = vadd.f32 %v1848, %v1786
    %v1850 = vadd.f32 %v1849, %v1787
    %v1851 = vadd.f32 %v1850, %v1788
    %v1852 = vadd.f32 %v1851, %v1789
    %v1853 = vadd.f32 %v1852, %v1790
    %v1854 = vadd.f32 %v1853, %v1791
    %v1855 = vadd.f32 %v1854, %v1792
    %v1856 = vadd.f32 %v1855, %v1793
    %v1857 = vadd.f32 %v1856, %v1794
    %1858 = vst [vmem:[#allocation13] sm:$0xff] %v1857
    %v1859 = vmul.f32 %v1603, %v1603
    %v1860 = vmul.f32 %v1604, %v1604
    %v1861 = vmul.f32 %v1605, %v1605
    %v1862 = vmul.f32 %v1606, %v1606
    %v1863 = vmul.f32 %v1607, %v1607
    %v1864 = vmul.f32 %v1608, %v1608
    %v1865 = vmul.f32 %v1609, %v1609
    %v1866 = vmul.f32 %v1610, %v1610
    %v1867 = vmul.f32 %v1611, %v1611
    %v1868 = vmul.f32 %v1612, %v1612
    %v1869 = vmul.f32 %v1613, %v1613
    %v1870 = vmul.f32 %v1614, %v1614
    %v1871 = vmul.f32 %v1615, %v1615
    %v1872 = vmul.f32 %v1616, %v1616
    %v1873 = vmul.f32 %v1617, %v1617
    %v1874 = vmul.f32 %v1618, %v1618
    %v1875 = vmul.f32 %v1619, %v1619
    %v1876 = vmul.f32 %v1620, %v1620
    %v1877 = vmul.f32 %v1621, %v1621
    %v1878 = vmul.f32 %v1622, %v1622
    %v1879 = vmul.f32 %v1623, %v1623
    %v1880 = vmul.f32 %v1624, %v1624
    %v1881 = vmul.f32 %v1625, %v1625
    %v1882 = vmul.f32 %v1626, %v1626
    %v1883 = vmul.f32 %v1627, %v1627
    %v1884 = vmul.f32 %v1628, %v1628
    %v1885 = vmul.f32 %v1629, %v1629
    %v1886 = vmul.f32 %v1630, %v1630
    %v1887 = vmul.f32 %v1631, %v1631
    %v1888 = vmul.f32 %v1632, %v1632
    %v1889 = vmul.f32 %v1633, %v1633
    %v1890 = vmul.f32 %v1634, %v1634
    %v1891 = vmul.f32 %v1635, %v1635
    %v1892 = vmul.f32 %v1636, %v1636
    %v1893 = vmul.f32 %v1637, %v1637
    %v1894 = vmul.f32 %v1638, %v1638
    %v1895 = vmul.f32 %v1639, %v1639
    %v1896 = vmul.f32 %v1640, %v1640
    %v1897 = vmul.f32 %v1641, %v1641
    %v1898 = vmul.f32 %v1642, %v1642
    %v1899 = vmul.f32 %v1643, %v1643
    %v1900 = vmul.f32 %v1644, %v1644
    %v1901 = vmul.f32 %v1645, %v1645
    %v1902 = vmul.f32 %v1646, %v1646
    %v1903 = vmul.f32 %v1647, %v1647
    %v1904 = vmul.f32 %v1648, %v1648
    %v1905 = vmul.f32 %v1649, %v1649
    %v1906 = vmul.f32 %v1650, %v1650
    %v1907 = vmul.f32 %v1651, %v1651
    %v1908 = vmul.f32 %v1652, %v1652
    %v1909 = vmul.f32 %v1653, %v1653
    %v1910 = vmul.f32 %v1654, %v1654
    %v1911 = vmul.f32 %v1655, %v1655
    %v1912 = vmul.f32 %v1656, %v1656
    %v1913 = vmul.f32 %v1657, %v1657
    %v1914 = vmul.f32 %v1658, %v1658
    %v1915 = vmul.f32 %v1659, %v1659
    %v1916 = vmul.f32 %v1660, %v1660
    %v1917 = vmul.f32 %v1661, %v1661
    %v1918 = vmul.f32 %v1662, %v1662
    %v1919 = vmul.f32 %v1663, %v1663
    %v1920 = vmul.f32 %v1664, %v1664
    %v1921 = vmul.f32 %v1665, %v1665
    %v1922 = vmul.f32 %v1666, %v1666
    %v1923 = vadd.f32 %v1859, %v1860
    %v1924 = vadd.f32 %v1923, %v1861
    %v1925 = vadd.f32 %v1924, %v1862
    %v1926 = vadd.f32 %v1925, %v1863
    %v1927 = vadd.f32 %v1926, %v1864
    %v1928 = vadd.f32 %v1927, %v1865
    %v1929 = vadd.f32 %v1928, %v1866
    %v1930 = vadd.f32 %v1929, %v1867
    %v1931 = vadd.f32 %v1930, %v1868
    %v1932 = vadd.f32 %v1931, %v1869
    %v1933 = vadd.f32 %v1932, %v1870
    %v1934 = vadd.f32 %v1933, %v1871
    %v1935 = vadd.f32 %v1934, %v1872
    %v1936 = vadd.f32 %v1935, %v1873
    %v1937 = vadd.f32 %v1936, %v1874
    %v1938 = vadd.f32 %v1937, %v1875
    %v1939 = vadd.f32 %v1938, %v1876
    %v1940 = vadd.f32 %v1939, %v1877
    %v1941 = vadd.f32 %v1940, %v1878
    %v1942 = vadd.f32 %v1941, %v1879
    %v1943 = vadd.f32 %v1942, %v1880
    %v1944 = vadd.f32 %v1943, %v1881
    %v1945 = vadd.f32 %v1944, %v1882
    %v1946 = vadd.f32 %v1945, %v1883
    %v1947 = vadd.f32 %v1946, %v1884
    %v1948 = vadd.f32 %v1947, %v1885
    %v1949 = vadd.f32 %v1948, %v1886
    %v1950 = vadd.f32 %v1949, %v1887
    %v1951 = vadd.f32 %v1950, %v1888
    %v1952 = vadd.f32 %v1951, %v1889
    %v1953 = vadd.f32 %v1952, %v1890
    %v1954 = vadd.f32 %v1953, %v1891
    %v1955 = vadd.f32 %v1954, %v1892
    %v1956 = vadd.f32 %v1955, %v1893
    %v1957 = vadd.f32 %v1956, %v1894
    %v1958 = vadd.f32 %v1957, %v1895
    %v1959 = vadd.f32 %v1958, %v1896
    %v1960 = vadd.f32 %v1959, %v1897
    %v1961 = vadd.f32 %v1960, %v1898
    %v1962 = vadd.f32 %v1961, %v1899
    %v1963 = vadd.f32 %v1962, %v1900
    %v1964 = vadd.f32 %v1963, %v1901
    %v1965 = vadd.f32 %v1964, %v1902
    %v1966 = vadd.f32 %v1965, %v1903
    %v1967 = vadd.f32 %v1966, %v1904
    %v1968 = vadd.f32 %v1967, %v1905
    %v1969 = vadd.f32 %v1968, %v1906
    %v1970 = vadd.f32 %v1969, %v1907
    %v1971 = vadd.f32 %v1970, %v1908
    %v1972 = vadd.f32 %v1971, %v1909
    %v1973 = vadd.f32 %v1972, %v1910
    %v1974 = vadd.f32 %v1973, %v1911
    %v1975 = vadd.f32 %v1974, %v1912
    %v1976 = vadd.f32 %v1975, %v1913
    %v1977 = vadd.f32 %v1976, %v1914
    %v1978 = vadd.f32 %v1977, %v1915
    %v1979 = vadd.f32 %v1978, %v1916
    %v1980 = vadd.f32 %v1979, %v1917
    %v1981 = vadd.f32 %v1980, %v1918
    %v1982 = vadd.f32 %v1981, %v1919
    %v1983 = vadd.f32 %v1982, %v1920
    %v1984 = vadd.f32 %v1983, %v1921
    %v1985 = vadd.f32 %v1984, %v1922
    %1986 = vst [vmem:[#allocation14] sm:$0xff] %v1985
    // Predicated region
    $region42: #{tpu_custom_call.1} parent=1 // pred_check
      _
    $region43: #{tpu_custom_call.1} parent=1 // pred_check_branch
      %1988 = sbr.rel (0) target = $region45
    $region44: #{tpu_custom_call.1} parent=1 // pred_region
      %1990 = vsyncadd [#allocation4], 0
      %s1991 = sshll.u32 [#allocation10], 4
      %s1992 = int_to_ptr.vmem [resolvable:$true] %s1991
      %s1993 = sshll.u32 %s6, 4
      %s1994 = int_to_ptr.hbm [resolvable:$true] %s1993
      %1999 = dma.vmem_to_hbm [thread:$0]  %s1992, 8192, %s1994, [#allocation4], 128, 128, 8
    $region45: #{tpu_custom_call.1} parent=1 // pred_fallthru
      _
    // Predicated region
    $region46: #{tpu_custom_call.1} parent=1 // pred_check
      _
    $region47: #{tpu_custom_call.1} parent=1 // pred_check_branch
      %2001 = sbr.rel (0) target = $region49
    $region48: #{tpu_custom_call.1} parent=1 // pred_region
      %2003 = vsyncadd [#allocation12], 0
      %s2005 = sshll.u32 [#allocation11], 4
      %s2006 = int_to_ptr.vmem [resolvable:$true] %s2005
      %s2007 = sshll.u32 %s7, 4
      %s2008 = int_to_ptr.hbm [resolvable:$true] %s2007
      %2010 = dma.vmem_to_hbm [thread:$0]  %s2006, 128, %s2008, [#allocation12]
    $region49: #{tpu_custom_call.1} parent=1 // pred_fallthru
      _
    // Predicated region
    $region50: #{tpu_custom_call.1} parent=1 // pred_check
      _
    $region51: #{tpu_custom_call.1} parent=1 // pred_check_branch
      %2012 = sbr.rel (0) target = $region53
    $region52: #{tpu_custom_call.1} parent=1 // pred_region
      %2014 = vsyncadd [#allocation12], 0
      %s2016 = sshll.u32 [#allocation13], 4
      %s2017 = int_to_ptr.vmem [resolvable:$true] %s2016
      %s2018 = sshll.u32 %s8, 4
      %s2019 = int_to_ptr.hbm [resolvable:$true] %s2018
      %2021 = dma.vmem_to_hbm [thread:$0]  %s2017, 128, %s2019, [#allocation12]
    $region53: #{tpu_custom_call.1} parent=1 // pred_fallthru
      _
    // Predicated region
    $region54: #{tpu_custom_call.1} parent=1 // pred_check
      _
    $region55: #{tpu_custom_call.1} parent=1 // pred_check_branch
      %2023 = sbr.rel (0) target = $region57
    $region56: #{tpu_custom_call.1} parent=1 // pred_region
      %2025 = vsyncadd [#allocation15], 0
      %s2027 = sshll.u32 [#allocation14], 4
      %s2028 = int_to_ptr.vmem [resolvable:$true] %s2027
      %s2029 = sshll.u32 %s9, 4
      %s2030 = int_to_ptr.hbm [resolvable:$true] %s2029
      %2032 = dma.vmem_to_hbm [thread:$0]  %s2028, 128, %s2030, [#allocation15]
    $region57: #{tpu_custom_call.1} parent=1 // pred_fallthru
      _
    // Predicated region
    $region58: #{tpu_custom_call.1} parent=1 // pred_check
      _
    $region59: #{tpu_custom_call.1} parent=1 // pred_check_branch
      %2034 = sbr.rel (0) target = $region61
    $region60: #{tpu_custom_call.1} parent=1 // pred_region
      %2036 = dma.done [#allocation4], 8192
    $region61: #{tpu_custom_call.1} parent=1 // pred_fallthru
      _
    // Predicated region
    $region62: #{tpu_custom_call.1} parent=1 // pred_check
      _
    $region63: #{tpu_custom_call.1} parent=1 // pred_check_branch
      %2038 = sbr.rel (0) target = $region65
    $region64: #{tpu_custom_call.1} parent=1 // pred_region
      %2040 = dma.done [#allocation12], 128
    $region65: #{tpu_custom_call.1} parent=1 // pred_fallthru
      _
    // Predicated region
    $region66: #{tpu_custom_call.1} parent=1 // pred_check
      _
    $region67: #{tpu_custom_call.1} parent=1 // pred_check_branch
      %2042 = sbr.rel (0) target = $region69
    $region68: #{tpu_custom_call.1} parent=1 // pred_region
      %2044 = dma.done [#allocation12], 128
    $region69: #{tpu_custom_call.1} parent=1 // pred_fallthru
      _
    // Predicated region
    $region70: #{tpu_custom_call.1} parent=1 // pred_check
      _
    $region71: #{tpu_custom_call.1} parent=1 // pred_check_branch
      %2046 = sbr.rel (0) target = $region73
    $region72: #{tpu_custom_call.1} parent=1 // pred_region
      %2048 = dma.done [#allocation15], 128
    $region73: #{tpu_custom_call.1} parent=1 // pred_fallthru
      _
    %2049 = vsyncpa [#allocation3], 1
    %2050 = vsyncpa [#allocation6], 1
    %2051 = vsyncpa [#allocation9], 1
    %2052 = vsyncpa [#allocation4], 1
    %2053 = vsyncpa [#allocation12], 1
    %2054 = vsyncpa [#allocation15], 1

</llo_original>
